<compile_context>
chip_gen: v5e
topology: v5e:2x2
jax: 0.10.0
libtpu: 0.0.40
codegen_flags: <defaults>
</compile_context>

<pallas_src>
import jax
import jax.numpy as jnp
from jax.experimental import pallas as pl
from jax.experimental.pallas import tpu as pltpu


# ----------------------------- kernel helpers ------------------------------

def _layer_norm(h, gamma, beta, eps=1e-5):
    # LayerNorm over the feature dim, PyTorch default eps=1e-5. All f32.
    mu = jnp.mean(h, axis=-1, keepdims=True)
    xc = h - mu
    var = jnp.mean(xc * xc, axis=-1, keepdims=True)
    return xc * jax.lax.rsqrt(var + eps) * gamma + beta


def _elu_feature_map(x):
    # elu(x) + 1 == x + 1 if x > 0 else exp(x). exp on min(x, 0) keeps the dead
    # branch finite for extreme inputs. Works at either f32 or bf16.
    return jnp.where(x > 0, x + 1.0, jnp.exp(jnp.minimum(x, 0.0)))


# --------------------------------- kernel ----------------------------------

def mnf_kernel(x_ref, c_ref,
               wx_ref, bx_ref, wc_ref, bc_ref, wo_ref, bo_ref,
               g1_ref, bt1_ref,
               w1_ref, b1_ref, w2_ref, b2_ref,
               g2_ref, bt2_ref,
               out_ref):
    # bf16 row tiles straight off HBM; a single f32 copy of x is kept for the
    # residual / LayerNorm path (accuracy + v5e has no bf16 VPU/EUP path).
    x_bf = x_ref[...]                               # (tile_m, D) bf16 -- residual "y"
    c_bf = c_ref[...]                               # (tile_m, D) bf16
    x = x_bf.astype(jnp.float32)

    # x_projection / coordinates_projection (Linear D -> D): bf16 MXU, f32 acc.
    xp = jnp.dot(x_bf, wx_ref[...], preferred_element_type=jnp.float32) + bx_ref[...]
    cp = jnp.dot(c_bf, wc_ref[...], preferred_element_type=jnp.float32) + bc_ref[...]

    # feature_map(queries) * coordinates. The per-head view followed by an
    # elementwise multiply equals an elementwise multiply on the flat d_model
    # axis. Computed at bf16: these values only feed the MXU (bf16 operands
    # anyway), so no separate f32->bf16 pack pass is needed on v6e/v7x; on v5e
    # the compiler lowers bf16 elementwise through f32, so semantics hold.
    mod = _elu_feature_map(xp.astype(jnp.bfloat16)) * cp.astype(jnp.bfloat16)

    # out_projection (Linear D -> D)
    op = jnp.dot(mod, wo_ref[...], preferred_element_type=jnp.float32) + bo_ref[...]

    # norm1(y + dropout(x)); dropout = identity (eval mode). f32 LayerNorm.
    h1 = _layer_norm(x + op, g1_ref[...], bt1_ref[...])

    # feed-forward: linear2(relu(linear1(h1)))
    h1_bf = h1.astype(jnp.bfloat16)
    f = jnp.dot(h1_bf, w1_ref[...], preferred_element_type=jnp.float32) + b1_ref[...]
    f = jnp.maximum(f, 0.0).astype(jnp.bfloat16)    # relu, emitted as bf16 MXU operand
    f2 = jnp.dot(f, w2_ref[...], preferred_element_type=jnp.float32) + b2_ref[...]

    # norm2(h1 + feed_forward)   (matches the module: norm2(x + y) with x = h1)
    out = _layer_norm(h1 + f2, g2_ref[...], bt2_ref[...])
    out_ref[...] = out.astype(out_ref.dtype)


# -------------------------------- wrapper -----------------------------------

_TILE_CANDIDATES = (1024, 512, 256, 128, 64, 32, 16, 8)


def _pick_tile_m(M, max_tile_m=1024):
    """Largest row tile <= max_tile_m giving >= 2 grid steps (so v7x's two
    TensorCores both get work). Prefers exact divisors of M (no ragged tail /
    no pad copy) and an even grid length."""
    cands = [t for t in _TILE_CANDIDATES if t <= max_tile_m]
    for want_even in (True, False):
        for t in cands:
            g, r = divmod(M, t)
            if r == 0 and g >= 2 and (g % 2 == 0 or not want_even):
                return t
    # Ragged fallback: Pallas masks the tail block; no wrapper-side jnp.pad.
    for t in cands:
        if pl.cdiv(M, t) >= 2:
            return t
    return M  # tiny-M fallback: single full-extent block


def _vmem_limit_bytes():
    # ~25% headroom below the physical per-core VMEM (64 MiB on v7x, 128 MiB on
    # v5e/v6e) so compiler-internal scratch / double buffers never collide with
    # the limit. Fallback: 48 MiB (safe on every generation).
    try:
        cap = pltpu.get_tpu_info().vmem_capacity_bytes
    except Exception:
        cap = 64 * 1024 * 1024
    return int(cap * 3 // 4)


def modulated_neural_field(x, coordinates, params, *, max_tile_m=1024):
    N, T, L, D = x.shape
    Dh = params["w1"].shape[1]
    M = N * T * L
    tile_m = _pick_tile_m(M, max_tile_m)
    grid_m = pl.cdiv(M, tile_m)

    # Stream activations as bf16 (halves HBM traffic in this memory-bound
    # kernel). Upstream callers that already hold bf16 inputs skip this cast.
    x2 = x.reshape(M, D).astype(jnp.bfloat16)
    c2 = coordinates.reshape(M, D).astype(jnp.bfloat16)

    # Weights are stored bf16 (cast once at init); biases / LN params stay f32.
    wx, wc, wo = params["wx"], params["wc"], params["wo"]
    w1, w2 = params["w1"], params["w2"]

    row_spec = pl.BlockSpec((tile_m, D), lambda i: (i, 0))

    def resident(shape):
        # Whole-array operand with a constant index_map: loaded once and kept
        # resident. Single-buffered (no re-DMA => double-buffering wastes VMEM).
        return pl.BlockSpec(shape, lambda i: tuple(0 for _ in shape),
                            pipeline_mode=pl.Buffered(1))

    in_specs = [
        row_spec, row_spec,                       # x, coordinates
        resident((D, D)), resident((1, D)),       # x_projection  W, b
        resident((D, D)), resident((1, D)),       # coord_projection W, b
        resident((D, D)), resident((1, D)),       # out_projection W, b
        resident((1, D)), resident((1, D)),       # norm1 gamma, beta
        resident((D, Dh)), resident((1, Dh)),     # linear1 W, b
        resident((Dh, D)), resident((1, D)),      # linear2 W, b
        resident((1, D)), resident((1, D)),       # norm2 gamma, beta
    ]

    # Advisory cost estimate for XLA scheduling around the custom call.
    flops = 2 * M * (3 * D * D + 2 * D * Dh)
    transcendentals = M * D                       # exp in the ELU feature map
    bytes_accessed = (3 * M * D * 2               # x, c in / out (bf16)
                      + 2 * (3 * D * D + 2 * D * Dh)   # bf16 weights
                      + 4 * (6 * D + Dh))              # f32 biases / LN params
    cost = pl.CostEstimate(flops=flops,
                           transcendentals=transcendentals,
                           bytes_accessed=bytes_accessed)

    out = pl.pallas_call(
        mnf_kernel,
        out_shape=jax.ShapeDtypeStruct((M, D), jnp.bfloat16),
        grid_spec=pltpu.PrefetchScalarGridSpec(
            num_scalar_prefetch=0,
            grid=(grid_m,),
            in_specs=in_specs,
            out_specs=row_spec,
        ),
        compiler_params=pltpu.CompilerParams(
            dimension_semantics=("parallel",),     # shards row tiles across v7x's 2 TCs
            vmem_limit_bytes=_vmem_limit_bytes(),
        ),
        cost_estimate=cost,
    )(x2, c2,
      wx, params["bx"], wc, params["bc"], wo, params["bo"],
      params["g1"], params["beta1"],
      w1, params["b1"], w2, params["b2"],
      params["g2"], params["beta2"])

    return out.reshape(N, T, L, D)


# --------------------------- pure-JAX reference ------------------------------

def reference(x, coordinates, params):
    def ln(h, g, b, eps=1e-5):
        mu = jnp.mean(h, -1, keepdims=True)
        var = jnp.mean((h - mu) ** 2, -1, keepdims=True)
        return (h - mu) / jnp.sqrt(var + eps) * g + b

    f32 = lambda a: a.astype(jnp.float32)
    xp = x @ f32(params["wx"]) + params["bx"]
    cp = coordinates @ f32(params["wc"]) + params["bc"]
    mod = jnp.where(xp > 0, xp + 1.0, jnp.exp(jnp.minimum(xp, 0.0))) * cp
    op = mod @ f32(params["wo"]) + params["bo"]
    h1 = ln(x + op, params["g1"], params["beta1"])
    f = jax.nn.relu(h1 @ f32(params["w1"]) + params["b1"])
    f2 = f @ f32(params["w2"]) + params["b2"]
    return ln(h1 + f2, params["g2"], params["beta2"])


# ----------------------------------- main ------------------------------------

def init_params(key, d_model, d_hidden):
    ks = jax.random.split(key, 10)
    s = 0.05
    bf = jnp.bfloat16

    def w(k, shape):
        # Weights stored as (in, out) so the kernel does x @ W; cast to bf16 ONCE
        # here (not per forward call).
        return (jax.random.normal(k, shape, jnp.float32) * s).astype(bf)

    p = {
        "wx": w(ks[0], (d_model, d_model)),
        "bx": jax.random.normal(ks[1], (1, d_model), jnp.float32) * s,
        "wc": w(ks[2], (d_model, d_model)),
        "bc": jax.random.normal(ks[3], (1, d_model), jnp.float32) * s,
        "wo": w(ks[4], (d_model, d_model)),
        "bo": jax.random.normal(ks[5], (1, d_model), jnp.float32) * s,
        "w1": w(ks[6], (d_model, d_hidden)),
        "b1": jax.random.normal(ks[7], (1, d_hidden), jnp.float32) * s,
        "w2": w(ks[8], (d_hidden, d_model)),
        "b2": jax.random.normal(ks[9], (1, d_model), jnp.float32) * s,
        "g1": jnp.ones((1, d_model), jnp.float32),
        "beta1": jnp.zeros((1, d_model), jnp.float32),
        "g2": jnp.ones((1, d_model), jnp.float32),
        "beta2": jnp.zeros((1, d_model), jnp.float32),
    }
    return p


if __name__ == "__main__":
    # Small shapes consistent with the module's forward: x is (N, T, L, d_model).
    # d_model and d_hidden are multiples of 128 (lane-dense); M = N*T*L = 512
    # yields tile_m = 256 and an even grid of 2 (both v7x TensorCores busy).
    N, T, L = 2, 4, 64
    d_model, n_heads, d_hidden = 128, 4, 512   # d_heads = 32

    key = jax.random.PRNGKey(0)
    kx, kc, kp = jax.random.split(key, 3)
    x = jax.random.normal(kx, (N, T, L, d_model), jnp.float32)
    coords = jax.random.normal(kc, (N, T, L, d_model), jnp.float32)
    params = init_params(kp, d_model, d_hidden)

    out = modulated_neural_field(x, coords, params)
    out = jax.block_until_ready(out)

    ref = reference(x, coords, params)
    assert out.shape == (N, T, L, d_model)
    # bf16 streaming I/O + bf16 MXU operands (f32 accumulation) vs f32 reference.
    assert jnp.allclose(out.astype(jnp.float32), ref, rtol=4e-2, atol=4e-2), \
        "mismatch vs reference"

    print("KERNEL_OK")
</pallas_src>

<mosaic_0001>
module attributes {stable_mosaic.version = 11 : i64} {
  func.func @mnf_kernel(%arg0: i32, %arg1: memref<256x128xbf16, #tpu.memory_space<vmem>>, %arg2: memref<256x128xbf16, #tpu.memory_space<vmem>>, %arg3: memref<128x128xbf16, #tpu.memory_space<vmem>>, %arg4: memref<1x128xf32, #tpu.memory_space<vmem>>, %arg5: memref<128x128xbf16, #tpu.memory_space<vmem>>, %arg6: memref<1x128xf32, #tpu.memory_space<vmem>>, %arg7: memref<128x128xbf16, #tpu.memory_space<vmem>>, %arg8: memref<1x128xf32, #tpu.memory_space<vmem>>, %arg9: memref<1x128xf32, #tpu.memory_space<vmem>>, %arg10: memref<1x128xf32, #tpu.memory_space<vmem>>, %arg11: memref<128x512xbf16, #tpu.memory_space<vmem>>, %arg12: memref<1x512xf32, #tpu.memory_space<vmem>>, %arg13: memref<512x128xbf16, #tpu.memory_space<vmem>>, %arg14: memref<1x128xf32, #tpu.memory_space<vmem>>, %arg15: memref<1x128xf32, #tpu.memory_space<vmem>>, %arg16: memref<1x128xf32, #tpu.memory_space<vmem>>, %arg17: memref<256x128xbf16, #tpu.memory_space<vmem>>) attributes {dimension_semantics = [#tpu.dimension_semantics<parallel>], iteration_bounds = array<i64: 2>, scalar_prefetch = 0 : i64, scratch_operands = 0 : i64, tpu.core_type = #tpu.core_type<tc>, window_params = [{transform_indices = @transform_0, window_bounds = array<i64: 256, 128>}, {transform_indices = @transform_1, window_bounds = array<i64: 256, 128>}, {pipeline_mode = #tpu.pipeline_mode<synchronous>, transform_indices = @transform_2, window_bounds = array<i64: 128, 128>}, {pipeline_mode = #tpu.pipeline_mode<synchronous>, transform_indices = @transform_3, window_bounds = array<i64: 1, 128>}, {pipeline_mode = #tpu.pipeline_mode<synchronous>, transform_indices = @transform_4, window_bounds = array<i64: 128, 128>}, {pipeline_mode = #tpu.pipeline_mode<synchronous>, transform_indices = @transform_5, window_bounds = array<i64: 1, 128>}, {pipeline_mode = #tpu.pipeline_mode<synchronous>, transform_indices = @transform_6, window_bounds = array<i64: 128, 128>}, {pipeline_mode = #tpu.pipeline_mode<synchronous>, transform_indices = @transform_7, window_bounds = array<i64: 1, 128>}, {pipeline_mode = #tpu.pipeline_mode<synchronous>, transform_indices = @transform_8, window_bounds = array<i64: 1, 128>}, {pipeline_mode = #tpu.pipeline_mode<synchronous>, transform_indices = @transform_9, window_bounds = array<i64: 1, 128>}, {pipeline_mode = #tpu.pipeline_mode<synchronous>, transform_indices = @transform_10, window_bounds = array<i64: 128, 512>}, {pipeline_mode = #tpu.pipeline_mode<synchronous>, transform_indices = @transform_11, window_bounds = array<i64: 1, 512>}, {pipeline_mode = #tpu.pipeline_mode<synchronous>, transform_indices = @transform_12, window_bounds = array<i64: 512, 128>}, {pipeline_mode = #tpu.pipeline_mode<synchronous>, transform_indices = @transform_13, window_bounds = array<i64: 1, 128>}, {pipeline_mode = #tpu.pipeline_mode<synchronous>, transform_indices = @transform_14, window_bounds = array<i64: 1, 128>}, {pipeline_mode = #tpu.pipeline_mode<synchronous>, transform_indices = @transform_15, window_bounds = array<i64: 1, 128>}, {transform_indices = @transform_16, window_bounds = array<i64: 256, 128>}]} {
    %c0 = arith.constant 0 : index
    %c0_0 = arith.constant 0 : index
    %0 = vector.load %arg1[%c0, %c0_0] : memref<256x128xbf16, #tpu.memory_space<vmem>>, vector<256x128xbf16>
    %c0_1 = arith.constant 0 : index
    %c0_2 = arith.constant 0 : index
    %1 = vector.load %arg2[%c0_1, %c0_2] : memref<256x128xbf16, #tpu.memory_space<vmem>>, vector<256x128xbf16>
    %2 = arith.extf %0 : vector<256x128xbf16> to vector<256x128xf32>
    %c0_3 = arith.constant 0 : index
    %c0_4 = arith.constant 0 : index
    %3 = vector.load %arg3[%c0_3, %c0_4] : memref<128x128xbf16, #tpu.memory_space<vmem>>, vector<128x128xbf16>
    %cst = arith.constant dense<0.000000e+00> : vector<256x128xf32>
    %4 = tpu.matmul %0, %3, %cst {dimension_numbers = #tpu.dot_dimension_numbers<[1], [0], [0], [1], [0, 0, 1, 1], [], []>} : vector<256x128xbf16>, vector<128x128xbf16>, vector<256x128xf32> -> vector<256x128xf32>
    %c0_5 = arith.constant 0 : index
    %c0_6 = arith.constant 0 : index
    %5 = vector.load %arg4[%c0_5, %c0_6] : memref<1x128xf32, #tpu.memory_space<vmem>>, vector<1x128xf32>
    %6 = vector.broadcast %5 : vector<1x128xf32> to vector<256x128xf32>
    %7 = arith.addf %4, %6 : vector<256x128xf32>
    %c0_7 = arith.constant 0 : index
    %c0_8 = arith.constant 0 : index
    %8 = vector.load %arg5[%c0_7, %c0_8] : memref<128x128xbf16, #tpu.memory_space<vmem>>, vector<128x128xbf16>
    %cst_9 = arith.constant dense<0.000000e+00> : vector<256x128xf32>
    %9 = tpu.matmul %1, %8, %cst_9 {dimension_numbers = #tpu.dot_dimension_numbers<[1], [0], [0], [1], [0, 0, 1, 1], [], []>} : vector<256x128xbf16>, vector<128x128xbf16>, vector<256x128xf32> -> vector<256x128xf32>
    %c0_10 = arith.constant 0 : index
    %c0_11 = arith.constant 0 : index
    %10 = vector.load %arg6[%c0_10, %c0_11] : memref<1x128xf32, #tpu.memory_space<vmem>>, vector<1x128xf32>
    %11 = vector.broadcast %10 : vector<1x128xf32> to vector<256x128xf32>
    %12 = arith.addf %9, %11 : vector<256x128xf32>
    %13 = arith.truncf %7 : vector<256x128xf32> to vector<256x128xbf16>
    %cst_12 = arith.constant 0.000000e+00 : bf16
    %14 = vector.broadcast %cst_12 : bf16 to vector<256x128xbf16>
    %15 = arith.cmpf ogt, %13, %14 : vector<256x128xbf16>
    %cst_13 = arith.constant 1.000000e+00 : bf16
    %16 = vector.broadcast %cst_13 : bf16 to vector<256x128xbf16>
    %17 = arith.addf %13, %16 : vector<256x128xbf16>
    %cst_14 = arith.constant 0.000000e+00 : bf16
    %18 = vector.broadcast %cst_14 : bf16 to vector<256x128xbf16>
    %19 = arith.minimumf %13, %18 : vector<256x128xbf16>
    %20 = math.exp %19 : vector<256x128xbf16>
    %21 = arith.select %15, %17, %20 : vector<256x128xi1>, vector<256x128xbf16>
    %22 = arith.truncf %12 : vector<256x128xf32> to vector<256x128xbf16>
    %23 = arith.mulf %21, %22 : vector<256x128xbf16>
    %c0_15 = arith.constant 0 : index
    %c0_16 = arith.constant 0 : index
    %24 = vector.load %arg7[%c0_15, %c0_16] : memref<128x128xbf16, #tpu.memory_space<vmem>>, vector<128x128xbf16>
    %cst_17 = arith.constant dense<0.000000e+00> : vector<256x128xf32>
    %25 = tpu.matmul %23, %24, %cst_17 {dimension_numbers = #tpu.dot_dimension_numbers<[1], [0], [0], [1], [0, 0, 1, 1], [], []>} : vector<256x128xbf16>, vector<128x128xbf16>, vector<256x128xf32> -> vector<256x128xf32>
    %c0_18 = arith.constant 0 : index
    %c0_19 = arith.constant 0 : index
    %26 = vector.load %arg8[%c0_18, %c0_19] : memref<1x128xf32, #tpu.memory_space<vmem>>, vector<1x128xf32>
    %27 = vector.broadcast %26 : vector<1x128xf32> to vector<256x128xf32>
    %28 = arith.addf %25, %27 : vector<256x128xf32>
    %29 = arith.addf %2, %28 : vector<256x128xf32>
    %c0_20 = arith.constant 0 : index
    %c0_21 = arith.constant 0 : index
    %30 = vector.load %arg9[%c0_20, %c0_21] : memref<1x128xf32, #tpu.memory_space<vmem>>, vector<1x128xf32>
    %c0_22 = arith.constant 0 : index
    %c0_23 = arith.constant 0 : index
    %31 = vector.load %arg10[%c0_22, %c0_23] : memref<1x128xf32, #tpu.memory_space<vmem>>, vector<1x128xf32>
    %cst_24 = arith.constant dense<0.000000e+00> : vector<256xf32>
    %32 = vector.multi_reduction <add>, %29, %cst_24 [1] : vector<256x128xf32> to vector<256xf32>
    %33 = vector.shape_cast %32 : vector<256xf32> to vector<256x1xf32>
    %cst_25 = arith.constant 1.280000e+02 : f32
    %34 = vector.broadcast %cst_25 : f32 to vector<256x1xf32>
    %35 = arith.divf %33, %34 : vector<256x1xf32>
    %36 = vector.broadcast %35 : vector<256x1xf32> to vector<256x128xf32>
    %37 = arith.subf %29, %36 : vector<256x128xf32>
    %38 = arith.mulf %37, %37 : vector<256x128xf32>
    %cst_26 = arith.constant dense<0.000000e+00> : vector<256xf32>
    %39 = vector.multi_reduction <add>, %38, %cst_26 [1] : vector<256x128xf32> to vector<256xf32>
    %40 = vector.shape_cast %39 : vector<256xf32> to vector<256x1xf32>
    %cst_27 = arith.constant 1.280000e+02 : f32
    %41 = vector.broadcast %cst_27 : f32 to vector<256x1xf32>
    %42 = arith.divf %40, %41 : vector<256x1xf32>
    %cst_28 = arith.constant 9.99999974E-6 : f32
    %43 = vector.broadcast %cst_28 : f32 to vector<256x1xf32>
    %44 = arith.addf %42, %43 : vector<256x1xf32>
    %45 = math.rsqrt %44 : vector<256x1xf32>
    %46 = vector.broadcast %45 : vector<256x1xf32> to vector<256x128xf32>
    %47 = arith.mulf %37, %46 : vector<256x128xf32>
    %48 = vector.broadcast %30 : vector<1x128xf32> to vector<256x128xf32>
    %49 = arith.mulf %47, %48 : vector<256x128xf32>
    %50 = vector.broadcast %31 : vector<1x128xf32> to vector<256x128xf32>
    %51 = arith.addf %49, %50 : vector<256x128xf32>
    %52 = arith.truncf %51 : vector<256x128xf32> to vector<256x128xbf16>
    %c0_29 = arith.constant 0 : index
    %c0_30 = arith.constant 0 : index
    %53 = vector.load %arg11[%c0_29, %c0_30] : memref<128x512xbf16, #tpu.memory_space<vmem>>, vector<128x512xbf16>
    %cst_31 = arith.constant dense<0.000000e+00> : vector<256x512xf32>
    %54 = tpu.matmul %52, %53, %cst_31 {dimension_numbers = #tpu.dot_dimension_numbers<[1], [0], [0], [1], [0, 0, 1, 1], [], []>} : vector<256x128xbf16>, vector<128x512xbf16>, vector<256x512xf32> -> vector<256x512xf32>
    %c0_32 = arith.constant 0 : index
    %c0_33 = arith.constant 0 : index
    %55 = vector.load %arg12[%c0_32, %c0_33] : memref<1x512xf32, #tpu.memory_space<vmem>>, vector<1x512xf32>
    %56 = vector.broadcast %55 : vector<1x512xf32> to vector<256x512xf32>
    %57 = arith.addf %54, %56 : vector<256x512xf32>
    %cst_34 = arith.constant 0.000000e+00 : f32
    %58 = vector.broadcast %cst_34 : f32 to vector<256x512xf32>
    %59 = arith.maximumf %57, %58 : vector<256x512xf32>
    %60 = arith.truncf %59 : vector<256x512xf32> to vector<256x512xbf16>
    %c0_35 = arith.constant 0 : index
    %c0_36 = arith.constant 0 : index
    %61 = vector.load %arg13[%c0_35, %c0_36] : memref<512x128xbf16, #tpu.memory_space<vmem>>, vector<512x128xbf16>
    %cst_37 = arith.constant dense<0.000000e+00> : vector<256x128xf32>
    %62 = tpu.matmul %60, %61, %cst_37 {dimension_numbers = #tpu.dot_dimension_numbers<[1], [0], [0], [1], [0, 0, 1, 1], [], []>} : vector<256x512xbf16>, vector<512x128xbf16>, vector<256x128xf32> -> vector<256x128xf32>
    %c0_38 = arith.constant 0 : index
    %c0_39 = arith.constant 0 : index
    %63 = vector.load %arg14[%c0_38, %c0_39] : memref<1x128xf32, #tpu.memory_space<vmem>>, vector<1x128xf32>
    %64 = vector.broadcast %63 : vector<1x128xf32> to vector<256x128xf32>
    %65 = arith.addf %62, %64 : vector<256x128xf32>
    %66 = arith.addf %51, %65 : vector<256x128xf32>
    %c0_40 = arith.constant 0 : index
    %c0_41 = arith.constant 0 : index
    %67 = vector.load %arg15[%c0_40, %c0_41] : memref<1x128xf32, #tpu.memory_space<vmem>>, vector<1x128xf32>
    %c0_42 = arith.constant 0 : index
    %c0_43 = arith.constant 0 : index
    %68 = vector.load %arg16[%c0_42, %c0_43] : memref<1x128xf32, #tpu.memory_space<vmem>>, vector<1x128xf32>
    %cst_44 = arith.constant dense<0.000000e+00> : vector<256xf32>
    %69 = vector.multi_reduction <add>, %66, %cst_44 [1] : vector<256x128xf32> to vector<256xf32>
    %70 = vector.shape_cast %69 : vector<256xf32> to vector<256x1xf32>
    %cst_45 = arith.constant 1.280000e+02 : f32
    %71 = vector.broadcast %cst_45 : f32 to vector<256x1xf32>
    %72 = arith.divf %70, %71 : vector<256x1xf32>
    %73 = vector.broadcast %72 : vector<256x1xf32> to vector<256x128xf32>
    %74 = arith.subf %66, %73 : vector<256x128xf32>
    %75 = arith.mulf %74, %74 : vector<256x128xf32>
    %cst_46 = arith.constant dense<0.000000e+00> : vector<256xf32>
    %76 = vector.multi_reduction <add>, %75, %cst_46 [1] : vector<256x128xf32> to vector<256xf32>
    %77 = vector.shape_cast %76 : vector<256xf32> to vector<256x1xf32>
    %cst_47 = arith.constant 1.280000e+02 : f32
    %78 = vector.broadcast %cst_47 : f32 to vector<256x1xf32>
    %79 = arith.divf %77, %78 : vector<256x1xf32>
    %cst_48 = arith.constant 9.99999974E-6 : f32
    %80 = vector.broadcast %cst_48 : f32 to vector<256x1xf32>
    %81 = arith.addf %79, %80 : vector<256x1xf32>
    %82 = math.rsqrt %81 : vector<256x1xf32>
    %83 = vector.broadcast %82 : vector<256x1xf32> to vector<256x128xf32>
    %84 = arith.mulf %74, %83 : vector<256x128xf32>
    %85 = vector.broadcast %67 : vector<1x128xf32> to vector<256x128xf32>
    %86 = arith.mulf %84, %85 : vector<256x128xf32>
    %87 = vector.broadcast %68 : vector<1x128xf32> to vector<256x128xf32>
    %88 = arith.addf %86, %87 : vector<256x128xf32>
    %89 = arith.truncf %88 : vector<256x128xf32> to vector<256x128xbf16>
    %c0_49 = arith.constant 0 : index
    %c0_50 = arith.constant 0 : index
    %90 = vector.load %arg17[%c0_49, %c0_50] : memref<256x128xbf16, #tpu.memory_space<vmem>>, vector<256x128xbf16>
    tpu.vector_store %arg17[%c0_49, %c0_50], %89 {strides = array<i32>} : memref<256x128xbf16, #tpu.memory_space<vmem>>, vector<256x128xbf16>,
    return
  }
  func.func @transform_0(%arg0: i32) -> (i32, i32) {
    %c0_i32 = arith.constant 0 : i32
    %c0_i32_0 = arith.constant 0 : i32
    return %arg0, %c0_i32 : i32, i32
  }
  func.func @transform_1(%arg0: i32) -> (i32, i32) {
    %c0_i32 = arith.constant 0 : i32
    %c0_i32_0 = arith.constant 0 : i32
    return %arg0, %c0_i32 : i32, i32
  }
  func.func @transform_2(%arg0: i32) -> (i32, i32) {
    %c0_i32 = arith.constant 0 : i32
    %c0_i32_0 = arith.constant 0 : i32
    %c0_i32_1 = arith.constant 0 : i32
    return %c0_i32, %c0_i32_0 : i32, i32
  }
  func.func @transform_3(%arg0: i32) -> (i32, i32) {
    %c0_i32 = arith.constant 0 : i32
    %c0_i32_0 = arith.constant 0 : i32
    %c0_i32_1 = arith.constant 0 : i32
    return %c0_i32, %c0_i32_0 : i32, i32
  }
  func.func @transform_4(%arg0: i32) -> (i32, i32) {
    %c0_i32 = arith.constant 0 : i32
    %c0_i32_0 = arith.constant 0 : i32
    %c0_i32_1 = arith.constant 0 : i32
    return %c0_i32, %c0_i32_0 : i32, i32
  }
  func.func @transform_5(%arg0: i32) -> (i32, i32) {
    %c0_i32 = arith.constant 0 : i32
    %c0_i32_0 = arith.constant 0 : i32
    %c0_i32_1 = arith.constant 0 : i32
    return %c0_i32, %c0_i32_0 : i32, i32
  }
  func.func @transform_6(%arg0: i32) -> (i32, i32) {
    %c0_i32 = arith.constant 0 : i32
    %c0_i32_0 = arith.constant 0 : i32
    %c0_i32_1 = arith.constant 0 : i32
    return %c0_i32, %c0_i32_0 : i32, i32
  }
  func.func @transform_7(%arg0: i32) -> (i32, i32) {
    %c0_i32 = arith.constant 0 : i32
    %c0_i32_0 = arith.constant 0 : i32
    %c0_i32_1 = arith.constant 0 : i32
    return %c0_i32, %c0_i32_0 : i32, i32
  }
  func.func @transform_8(%arg0: i32) -> (i32, i32) {
    %c0_i32 = arith.constant 0 : i32
    %c0_i32_0 = arith.constant 0 : i32
    %c0_i32_1 = arith.constant 0 : i32
    return %c0_i32, %c0_i32_0 : i32, i32
  }
  func.func @transform_9(%arg0: i32) -> (i32, i32) {
    %c0_i32 = arith.constant 0 : i32
    %c0_i32_0 = arith.constant 0 : i32
    %c0_i32_1 = arith.constant 0 : i32
    return %c0_i32, %c0_i32_0 : i32, i32
  }
  func.func @transform_10(%arg0: i32) -> (i32, i32) {
    %c0_i32 = arith.constant 0 : i32
    %c0_i32_0 = arith.constant 0 : i32
    %c0_i32_1 = arith.constant 0 : i32
    return %c0_i32, %c0_i32_0 : i32, i32
  }
  func.func @transform_11(%arg0: i32) -> (i32, i32) {
    %c0_i32 = arith.constant 0 : i32
    %c0_i32_0 = arith.constant 0 : i32
    %c0_i32_1 = arith.constant 0 : i32
    return %c0_i32, %c0_i32_0 : i32, i32
  }
  func.func @transform_12(%arg0: i32) -> (i32, i32) {
    %c0_i32 = arith.constant 0 : i32
    %c0_i32_0 = arith.constant 0 : i32
    %c0_i32_1 = arith.constant 0 : i32
    return %c0_i32, %c0_i32_0 : i32, i32
  }
  func.func @transform_13(%arg0: i32) -> (i32, i32) {
    %c0_i32 = arith.constant 0 : i32
    %c0_i32_0 = arith.constant 0 : i32
    %c0_i32_1 = arith.constant 0 : i32
    return %c0_i32, %c0_i32_0 : i32, i32
  }
  func.func @transform_14(%arg0: i32) -> (i32, i32) {
    %c0_i32 = arith.constant 0 : i32
    %c0_i32_0 = arith.constant 0 : i32
    %c0_i32_1 = arith.constant 0 : i32
    return %c0_i32, %c0_i32_0 : i32, i32
  }
  func.func @transform_15(%arg0: i32) -> (i32, i32) {
    %c0_i32 = arith.constant 0 : i32
    %c0_i32_0 = arith.constant 0 : i32
    %c0_i32_1 = arith.constant 0 : i32
    return %c0_i32, %c0_i32_0 : i32, i32
  }
  func.func @transform_16(%arg0: i32) -> (i32, i32) {
    %c0_i32 = arith.constant 0 : i32
    %c0_i32_0 = arith.constant 0 : i32
    return %arg0, %c0_i32 : i32, i32
  }
}

</mosaic_0001>

<llo_original>
// kernel: tpu_custom_call.1
$region0: #{tpu_custom_call.1}
  #allocation0 [shape = 'u32[]', space=smem, size = 0x4, offset = 0x4, fixed_abs, tag = 'smem constant byte address 0x4 - core index']
  #allocation1 [shape = 'u32[72,128]{1,0:T(1,128)}', space=vmem, size = 0x9000, scoped, tag = 'internal scratch']
  %s0 = inlined_call_operand.hbm [shape: bf16[512,128], index: 0, kind: input, shape index: {}]
  %s1 = inlined_call_operand.hbm [shape: bf16[512,128], index: 1, kind: input, shape index: {}]
  %s2 = inlined_call_operand.hbm [shape: bf16[128,128], index: 2, kind: input, shape index: {}]
  %s3 = inlined_call_operand.vmem [shape: f32[1,128], index: 3, kind: input, shape index: {}]
  %s4 = inlined_call_operand.hbm [shape: bf16[128,128], index: 4, kind: input, shape index: {}]
  %s5 = inlined_call_operand.vmem [shape: f32[1,128], index: 5, kind: input, shape index: {}]
  %s6 = inlined_call_operand.hbm [shape: bf16[128,128], index: 6, kind: input, shape index: {}]
  %s7 = inlined_call_operand.vmem [shape: f32[1,128], index: 7, kind: input, shape index: {}]
  %s8 = inlined_call_operand.hbm [shape: f32[1,128], index: 8, kind: input, shape index: {}]
  %s9 = inlined_call_operand.vmem [shape: f32[1,128], index: 9, kind: input, shape index: {}]
  %s10 = inlined_call_operand.hbm [shape: bf16[128,512], index: 10, kind: input, shape index: {}]
  %s11 = inlined_call_operand.vmem [shape: f32[1,512], index: 11, kind: input, shape index: {}]
  %s12 = inlined_call_operand.hbm [shape: bf16[512,128], index: 12, kind: input, shape index: {}]
  %s13 = inlined_call_operand.vmem [shape: f32[1,128], index: 13, kind: input, shape index: {}]
  %s14 = inlined_call_operand.vmem [shape: f32[1,128], index: 14, kind: input, shape index: {}]
  %s15 = inlined_call_operand.vmem [shape: f32[1,128], index: 15, kind: input, shape index: {}]
  %s16 = inlined_call_operand.hbm [shape: bf16[512,128], index: 16, kind: output, shape index: {}]
  %s17 = sld [smem:[#allocation0]]
  $region129: #{tpu_custom_call.1} parent=0
    _
  %s19 = ssub.s32 1, %s17
  %s20 = scalar_select 0, %s19, %s17
  $region1: #{tpu_custom_call.1} parent=0
    #allocation2 [shape = 'u8[131072]{0}', space=vmem, size = 0x20000, scoped, tag = 'input window, operand 0']
    #allocation3 [shape = 's32[2]{0}', space=sflag, size = 0x8, scoped, tag = 'scoped memory for tpu_custom_call.1']
    #allocation4 [shape = 's32[2]{0}', space=sflag, size = 0x8, scoped, tag = 'scoped memory for tpu_custom_call.1']
    #allocation5 [shape = 'u8[131072]{0}', space=vmem, size = 0x20000, scoped, tag = 'input window, operand 1']
    #allocation6 [shape = 's32[2]{0}', space=sflag, size = 0x8, scoped, tag = 'scoped memory for tpu_custom_call.1']
    #allocation7 [shape = 'u8[32768]{0}', space=vmem, size = 0x8000, scoped, tag = 'input window, operand 2, single buffered']
    #allocation8 [shape = 'u8[32768]{0}', space=vmem, size = 0x8000, scoped, tag = 'input window, operand 4, single buffered']
    #allocation9 [shape = 's32[1]{0}', space=sflag, size = 0x4, scoped, tag = 'scoped memory for tpu_custom_call.1']
    #allocation10 [shape = 'u8[32768]{0}', space=vmem, size = 0x8000, scoped, tag = 'input window, operand 6, single buffered']
    #allocation11 [shape = 'u8[512]{0}', space=vmem, size = 0x400, scoped, tag = 'input window, operand 8, single buffered']
    #allocation12 [shape = 's32[1]{0}', space=sflag, size = 0x4, scoped, tag = 'scoped memory for tpu_custom_call.1']
    #allocation13 [shape = 'u8[131072]{0}', space=vmem, size = 0x20000, scoped, tag = 'input window, operand 10, single buffered']
    #allocation14 [shape = 'u8[131072]{0}', space=vmem, size = 0x20000, scoped, tag = 'input window, operand 12, single buffered']
    #allocation15 [shape = 's32[1]{0}', space=sflag, size = 0x4, scoped, tag = 'scoped memory for tpu_custom_call.1']
    #allocation16 [shape = 'u8[131072]{0}', space=vmem, size = 0x20000, scoped, tag = 'output window, operand 0']
    %21 = vsyncpa [#allocation3], 0
    %s22 = scalar_lea.sflag [#allocation3], 1
    %23 = vsyncpa %s22, 0
    %24 = vsyncpa [#allocation6], 0
    %s25 = scalar_lea.sflag [#allocation6], 1
    %26 = vsyncpa %s25, 0
    %27 = vsyncpa [#allocation9], 0
    %28 = vsyncpa [#allocation12], 0
    %29 = vsyncpa [#allocation15], 0
    %30 = vsyncpa [#allocation4], 0
    %s31 = scalar_lea.sflag [#allocation4], 1
    %32 = vsyncpa %s31, 0
    loop: start=0, step=1, limit=4
    $region2: #{tpu_custom_call.1} parent=1 // loop_pre_header
      _
    $region3: #{tpu_custom_call.1} parent=1 // loop_header
      %s34 = sphi 0, %s38
      %p35 = scmp.ge.s32.totalorder %s34, 4
      %s44 = sphi 0, %s46
      %s47 = sphi 0, %s44
      %s48 = sphi 0, %s47
      %s64 = sphi 0, %s48
      %s70 = sphi 0, %s72
      %s73 = sphi 0, %s70
      %s74 = sphi 0, %s73
      %s90 = sphi 0, %s74
      %s94 = sphi 0, %s94
      %s96 = sphi 0, %s94
      %s97 = sphi 0, %s96
      %s111 = sphi 0, %s97
      %s115 = sphi 0, %s115
      %s117 = sphi 0, %s115
      %s118 = sphi 0, %s117
      %s132 = sphi 0, %s118
      %s136 = sphi 0, %s136
      %s138 = sphi 0, %s136
      %s139 = sphi 0, %s138
      %s153 = sphi 0, %s139
      %s157 = sphi 0, %s157
      %s159 = sphi 0, %s157
      %s160 = sphi 0, %s159
      %s174 = sphi 0, %s160
      %s178 = sphi 0, %s178
      %s180 = sphi 0, %s178
      %s181 = sphi 0, %s180
      %s195 = sphi 0, %s181
      %s199 = sphi 0, %s199
      %s201 = sphi 0, %s199
      %s202 = sphi 0, %s201
      %s216 = sphi 0, %s202
      %s220 = sphi 0, %s220
      %s222 = sphi 0, %s220
      %s223 = sphi 0, %s222
      %s237 = sphi 0, %s223
      %s241 = sphi 0, %s241
      %s243 = sphi 0, %s241
      %s244 = sphi 0, %s243
      %s258 = sphi 0, %s244
      %s262 = sphi 0, %s262
      %s264 = sphi 0, %s262
      %s265 = sphi 0, %s264
      %s279 = sphi 0, %s265
      %s283 = sphi 0, %s283
      %s285 = sphi 0, %s283
      %s286 = sphi 0, %s285
      %s300 = sphi 0, %s286
      %s304 = sphi 0, %s304
      %s306 = sphi 0, %s304
      %s307 = sphi 0, %s306
      %s321 = sphi 0, %s307
      %s325 = sphi 0, %s325
      %s327 = sphi 0, %s325
      %s328 = sphi 0, %s327
      %s342 = sphi 0, %s328
      %s346 = sphi 0, %s346
      %s348 = sphi 0, %s346
      %s349 = sphi 0, %s348
      %s363 = sphi 0, %s349
      %s367 = sphi 0, %s367
      %s369 = sphi 0, %s367
      %s370 = sphi 0, %s369
      %s384 = sphi 0, %s370
      %s390 = sphi 0, %s392
      %s393 = sphi 0, %s390
      %s394 = sphi 0, %s393
      %s410 = sphi 0, %s394
    $region4: #{tpu_custom_call.1} parent=1 // loop_header_branch
      %37 = sbr.rel (%p35) target = $region8
    $region5: #{tpu_custom_call.1} parent=1 // loop_body
      %s39 = ssub.s32 %s34, 1
      %s40 = ssub.s32 %s34, 2
      %s41 = sadd.s32 %s34, 1
      %s42 = ssub.s32 %s34, %s41
      %p43 = scmp.eq.s32.totalorder %s42, 0
      %s45 = sadd.s32 %s44, 1
      %s46 = scalar_select %p43, %s44, %s45
      %p49 = pneg %p43
      %p50 = scmp.eq.s32.totalorder %s34, 1
      %p51 = por %p49, %p50
      %p52 = scmp.ne.s32.totalorder %s44, %s47
      %p53 = scmp.eq.s32.totalorder %s34, 0
      %p54 = por %p52, %p53
      %p55 = scmp.ne.s32.totalorder %s44, %s47
      %p56 = scmp.eq.s32.totalorder %s39, 1
      %p57 = por %p55, %p56
      %p58 = scmp.ne.s32.totalorder %s47, %s48
      %p59 = scmp.eq.s32.totalorder %s39, 0
      %p60 = por %p58, %p59
      %p61 = scmp.ne.s32.totalorder %s47, %s48
      %p62 = scmp.eq.s32.totalorder %s40, 1
      %p63 = por %p61, %p62
      %p65 = scmp.ne.s32.totalorder %s48, %s64
      %p66 = scmp.eq.s32.totalorder %s40, 0
      %p67 = por %p65, %p66
      %s68 = ssub.s32 %s34, %s41
      %p69 = scmp.eq.s32.totalorder %s68, 0
      %s71 = sadd.s32 %s70, 1
      %s72 = scalar_select %p69, %s70, %s71
      %p75 = pneg %p69
      %p76 = scmp.eq.s32.totalorder %s34, 1
      %p77 = por %p75, %p76
      %p78 = scmp.ne.s32.totalorder %s70, %s73
      %p79 = scmp.eq.s32.totalorder %s34, 0
      %p80 = por %p78, %p79
      %p81 = scmp.ne.s32.totalorder %s70, %s73
      %p82 = scmp.eq.s32.totalorder %s39, 1
      %p83 = por %p81, %p82
      %p84 = scmp.ne.s32.totalorder %s73, %s74
      %p85 = scmp.eq.s32.totalorder %s39, 0
      %p86 = por %p84, %p85
      %p87 = scmp.ne.s32.totalorder %s73, %s74
      %p88 = scmp.eq.s32.totalorder %s40, 1
      %p89 = por %p87, %p88
      %p91 = scmp.ne.s32.totalorder %s74, %s90
      %p92 = scmp.eq.s32.totalorder %s40, 0
      %p93 = por %p91, %p92
      %s95 = sadd.s32 %s94, 1
      %p98 = scmp.eq.s32.totalorder %s34, 1
      %p99 = scmp.ne.s32.totalorder %s94, %s96
      %p100 = scmp.eq.s32.totalorder %s34, 0
      %p101 = por %p99, %p100
      %p102 = scmp.ne.s32.totalorder %s94, %s96
      %p103 = scmp.eq.s32.totalorder %s39, 1
      %p104 = por %p102, %p103
      %p105 = scmp.ne.s32.totalorder %s96, %s97
      %p106 = scmp.eq.s32.totalorder %s39, 0
      %p107 = por %p105, %p106
      %p108 = scmp.ne.s32.totalorder %s96, %s97
      %p109 = scmp.eq.s32.totalorder %s40, 1
      %p110 = por %p108, %p109
      %p112 = scmp.ne.s32.totalorder %s97, %s111
      %p113 = scmp.eq.s32.totalorder %s40, 0
      %p114 = por %p112, %p113
      %s116 = sadd.s32 %s115, 1
      %p119 = scmp.eq.s32.totalorder %s34, 1
      %p120 = scmp.ne.s32.totalorder %s115, %s117
      %p121 = scmp.eq.s32.totalorder %s34, 0
      %p122 = por %p120, %p121
      %p123 = scmp.ne.s32.totalorder %s115, %s117
      %p124 = scmp.eq.s32.totalorder %s39, 1
      %p125 = por %p123, %p124
      %p126 = scmp.ne.s32.totalorder %s117, %s118
      %p127 = scmp.eq.s32.totalorder %s39, 0
      %p128 = por %p126, %p127
      %p129 = scmp.ne.s32.totalorder %s117, %s118
      %p130 = scmp.eq.s32.totalorder %s40, 1
      %p131 = por %p129, %p130
      %p133 = scmp.ne.s32.totalorder %s118, %s132
      %p134 = scmp.eq.s32.totalorder %s40, 0
      %p135 = por %p133, %p134
      %s137 = sadd.s32 %s136, 1
      %p140 = scmp.eq.s32.totalorder %s34, 1
      %p141 = scmp.ne.s32.totalorder %s136, %s138
      %p142 = scmp.eq.s32.totalorder %s34, 0
      %p143 = por %p141, %p142
      %p144 = scmp.ne.s32.totalorder %s136, %s138
      %p145 = scmp.eq.s32.totalorder %s39, 1
      %p146 = por %p144, %p145
      %p147 = scmp.ne.s32.totalorder %s138, %s139
      %p148 = scmp.eq.s32.totalorder %s39, 0
      %p149 = por %p147, %p148
      %p150 = scmp.ne.s32.totalorder %s138, %s139
      %p151 = scmp.eq.s32.totalorder %s40, 1
      %p152 = por %p150, %p151
      %p154 = scmp.ne.s32.totalorder %s139, %s153
      %p155 = scmp.eq.s32.totalorder %s40, 0
      %p156 = por %p154, %p155
      %s158 = sadd.s32 %s157, 1
      %p161 = scmp.eq.s32.totalorder %s34, 1
      %p162 = scmp.ne.s32.totalorder %s157, %s159
      %p163 = scmp.eq.s32.totalorder %s34, 0
      %p164 = por %p162, %p163
      %p165 = scmp.ne.s32.totalorder %s157, %s159
      %p166 = scmp.eq.s32.totalorder %s39, 1
      %p167 = por %p165, %p166
      %p168 = scmp.ne.s32.totalorder %s159, %s160
      %p169 = scmp.eq.s32.totalorder %s39, 0
      %p170 = por %p168, %p169
      %p171 = scmp.ne.s32.totalorder %s159, %s160
      %p172 = scmp.eq.s32.totalorder %s40, 1
      %p173 = por %p171, %p172
      %p175 = scmp.ne.s32.totalorder %s160, %s174
      %p176 = scmp.eq.s32.totalorder %s40, 0
      %p177 = por %p175, %p176
      %s179 = sadd.s32 %s178, 1
      %p182 = scmp.eq.s32.totalorder %s34, 1
      %p183 = scmp.ne.s32.totalorder %s178, %s180
      %p184 = scmp.eq.s32.totalorder %s34, 0
      %p185 = por %p183, %p184
      %p186 = scmp.ne.s32.totalorder %s178, %s180
      %p187 = scmp.eq.s32.totalorder %s39, 1
      %p188 = por %p186, %p187
      %p189 = scmp.ne.s32.totalorder %s180, %s181
      %p190 = scmp.eq.s32.totalorder %s39, 0
      %p191 = por %p189, %p190
      %p192 = scmp.ne.s32.totalorder %s180, %s181
      %p193 = scmp.eq.s32.totalorder %s40, 1
      %p194 = por %p192, %p193
      %p196 = scmp.ne.s32.totalorder %s181, %s195
      %p197 = scmp.eq.s32.totalorder %s40, 0
      %p198 = por %p196, %p197
      %s200 = sadd.s32 %s199, 1
      %p203 = scmp.eq.s32.totalorder %s34, 1
      %p204 = scmp.ne.s32.totalorder %s199, %s201
      %p205 = scmp.eq.s32.totalorder %s34, 0
      %p206 = por %p204, %p205
      %p207 = scmp.ne.s32.totalorder %s199, %s201
      %p208 = scmp.eq.s32.totalorder %s39, 1
      %p209 = por %p207, %p208
      %p210 = scmp.ne.s32.totalorder %s201, %s202
      %p211 = scmp.eq.s32.totalorder %s39, 0
      %p212 = por %p210, %p211
      %p213 = scmp.ne.s32.totalorder %s201, %s202
      %p214 = scmp.eq.s32.totalorder %s40, 1
      %p215 = por %p213, %p214
      %p217 = scmp.ne.s32.totalorder %s202, %s216
      %p218 = scmp.eq.s32.totalorder %s40, 0
      %p219 = por %p217, %p218
      %s221 = sadd.s32 %s220, 1
      %p224 = scmp.eq.s32.totalorder %s34, 1
      %p225 = scmp.ne.s32.totalorder %s220, %s222
      %p226 = scmp.eq.s32.totalorder %s34, 0
      %p227 = por %p225, %p226
      %p228 = scmp.ne.s32.totalorder %s220, %s222
      %p229 = scmp.eq.s32.totalorder %s39, 1
      %p230 = por %p228, %p229
      %p231 = scmp.ne.s32.totalorder %s222, %s223
      %p232 = scmp.eq.s32.totalorder %s39, 0
      %p233 = por %p231, %p232
      %p234 = scmp.ne.s32.totalorder %s222, %s223
      %p235 = scmp.eq.s32.totalorder %s40, 1
      %p236 = por %p234, %p235
      %p238 = scmp.ne.s32.totalorder %s223, %s237
      %p239 = scmp.eq.s32.totalorder %s40, 0
      %p240 = por %p238, %p239
      %s242 = sadd.s32 %s241, 1
      %p245 = scmp.eq.s32.totalorder %s34, 1
      %p246 = scmp.ne.s32.totalorder %s241, %s243
      %p247 = scmp.eq.s32.totalorder %s34, 0
      %p248 = por %p246, %p247
      %p249 = scmp.ne.s32.totalorder %s241, %s243
      %p250 = scmp.eq.s32.totalorder %s39, 1
      %p251 = por %p249, %p250
      %p252 = scmp.ne.s32.totalorder %s243, %s244
      %p253 = scmp.eq.s32.totalorder %s39, 0
      %p254 = por %p252, %p253
      %p255 = scmp.ne.s32.totalorder %s243, %s244
      %p256 = scmp.eq.s32.totalorder %s40, 1
      %p257 = por %p255, %p256
      %p259 = scmp.ne.s32.totalorder %s244, %s258
      %p260 = scmp.eq.s32.totalorder %s40, 0
      %p261 = por %p259, %p260
      %s263 = sadd.s32 %s262, 1
      %p266 = scmp.eq.s32.totalorder %s34, 1
      %p267 = scmp.ne.s32.totalorder %s262, %s264
      %p268 = scmp.eq.s32.totalorder %s34, 0
      %p269 = por %p267, %p268
      %p270 = scmp.ne.s32.totalorder %s262, %s264
      %p271 = scmp.eq.s32.totalorder %s39, 1
      %p272 = por %p270, %p271
      %p273 = scmp.ne.s32.totalorder %s264, %s265
      %p274 = scmp.eq.s32.totalorder %s39, 0
      %p275 = por %p273, %p274
      %p276 = scmp.ne.s32.totalorder %s264, %s265
      %p277 = scmp.eq.s32.totalorder %s40, 1
      %p278 = por %p276, %p277
      %p280 = scmp.ne.s32.totalorder %s265, %s279
      %p281 = scmp.eq.s32.totalorder %s40, 0
      %p282 = por %p280, %p281
      %s284 = sadd.s32 %s283, 1
      %p287 = scmp.eq.s32.totalorder %s34, 1
      %p288 = scmp.ne.s32.totalorder %s283, %s285
      %p289 = scmp.eq.s32.totalorder %s34, 0
      %p290 = por %p288, %p289
      %p291 = scmp.ne.s32.totalorder %s283, %s285
      %p292 = scmp.eq.s32.totalorder %s39, 1
      %p293 = por %p291, %p292
      %p294 = scmp.ne.s32.totalorder %s285, %s286
      %p295 = scmp.eq.s32.totalorder %s39, 0
      %p296 = por %p294, %p295
      %p297 = scmp.ne.s32.totalorder %s285, %s286
      %p298 = scmp.eq.s32.totalorder %s40, 1
      %p299 = por %p297, %p298
      %p301 = scmp.ne.s32.totalorder %s286, %s300
      %p302 = scmp.eq.s32.totalorder %s40, 0
      %p303 = por %p301, %p302
      %s305 = sadd.s32 %s304, 1
      %p308 = scmp.eq.s32.totalorder %s34, 1
      %p309 = scmp.ne.s32.totalorder %s304, %s306
      %p310 = scmp.eq.s32.totalorder %s34, 0
      %p311 = por %p309, %p310
      %p312 = scmp.ne.s32.totalorder %s304, %s306
      %p313 = scmp.eq.s32.totalorder %s39, 1
      %p314 = por %p312, %p313
      %p315 = scmp.ne.s32.totalorder %s306, %s307
      %p316 = scmp.eq.s32.totalorder %s39, 0
      %p317 = por %p315, %p316
      %p318 = scmp.ne.s32.totalorder %s306, %s307
      %p319 = scmp.eq.s32.totalorder %s40, 1
      %p320 = por %p318, %p319
      %p322 = scmp.ne.s32.totalorder %s307, %s321
      %p323 = scmp.eq.s32.totalorder %s40, 0
      %p324 = por %p322, %p323
      %s326 = sadd.s32 %s325, 1
      %p329 = scmp.eq.s32.totalorder %s34, 1
      %p330 = scmp.ne.s32.totalorder %s325, %s327
      %p331 = scmp.eq.s32.totalorder %s34, 0
      %p332 = por %p330, %p331
      %p333 = scmp.ne.s32.totalorder %s325, %s327
      %p334 = scmp.eq.s32.totalorder %s39, 1
      %p335 = por %p333, %p334
      %p336 = scmp.ne.s32.totalorder %s327, %s328
      %p337 = scmp.eq.s32.totalorder %s39, 0
      %p338 = por %p336, %p337
      %p339 = scmp.ne.s32.totalorder %s327, %s328
      %p340 = scmp.eq.s32.totalorder %s40, 1
      %p341 = por %p339, %p340
      %p343 = scmp.ne.s32.totalorder %s328, %s342
      %p344 = scmp.eq.s32.totalorder %s40, 0
      %p345 = por %p343, %p344
      %s347 = sadd.s32 %s346, 1
      %p350 = scmp.eq.s32.totalorder %s34, 1
      %p351 = scmp.ne.s32.totalorder %s346, %s348
      %p352 = scmp.eq.s32.totalorder %s34, 0
      %p353 = por %p351, %p352
      %p354 = scmp.ne.s32.totalorder %s346, %s348
      %p355 = scmp.eq.s32.totalorder %s39, 1
      %p356 = por %p354, %p355
      %p357 = scmp.ne.s32.totalorder %s348, %s349
      %p358 = scmp.eq.s32.totalorder %s39, 0
      %p359 = por %p357, %p358
      %p360 = scmp.ne.s32.totalorder %s348, %s349
      %p361 = scmp.eq.s32.totalorder %s40, 1
      %p362 = por %p360, %p361
      %p364 = scmp.ne.s32.totalorder %s349, %s363
      %p365 = scmp.eq.s32.totalorder %s40, 0
      %p366 = por %p364, %p365
      %s368 = sadd.s32 %s367, 1
      %p371 = scmp.eq.s32.totalorder %s34, 1
      %p372 = scmp.ne.s32.totalorder %s367, %s369
      %p373 = scmp.eq.s32.totalorder %s34, 0
      %p374 = por %p372, %p373
      %p375 = scmp.ne.s32.totalorder %s367, %s369
      %p376 = scmp.eq.s32.totalorder %s39, 1
      %p377 = por %p375, %p376
      %p378 = scmp.ne.s32.totalorder %s369, %s370
      %p379 = scmp.eq.s32.totalorder %s39, 0
      %p380 = por %p378, %p379
      %p381 = scmp.ne.s32.totalorder %s369, %s370
      %p382 = scmp.eq.s32.totalorder %s40, 1
      %p383 = por %p381, %p382
      %p385 = scmp.ne.s32.totalorder %s370, %s384
      %p386 = scmp.eq.s32.totalorder %s40, 0
      %p387 = por %p385, %p386
      %s388 = ssub.s32 %s34, %s41
      %p389 = scmp.eq.s32.totalorder %s388, 0
      %s391 = sadd.s32 %s390, 1
      %s392 = scalar_select %p389, %s390, %s391
      %p395 = pneg %p389
      %p396 = scmp.eq.s32.totalorder %s34, 1
      %p397 = por %p395, %p396
      %p398 = scmp.ne.s32.totalorder %s390, %s393
      %p399 = scmp.eq.s32.totalorder %s34, 0
      %p400 = por %p398, %p399
      %p401 = scmp.ne.s32.totalorder %s390, %s393
      %p402 = scmp.eq.s32.totalorder %s39, 1
      %p403 = por %p401, %p402
      %p404 = scmp.ne.s32.totalorder %s393, %s394
      %p405 = scmp.eq.s32.totalorder %s39, 0
      %p406 = por %p404, %p405
      %p407 = scmp.ne.s32.totalorder %s393, %s394
      %p408 = scmp.eq.s32.totalorder %s40, 1
      %p409 = por %p407, %p408
      %p411 = scmp.ne.s32.totalorder %s394, %s410
      %p412 = scmp.eq.s32.totalorder %s40, 0
      %p413 = por %p411, %p412
      %p414 = scmp.le.s32.totalorder 1, %s34
      %p415 = scmp.lt.s32.totalorder %s34, 3
      %p416 = pnand %p414, %p415
      %p417 = pneg %p416
      // Predicated region
      $region9: #{tpu_custom_call.1} parent=5 // pred_check
        _
      $region10: #{tpu_custom_call.1} parent=5 // pred_check_branch
        %419 = sbr.rel (%p416) target = $region12
      $region11: #{tpu_custom_call.1} parent=5 // pred_region
        %s420 = ssub.s32 %s34, 1
        // Predicated region
        $region13: #{tpu_custom_call.1} parent=11 // pred_check
          %p421 = pneg %p107
        $region14: #{tpu_custom_call.1} parent=11 // pred_check_branch
          %423 = sbr.rel (%p421) target = $region16
        $region15: #{tpu_custom_call.1} parent=11 // pred_region
          %425 = vsyncadd [#allocation6], 0
          %s426 = sshll.u32 %s2, 4
          %s427 = int_to_ptr.hbm [resolvable:$true] %s426
          %s428 = sshll.u32 [#allocation7], 4
          %s429 = int_to_ptr.vmem [resolvable:$true] %s428
          %434 = dma.hbm_to_vmem [thread:$0]  %s427, 1024, %s429, [#allocation6], 64, 64, 4
        $region16: #{tpu_custom_call.1} parent=11 // pred_fallthru
          _
        // Predicated region
        $region17: #{tpu_custom_call.1} parent=11 // pred_check
          %p435 = pneg %p128
        $region18: #{tpu_custom_call.1} parent=11 // pred_check_branch
          %437 = sbr.rel (%p435) target = $region20
        $region19: #{tpu_custom_call.1} parent=11 // pred_region
          _
        $region20: #{tpu_custom_call.1} parent=11 // pred_fallthru
          _
        // Predicated region
        $region21: #{tpu_custom_call.1} parent=11 // pred_check
          %p438 = pneg %p149
        $region22: #{tpu_custom_call.1} parent=11 // pred_check_branch
          %440 = sbr.rel (%p438) target = $region24
        $region23: #{tpu_custom_call.1} parent=11 // pred_region
          %442 = vsyncadd [#allocation9], 0
          %s443 = sshll.u32 %s4, 4
          %s444 = int_to_ptr.hbm [resolvable:$true] %s443
          %s445 = sshll.u32 [#allocation8], 4
          %s446 = int_to_ptr.vmem [resolvable:$true] %s445
          %451 = dma.hbm_to_vmem [thread:$0]  %s444, 1024, %s446, [#allocation9], 64, 64, 4
        $region24: #{tpu_custom_call.1} parent=11 // pred_fallthru
          _
        // Predicated region
        $region25: #{tpu_custom_call.1} parent=11 // pred_check
          %p452 = pneg %p170
        $region26: #{tpu_custom_call.1} parent=11 // pred_check_branch
          %454 = sbr.rel (%p452) target = $region28
        $region27: #{tpu_custom_call.1} parent=11 // pred_region
          _
        $region28: #{tpu_custom_call.1} parent=11 // pred_fallthru
          _
        // Predicated region
        $region29: #{tpu_custom_call.1} parent=11 // pred_check
          %p455 = pneg %p191
        $region30: #{tpu_custom_call.1} parent=11 // pred_check_branch
          %457 = sbr.rel (%p455) target = $region32
        $region31: #{tpu_custom_call.1} parent=11 // pred_region
          %459 = vsyncadd [#allocation9], 0
          %s460 = sshll.u32 %s6, 4
          %s461 = int_to_ptr.hbm [resolvable:$true] %s460
          %s462 = sshll.u32 [#allocation10], 4
          %s463 = int_to_ptr.vmem [resolvable:$true] %s462
          %468 = dma.hbm_to_vmem [thread:$0]  %s461, 1024, %s463, [#allocation9], 64, 64, 4
        $region32: #{tpu_custom_call.1} parent=11 // pred_fallthru
          _
        // Predicated region
        $region33: #{tpu_custom_call.1} parent=11 // pred_check
          %p469 = pneg %p212
        $region34: #{tpu_custom_call.1} parent=11 // pred_check_branch
          %471 = sbr.rel (%p469) target = $region36
        $region35: #{tpu_custom_call.1} parent=11 // pred_region
          _
        $region36: #{tpu_custom_call.1} parent=11 // pred_fallthru
          _
        // Predicated region
        $region37: #{tpu_custom_call.1} parent=11 // pred_check
          %p472 = pneg %p233
        $region38: #{tpu_custom_call.1} parent=11 // pred_check_branch
          %474 = sbr.rel (%p472) target = $region40
        $region39: #{tpu_custom_call.1} parent=11 // pred_region
          %476 = vsyncadd [#allocation12], 0
          %s478 = sshll.u32 %s8, 4
          %s479 = int_to_ptr.hbm [resolvable:$true] %s478
          %s480 = sshll.u32 [#allocation11], 4
          %s481 = int_to_ptr.vmem [resolvable:$true] %s480
          %483 = dma.hbm_to_vmem [thread:$0]  %s479, 16, %s481, [#allocation12]
        $region40: #{tpu_custom_call.1} parent=11 // pred_fallthru
          _
        // Predicated region
        $region41: #{tpu_custom_call.1} parent=11 // pred_check
          %p484 = pneg %p254
        $region42: #{tpu_custom_call.1} parent=11 // pred_check_branch
          %486 = sbr.rel (%p484) target = $region44
        $region43: #{tpu_custom_call.1} parent=11 // pred_region
          _
        $region44: #{tpu_custom_call.1} parent=11 // pred_fallthru
          _
        // Predicated region
        $region45: #{tpu_custom_call.1} parent=11 // pred_check
          %p487 = pneg %p275
        $region46: #{tpu_custom_call.1} parent=11 // pred_check_branch
          %489 = sbr.rel (%p487) target = $region48
        $region47: #{tpu_custom_call.1} parent=11 // pred_region
          %491 = vsyncadd [#allocation12], 0
          %s492 = sshll.u32 %s10, 4
          %s493 = int_to_ptr.hbm [resolvable:$true] %s492
          %s494 = sshll.u32 [#allocation13], 4
          %s495 = int_to_ptr.vmem [resolvable:$true] %s494
          %500 = dma.hbm_to_vmem [thread:$0]  %s493, 4096, %s495, [#allocation12], 256, 256, 16
        $region48: #{tpu_custom_call.1} parent=11 // pred_fallthru
          _
        // Predicated region
        $region49: #{tpu_custom_call.1} parent=11 // pred_check
          %p501 = pneg %p296
        $region50: #{tpu_custom_call.1} parent=11 // pred_check_branch
          %503 = sbr.rel (%p501) target = $region52
        $region51: #{tpu_custom_call.1} parent=11 // pred_region
          _
        $region52: #{tpu_custom_call.1} parent=11 // pred_fallthru
          _
        // Predicated region
        $region53: #{tpu_custom_call.1} parent=11 // pred_check
          %p504 = pneg %p317
        $region54: #{tpu_custom_call.1} parent=11 // pred_check_branch
          %506 = sbr.rel (%p504) target = $region56
        $region55: #{tpu_custom_call.1} parent=11 // pred_region
          %508 = vsyncadd [#allocation15], 0
          %s509 = sshll.u32 %s12, 4
          %s510 = int_to_ptr.hbm [resolvable:$true] %s509
          %s511 = sshll.u32 [#allocation14], 4
          %s512 = int_to_ptr.vmem [resolvable:$true] %s511
          %517 = dma.hbm_to_vmem [thread:$0]  %s510, 4096, %s512, [#allocation15], 64, 64, 4
        $region56: #{tpu_custom_call.1} parent=11 // pred_fallthru
          _
        // Predicated region
        $region57: #{tpu_custom_call.1} parent=11 // pred_check
          %p518 = pneg %p338
        $region58: #{tpu_custom_call.1} parent=11 // pred_check_branch
          %520 = sbr.rel (%p518) target = $region60
        $region59: #{tpu_custom_call.1} parent=11 // pred_region
          _
        $region60: #{tpu_custom_call.1} parent=11 // pred_fallthru
          _
        // Predicated region
        $region61: #{tpu_custom_call.1} parent=11 // pred_check
          %p521 = pneg %p359
        $region62: #{tpu_custom_call.1} parent=11 // pred_check_branch
          %523 = sbr.rel (%p521) target = $region64
        $region63: #{tpu_custom_call.1} parent=11 // pred_region
          _
        $region64: #{tpu_custom_call.1} parent=11 // pred_fallthru
          _
        // Predicated region
        $region65: #{tpu_custom_call.1} parent=11 // pred_check
          %p524 = pneg %p380
        $region66: #{tpu_custom_call.1} parent=11 // pred_check_branch
          %526 = sbr.rel (%p524) target = $region68
        $region67: #{tpu_custom_call.1} parent=11 // pred_region
          _
        $region68: #{tpu_custom_call.1} parent=11 // pred_fallthru
          _
      $region12: #{tpu_custom_call.1} parent=5 // pred_fallthru
        _
      %p527 = scmp.lt.s32.totalorder %s34, 2
      // Predicated region
      $region69: #{tpu_custom_call.1} parent=5 // pred_check
        %p528 = pneg %p527
      $region70: #{tpu_custom_call.1} parent=5 // pred_check_branch
        %530 = sbr.rel (%p528) target = $region72
      $region71: #{tpu_custom_call.1} parent=5 // pred_region
        // Predicated region
        $region73: #{tpu_custom_call.1} parent=71 // pred_check
          %p531 = pneg %p54
        $region74: #{tpu_custom_call.1} parent=71 // pred_check_branch
          %533 = sbr.rel (%p531) target = $region76
        $region75: #{tpu_custom_call.1} parent=71 // pred_region
          %s534 = sand.u32 %s44, 1
          %s535 = scalar_lea.sflag [#allocation3], %s534
          %s536 = sand.u32 %s44, 1
          %s537 = smul.addr %s536, 128
          %s538 = scalar_lea.vmem [#allocation2], %s537
          %s539 = smul.u32 32, %s34
          %541 = vsyncadd %s535, 0
          %s542 = smul.addr %s539, 4
          %s543 = scalar_lea.hbm %s0, %s542
          %s544 = sshll.u32 %s543, 4
          %s545 = int_to_ptr.hbm [resolvable:$true] %s544
          %s546 = sshll.u32 %s538, 4
          %s547 = int_to_ptr.vmem [resolvable:$true] %s546
          %552 = dma.hbm_to_vmem [thread:$0]  %s545, 2048, %s547, %s535, 64, 64, 4
        $region76: #{tpu_custom_call.1} parent=71 // pred_fallthru
          _
        // Predicated region
        $region77: #{tpu_custom_call.1} parent=71 // pred_check
          %p553 = pneg %p80
        $region78: #{tpu_custom_call.1} parent=71 // pred_check_branch
          %555 = sbr.rel (%p553) target = $region80
        $region79: #{tpu_custom_call.1} parent=71 // pred_region
          %s556 = sand.u32 %s34, 1
          %s557 = scalar_lea.sflag [#allocation6], %s556
          %s558 = sand.u32 %s70, 1
          %s559 = smul.addr %s558, 128
          %s560 = scalar_lea.vmem [#allocation5], %s559
          %s561 = smul.u32 32, %s34
          %563 = vsyncadd %s557, 0
          %s564 = smul.addr %s561, 4
          %s565 = scalar_lea.hbm %s1, %s564
          %s566 = sshll.u32 %s565, 4
          %s567 = int_to_ptr.hbm [resolvable:$true] %s566
          %s568 = sshll.u32 %s560, 4
          %s569 = int_to_ptr.vmem [resolvable:$true] %s568
          %574 = dma.hbm_to_vmem [thread:$0]  %s567, 2048, %s569, %s557, 64, 64, 4
        $region80: #{tpu_custom_call.1} parent=71 // pred_fallthru
          _
      $region72: #{tpu_custom_call.1} parent=5 // pred_fallthru
        _
      %p575 = scmp.le.s32.totalorder 1, %s34
      %p576 = scmp.lt.s32.totalorder %s34, 3
      %p577 = pnand %p575, %p576
      %p578 = pneg %p577
      // Predicated region
      $region81: #{tpu_custom_call.1} parent=5 // pred_check
        _
      $region82: #{tpu_custom_call.1} parent=5 // pred_check_branch
        %580 = sbr.rel (%p577) target = $region84
      $region83: #{tpu_custom_call.1} parent=5 // pred_region
        %s581 = ssub.s32 %s34, 1
        %s582 = sand.u32 %s47, 1
        %s583 = scalar_lea.sflag [#allocation3], %s582
        %s584 = sand.u32 %s47, 1
        %s585 = smul.addr %s584, 128
        %s586 = scalar_lea.vmem [#allocation2], %s585
        // Predicated region
        $region85: #{tpu_custom_call.1} parent=83 // pred_check
          %p587 = pneg %p60
        $region86: #{tpu_custom_call.1} parent=83 // pred_check_branch
          %589 = sbr.rel (%p587) target = $region88
        $region87: #{tpu_custom_call.1} parent=83 // pred_region
          %591 = dma.done %s583, 2048
        $region88: #{tpu_custom_call.1} parent=83 // pred_fallthru
          _
        %s592 = sand.u32 %s39, 1
        %s593 = scalar_lea.sflag [#allocation6], %s592
        %s594 = sand.u32 %s73, 1
        %s595 = smul.addr %s594, 128
        %s596 = scalar_lea.vmem [#allocation5], %s595
        // Predicated region
        $region89: #{tpu_custom_call.1} parent=83 // pred_check
          %p597 = pneg %p86
        $region90: #{tpu_custom_call.1} parent=83 // pred_check_branch
          %599 = sbr.rel (%p597) target = $region92
        $region91: #{tpu_custom_call.1} parent=83 // pred_region
          %601 = dma.done %s593, 2048
        $region92: #{tpu_custom_call.1} parent=83 // pred_fallthru
          _
        // Predicated region
        $region93: #{tpu_custom_call.1} parent=83 // pred_check
          %p602 = pneg %p107
        $region94: #{tpu_custom_call.1} parent=83 // pred_check_branch
          %604 = sbr.rel (%p602) target = $region96
        $region95: #{tpu_custom_call.1} parent=83 // pred_region
          %606 = dma.done [#allocation6], 1024
        $region96: #{tpu_custom_call.1} parent=83 // pred_fallthru
          _
        // Predicated region
        $region97: #{tpu_custom_call.1} parent=83 // pred_check
          %p607 = pneg %p149
        $region98: #{tpu_custom_call.1} parent=83 // pred_check_branch
          %609 = sbr.rel (%p607) target = $region100
        $region99: #{tpu_custom_call.1} parent=83 // pred_region
          %611 = dma.done [#allocation9], 1024
        $region100: #{tpu_custom_call.1} parent=83 // pred_fallthru
          _
        // Predicated region
        $region101: #{tpu_custom_call.1} parent=83 // pred_check
          %p612 = pneg %p191
        $region102: #{tpu_custom_call.1} parent=83 // pred_check_branch
          %614 = sbr.rel (%p612) target = $region104
        $region103: #{tpu_custom_call.1} parent=83 // pred_region
          %616 = dma.done [#allocation9], 1024
        $region104: #{tpu_custom_call.1} parent=83 // pred_fallthru
          _
        // Predicated region
        $region105: #{tpu_custom_call.1} parent=83 // pred_check
          %p617 = pneg %p233
        $region106: #{tpu_custom_call.1} parent=83 // pred_check_branch
          %619 = sbr.rel (%p617) target = $region108
        $region107: #{tpu_custom_call.1} parent=83 // pred_region
          %621 = dma.done [#allocation12], 16
        $region108: #{tpu_custom_call.1} parent=83 // pred_fallthru
          _
        // Predicated region
        $region109: #{tpu_custom_call.1} parent=83 // pred_check
          %p622 = pneg %p275
        $region110: #{tpu_custom_call.1} parent=83 // pred_check_branch
          %624 = sbr.rel (%p622) target = $region112
        $region111: #{tpu_custom_call.1} parent=83 // pred_region
          %626 = dma.done [#allocation12], 4096
        $region112: #{tpu_custom_call.1} parent=83 // pred_fallthru
          _
        // Predicated region
        $region113: #{tpu_custom_call.1} parent=83 // pred_check
          %p627 = pneg %p317
        $region114: #{tpu_custom_call.1} parent=83 // pred_check_branch
          %629 = sbr.rel (%p627) target = $region116
        $region115: #{tpu_custom_call.1} parent=83 // pred_region
          %631 = dma.done [#allocation15], 4096
        $region116: #{tpu_custom_call.1} parent=83 // pred_fallthru
          _
        %s632 = sand.u32 %s47, 1
        %s633 = scalar_lea.sflag [#allocation3], %s632
        %s634 = sand.u32 %s47, 1
        %s635 = smul.addr %s634, 128
        %s636 = scalar_lea.vmem [#allocation2], %s635
        %p637 = pneg %p60
        %p638 = pneg %p57
        %s639 = sand.u32 %s39, 1
        %s640 = scalar_lea.sflag [#allocation6], %s639
        %s641 = sand.u32 %s73, 1
        %s642 = smul.addr %s641, 128
        %s643 = scalar_lea.vmem [#allocation5], %s642
        %p644 = pneg %p86
        %p645 = pneg %p83
        %p646 = pneg %p107
        %p647 = pneg %p104
        %p648 = pneg %p128
        %p649 = pneg %p125
        %p650 = pneg %p149
        %p651 = pneg %p146
        %p652 = pneg %p170
        %p653 = pneg %p167
        %p654 = pneg %p191
        %p655 = pneg %p188
        %p656 = pneg %p212
        %p657 = pneg %p209
        %p658 = pneg %p233
        %p659 = pneg %p230
        %p660 = pneg %p254
        %p661 = pneg %p251
        %p662 = pneg %p275
        %p663 = pneg %p272
        %p664 = pneg %p296
        %p665 = pneg %p293
        %p666 = pneg %p317
        %p667 = pneg %p314
        %p668 = pneg %p338
        %p669 = pneg %p335
        %p670 = pneg %p359
        %p671 = pneg %p356
        %p672 = pneg %p380
        %p673 = pneg %p377
        %p674 = pneg %p406
        %p675 = pneg %p403
        %s676 = sand.u32 %s393, 1
        %s677 = scalar_lea.sflag [#allocation4], %s676
        %s678 = sand.u32 %s393, 1
        %s679 = smul.addr %s678, 128
        %s680 = scalar_lea.vmem [#allocation16], %s679
        %s681 = smul.u32 32, %s39
        %s682 = smul.u32 32, %s39
        %s683 = smul.u32 32, %s39
        %v684 = vld [vmem:[%s586] sm:$0xf]
        %v685 = vld [vmem:[%s586 + $0x4] sm:$0xf]
        %v686 = vld [vmem:[%s586 + $0x8] sm:$0xf]
        %v687 = vld [vmem:[%s586 + $0xc] sm:$0xf]
        %v688 = vld [vmem:[%s586 + $0x10] sm:$0xf]
        %v689 = vld [vmem:[%s586 + $0x14] sm:$0xf]
        %v690 = vld [vmem:[%s586 + $0x18] sm:$0xf]
        %v691 = vld [vmem:[%s586 + $0x1c] sm:$0xf]
        %v692 = vld [vmem:[%s586 + $0x20] sm:$0xf]
        %v693 = vld [vmem:[%s586 + $0x24] sm:$0xf]
        %v694 = vld [vmem:[%s586 + $0x28] sm:$0xf]
        %v695 = vld [vmem:[%s586 + $0x2c] sm:$0xf]
        %v696 = vld [vmem:[%s586 + $0x30] sm:$0xf]
        %v697 = vld [vmem:[%s586 + $0x34] sm:$0xf]
        %v698 = vld [vmem:[%s586 + $0x38] sm:$0xf]
        %v699 = vld [vmem:[%s586 + $0x3c] sm:$0xf]
        %v700 = vld [vmem:[%s586 + $0x40] sm:$0xf]
        %v701 = vld [vmem:[%s586 + $0x44] sm:$0xf]
        %v702 = vld [vmem:[%s586 + $0x48] sm:$0xf]
        %v703 = vld [vmem:[%s586 + $0x4c] sm:$0xf]
        %v704 = vld [vmem:[%s586 + $0x50] sm:$0xf]
        %v705 = vld [vmem:[%s586 + $0x54] sm:$0xf]
        %v706 = vld [vmem:[%s586 + $0x58] sm:$0xf]
        %v707 = vld [vmem:[%s586 + $0x5c] sm:$0xf]
        %v708 = vld [vmem:[%s586 + $0x60] sm:$0xf]
        %v709 = vld [vmem:[%s586 + $0x64] sm:$0xf]
        %v710 = vld [vmem:[%s586 + $0x68] sm:$0xf]
        %v711 = vld [vmem:[%s586 + $0x6c] sm:$0xf]
        %v712 = vld [vmem:[%s586 + $0x70] sm:$0xf]
        %v713 = vld [vmem:[%s586 + $0x74] sm:$0xf]
        %v714 = vld [vmem:[%s586 + $0x78] sm:$0xf]
        %v715 = vld [vmem:[%s586 + $0x7c] sm:$0xf]
        %v716 = vld [vmem:[%s596] sm:$0xf]
        %v717 = vld [vmem:[%s596 + $0x4] sm:$0xf]
        %v718 = vld [vmem:[%s596 + $0x8] sm:$0xf]
        %v719 = vld [vmem:[%s596 + $0xc] sm:$0xf]
        %v720 = vld [vmem:[%s596 + $0x10] sm:$0xf]
        %v721 = vld [vmem:[%s596 + $0x14] sm:$0xf]
        %v722 = vld [vmem:[%s596 + $0x18] sm:$0xf]
        %v723 = vld [vmem:[%s596 + $0x1c] sm:$0xf]
        %v724 = vld [vmem:[%s596 + $0x20] sm:$0xf]
        %v725 = vld [vmem:[%s596 + $0x24] sm:$0xf]
        %v726 = vld [vmem:[%s596 + $0x28] sm:$0xf]
        %v727 = vld [vmem:[%s596 + $0x2c] sm:$0xf]
        %v728 = vld [vmem:[%s596 + $0x30] sm:$0xf]
        %v729 = vld [vmem:[%s596 + $0x34] sm:$0xf]
        %v730 = vld [vmem:[%s596 + $0x38] sm:$0xf]
        %v731 = vld [vmem:[%s596 + $0x3c] sm:$0xf]
        %v732 = vld [vmem:[%s596 + $0x40] sm:$0xf]
        %v733 = vld [vmem:[%s596 + $0x44] sm:$0xf]
        %v734 = vld [vmem:[%s596 + $0x48] sm:$0xf]
        %v735 = vld [vmem:[%s596 + $0x4c] sm:$0xf]
        %v736 = vld [vmem:[%s596 + $0x50] sm:$0xf]
        %v737 = vld [vmem:[%s596 + $0x54] sm:$0xf]
        %v738 = vld [vmem:[%s596 + $0x58] sm:$0xf]
        %v739 = vld [vmem:[%s596 + $0x5c] sm:$0xf]
        %v740 = vld [vmem:[%s596 + $0x60] sm:$0xf]
        %v741 = vld [vmem:[%s596 + $0x64] sm:$0xf]
        %v742 = vld [vmem:[%s596 + $0x68] sm:$0xf]
        %v743 = vld [vmem:[%s596 + $0x6c] sm:$0xf]
        %v744 = vld [vmem:[%s596 + $0x70] sm:$0xf]
        %v745 = vld [vmem:[%s596 + $0x74] sm:$0xf]
        %v746 = vld [vmem:[%s596 + $0x78] sm:$0xf]
        %v747 = vld [vmem:[%s596 + $0x7c] sm:$0xf]
        %v748 = vunpack.c.l.bf16 %v684
        %v749 = vunpack.c.l.bf16 %v685
        %v750 = vunpack.c.l.bf16 %v686
        %v751 = vunpack.c.l.bf16 %v687
        %v752 = vunpack.c.l.bf16 %v688
        %v753 = vunpack.c.l.bf16 %v689
        %v754 = vunpack.c.l.bf16 %v690
        %v755 = vunpack.c.l.bf16 %v691
        %v756 = vunpack.c.l.bf16 %v692
        %v757 = vunpack.c.l.bf16 %v693
        %v758 = vunpack.c.l.bf16 %v694
        %v759 = vunpack.c.l.bf16 %v695
        %v760 = vunpack.c.l.bf16 %v696
        %v761 = vunpack.c.l.bf16 %v697
        %v762 = vunpack.c.l.bf16 %v698
        %v763 = vunpack.c.l.bf16 %v699
        %v764 = vunpack.c.l.bf16 %v700
        %v765 = vunpack.c.l.bf16 %v701
        %v766 = vunpack.c.l.bf16 %v702
        %v767 = vunpack.c.l.bf16 %v703
        %v768 = vunpack.c.l.bf16 %v704
        %v769 = vunpack.c.l.bf16 %v705
        %v770 = vunpack.c.l.bf16 %v706
        %v771 = vunpack.c.l.bf16 %v707
        %v772 = vunpack.c.l.bf16 %v708
        %v773 = vunpack.c.l.bf16 %v709
        %v774 = vunpack.c.l.bf16 %v710
        %v775 = vunpack.c.l.bf16 %v711
        %v776 = vunpack.c.l.bf16 %v712
        %v777 = vunpack.c.l.bf16 %v713
        %v778 = vunpack.c.l.bf16 %v714
        %v779 = vunpack.c.l.bf16 %v715
        %v780 = vld [vmem:[#allocation7] sm:$0xf]
        %v781 = vld [vmem:[#allocation7 + $0x4] sm:$0xf]
        %v782 = vld [vmem:[#allocation7 + $0x8] sm:$0xf]
        %v783 = vld [vmem:[#allocation7 + $0xc] sm:$0xf]
        %v784 = vld [vmem:[#allocation7 + $0x10] sm:$0xf]
        %v785 = vld [vmem:[#allocation7 + $0x14] sm:$0xf]
        %v786 = vld [vmem:[#allocation7 + $0x18] sm:$0xf]
        %v787 = vld [vmem:[#allocation7 + $0x1c] sm:$0xf]
        %v788 = vld [vmem:[#allocation7 + $0x20] sm:$0xf]
        %v789 = vld [vmem:[#allocation7 + $0x24] sm:$0xf]
        %v790 = vld [vmem:[#allocation7 + $0x28] sm:$0xf]
        %v791 = vld [vmem:[#allocation7 + $0x2c] sm:$0xf]
        %v792 = vld [vmem:[#allocation7 + $0x30] sm:$0xf]
        %v793 = vld [vmem:[#allocation7 + $0x34] sm:$0xf]
        %v794 = vld [vmem:[#allocation7 + $0x38] sm:$0xf]
        %v795 = vld [vmem:[#allocation7 + $0x3c] sm:$0xf]
        %v796 = vld [vmem:[%s3] sm:$0x1]
        %v798 = vperm.slane %v796, 0
        %v832 = vunpack.c.l.b16 %v684
        %v833 = vunpack.c.l.b16 %v685
        %v834 = vunpack.c.l.b16 %v686
        %v835 = vunpack.c.l.b16 %v687
        %v836 = vunpack.c.l.b16 %v688
        %v837 = vunpack.c.l.b16 %v689
        %v838 = vunpack.c.l.b16 %v690
        %v839 = vunpack.c.l.b16 %v691
        %v840 = vunpack.c.l.b16 %v692
        %v841 = vunpack.c.l.b16 %v693
        %v842 = vunpack.c.l.b16 %v694
        %v843 = vunpack.c.l.b16 %v695
        %v844 = vunpack.c.l.b16 %v696
        %v845 = vunpack.c.l.b16 %v697
        %v846 = vunpack.c.l.b16 %v698
        %v847 = vunpack.c.l.b16 %v699
        %v848 = vunpack.c.l.b16 %v700
        %v849 = vunpack.c.l.b16 %v701
        %v850 = vunpack.c.l.b16 %v702
        %v851 = vunpack.c.l.b16 %v703
        %v852 = vunpack.c.l.b16 %v704
        %v853 = vunpack.c.l.b16 %v705
        %v854 = vunpack.c.l.b16 %v706
        %v855 = vunpack.c.l.b16 %v707
        %v856 = vunpack.c.l.b16 %v708
        %v857 = vunpack.c.l.b16 %v709
        %v858 = vunpack.c.l.b16 %v710
        %v859 = vunpack.c.l.b16 %v711
        %v860 = vunpack.c.l.b16 %v712
        %v861 = vunpack.c.l.b16 %v713
        %v862 = vunpack.c.l.b16 %v714
        %v863 = vunpack.c.l.b16 %v715
        %v864 = vpack.c.b16 %v833, %v832
        %v865 = vpack.c.b16 %v835, %v834
        %v866 = vpack.c.b16 %v837, %v836
        %v867 = vpack.c.b16 %v839, %v838
        %v868 = vpack.c.b16 %v841, %v840
        %v869 = vpack.c.b16 %v843, %v842
        %v870 = vpack.c.b16 %v845, %v844
        %v871 = vpack.c.b16 %v847, %v846
        %v872 = vpack.c.b16 %v849, %v848
        %v873 = vpack.c.b16 %v851, %v850
        %v874 = vpack.c.b16 %v853, %v852
        %v875 = vpack.c.b16 %v855, %v854
        %v876 = vpack.c.b16 %v857, %v856
        %v877 = vpack.c.b16 %v859, %v858
        %v878 = vpack.c.b16 %v861, %v860
        %v879 = vpack.c.b16 %v863, %v862
        %v912 = vunpack.c.l.b16 %v780
        %v913 = vunpack.c.l.b16 %v781
        %v914 = vunpack.c.l.b16 %v782
        %v915 = vunpack.c.l.b16 %v783
        %v916 = vunpack.c.l.b16 %v784
        %v917 = vunpack.c.l.b16 %v785
        %v918 = vunpack.c.l.b16 %v786
        %v919 = vunpack.c.l.b16 %v787
        %v920 = vunpack.c.l.b16 %v788
        %v921 = vunpack.c.l.b16 %v789
        %v922 = vunpack.c.l.b16 %v790
        %v923 = vunpack.c.l.b16 %v791
        %v924 = vunpack.c.l.b16 %v792
        %v925 = vunpack.c.l.b16 %v793
        %v926 = vunpack.c.l.b16 %v794
        %v927 = vunpack.c.l.b16 %v795
        %v928 = vpack.c.b16 %v913, %v912
        %v929 = vpack.c.b16 %v915, %v914
        %v930 = vpack.c.b16 %v917, %v916
        %v931 = vpack.c.b16 %v919, %v918
        %v932 = vpack.c.b16 %v921, %v920
        %v933 = vpack.c.b16 %v923, %v922
        %v934 = vpack.c.b16 %v925, %v924
        %v935 = vpack.c.b16 %v927, %v926
        %944 = vmatpush.bf16.msra.mxu0 %v935
        %945 = vmatpush.bf16.msra.mxu0 %v934
        %946 = vmatpush.bf16.msra.mxu0 %v933
        %947 = vmatpush.bf16.msra.mxu0 %v932
        %948 = vmatpush.bf16.msra.mxu0 %v931
        %949 = vmatpush.bf16.msra.mxu0 %v930
        %950 = vmatpush.bf16.msra.mxu0 %v929
        %951 = vmatpush.bf16.msra.mxu0 %v928
        %952 = vmatmul.bf16.gmra.mxu0 %v864
        %v953 = vpop.f32.mrf.mxu0
        %v954 = vadd.f32 %v798, %v953
        %v955 = vpop.f32.mrf.mxu0
        %v956 = vadd.f32 %v798, %v955
        %957 = vmatmul.bf16.gmra.mxu0 %v865
        %v958 = vpop.f32.mrf.mxu0
        %v959 = vadd.f32 %v798, %v958
        %v960 = vpop.f32.mrf.mxu0
        %v961 = vadd.f32 %v798, %v960
        %962 = vmatmul.bf16.gmra.mxu0 %v866
        %v963 = vpop.f32.mrf.mxu0
        %v964 = vadd.f32 %v798, %v963
        %v965 = vpop.f32.mrf.mxu0
        %v966 = vadd.f32 %v798, %v965
        %967 = vmatmul.bf16.gmra.mxu0 %v867
        %v968 = vpop.f32.mrf.mxu0
        %v969 = vadd.f32 %v798, %v968
        %v970 = vpop.f32.mrf.mxu0
        %v971 = vadd.f32 %v798, %v970
        %972 = vmatmul.bf16.gmra.mxu0 %v868
        %v973 = vpop.f32.mrf.mxu0
        %v974 = vadd.f32 %v798, %v973
        %v975 = vpop.f32.mrf.mxu0
        %v976 = vadd.f32 %v798, %v975
        %977 = vmatmul.bf16.gmra.mxu0 %v869
        %v978 = vpop.f32.mrf.mxu0
        %v979 = vadd.f32 %v798, %v978
        %v980 = vpop.f32.mrf.mxu0
        %v981 = vadd.f32 %v798, %v980
        %982 = vmatmul.bf16.gmra.mxu0 %v870
        %v983 = vpop.f32.mrf.mxu0
        %v984 = vadd.f32 %v798, %v983
        %v985 = vpop.f32.mrf.mxu0
        %v986 = vadd.f32 %v798, %v985
        %987 = vmatmul.bf16.gmra.mxu0 %v871
        %v988 = vpop.f32.mrf.mxu0
        %v989 = vadd.f32 %v798, %v988
        %v990 = vpop.f32.mrf.mxu0
        %v991 = vadd.f32 %v798, %v990
        %992 = vmatmul.bf16.gmra.mxu0 %v872
        %v993 = vpop.f32.mrf.mxu0
        %v994 = vadd.f32 %v798, %v993
        %v995 = vpop.f32.mrf.mxu0
        %v996 = vadd.f32 %v798, %v995
        %997 = vmatmul.bf16.gmra.mxu0 %v873
        %v998 = vpop.f32.mrf.mxu0
        %v999 = vadd.f32 %v798, %v998
        %v1000 = vpop.f32.mrf.mxu0
        %v1001 = vadd.f32 %v798, %v1000
        %1002 = vmatmul.bf16.gmra.mxu0 %v874
        %v1003 = vpop.f32.mrf.mxu0
        %v1004 = vadd.f32 %v798, %v1003
        %v1005 = vpop.f32.mrf.mxu0
        %v1006 = vadd.f32 %v798, %v1005
        %1007 = vmatmul.bf16.gmra.mxu0 %v875
        %v1008 = vpop.f32.mrf.mxu0
        %v1009 = vadd.f32 %v798, %v1008
        %v1010 = vpop.f32.mrf.mxu0
        %v1011 = vadd.f32 %v798, %v1010
        %1012 = vmatmul.bf16.gmra.mxu0 %v876
        %v1013 = vpop.f32.mrf.mxu0
        %v1014 = vadd.f32 %v798, %v1013
        %v1015 = vpop.f32.mrf.mxu0
        %v1016 = vadd.f32 %v798, %v1015
        %1017 = vmatmul.bf16.gmra.mxu0 %v877
        %v1018 = vpop.f32.mrf.mxu0
        %v1019 = vadd.f32 %v798, %v1018
        %v1020 = vpop.f32.mrf.mxu0
        %v1021 = vadd.f32 %v798, %v1020
        %1022 = vmatmul.bf16.gmra.mxu0 %v878
        %v1023 = vpop.f32.mrf.mxu0
        %v1024 = vadd.f32 %v798, %v1023
        %v1025 = vpop.f32.mrf.mxu0
        %v1026 = vadd.f32 %v798, %v1025
        %1027 = vmatmul.bf16.gmra.mxu0 %v879
        %v1028 = vpop.f32.mrf.mxu0
        %v1029 = vadd.f32 %v798, %v1028
        %v1030 = vpop.f32.mrf.mxu0
        %v1031 = vadd.f32 %v798, %v1030
        %1032 = vdwg.mxu0
        %v1033 = vld [vmem:[#allocation8] sm:$0xf]
        %v1034 = vld [vmem:[#allocation8 + $0x4] sm:$0xf]
        %v1035 = vld [vmem:[#allocation8 + $0x8] sm:$0xf]
        %v1036 = vld [vmem:[#allocation8 + $0xc] sm:$0xf]
        %v1037 = vld [vmem:[#allocation8 + $0x10] sm:$0xf]
        %v1038 = vld [vmem:[#allocation8 + $0x14] sm:$0xf]
        %v1039 = vld [vmem:[#allocation8 + $0x18] sm:$0xf]
        %v1040 = vld [vmem:[#allocation8 + $0x1c] sm:$0xf]
        %v1041 = vld [vmem:[#allocation8 + $0x20] sm:$0xf]
        %v1042 = vld [vmem:[#allocation8 + $0x24] sm:$0xf]
        %v1043 = vld [vmem:[#allocation8 + $0x28] sm:$0xf]
        %v1044 = vld [vmem:[#allocation8 + $0x2c] sm:$0xf]
        %v1045 = vld [vmem:[#allocation8 + $0x30] sm:$0xf]
        %v1046 = vld [vmem:[#allocation8 + $0x34] sm:$0xf]
        %v1047 = vld [vmem:[#allocation8 + $0x38] sm:$0xf]
        %v1048 = vld [vmem:[#allocation8 + $0x3c] sm:$0xf]
        %v1049 = vld [vmem:[%s5] sm:$0x1]
        %v1051 = vperm.slane %v1049, 0
        %v1085 = vunpack.c.l.b16 %v716
        %v1086 = vunpack.c.l.b16 %v717
        %v1087 = vunpack.c.l.b16 %v718
        %v1088 = vunpack.c.l.b16 %v719
        %v1089 = vunpack.c.l.b16 %v720
        %v1090 = vunpack.c.l.b16 %v721
        %v1091 = vunpack.c.l.b16 %v722
        %v1092 = vunpack.c.l.b16 %v723
        %v1093 = vunpack.c.l.b16 %v724
        %v1094 = vunpack.c.l.b16 %v725
        %v1095 = vunpack.c.l.b16 %v726
        %v1096 = vunpack.c.l.b16 %v727
        %v1097 = vunpack.c.l.b16 %v728
        %v1098 = vunpack.c.l.b16 %v729
        %v1099 = vunpack.c.l.b16 %v730
        %v1100 = vunpack.c.l.b16 %v731
        %v1101 = vunpack.c.l.b16 %v732
        %v1102 = vunpack.c.l.b16 %v733
        %v1103 = vunpack.c.l.b16 %v734
        %v1104 = vunpack.c.l.b16 %v735
        %v1105 = vunpack.c.l.b16 %v736
        %v1106 = vunpack.c.l.b16 %v737
        %v1107 = vunpack.c.l.b16 %v738
        %v1108 = vunpack.c.l.b16 %v739
        %v1109 = vunpack.c.l.b16 %v740
        %v1110 = vunpack.c.l.b16 %v741
        %v1111 = vunpack.c.l.b16 %v742
        %v1112 = vunpack.c.l.b16 %v743
        %v1113 = vunpack.c.l.b16 %v744
        %v1114 = vunpack.c.l.b16 %v745
        %v1115 = vunpack.c.l.b16 %v746
        %v1116 = vunpack.c.l.b16 %v747
        %v1117 = vpack.c.b16 %v1086, %v1085
        %v1118 = vpack.c.b16 %v1088, %v1087
        %v1119 = vpack.c.b16 %v1090, %v1089
        %v1120 = vpack.c.b16 %v1092, %v1091
        %v1121 = vpack.c.b16 %v1094, %v1093
        %v1122 = vpack.c.b16 %v1096, %v1095
        %v1123 = vpack.c.b16 %v1098, %v1097
        %v1124 = vpack.c.b16 %v1100, %v1099
        %v1125 = vpack.c.b16 %v1102, %v1101
        %v1126 = vpack.c.b16 %v1104, %v1103
        %v1127 = vpack.c.b16 %v1106, %v1105
        %v1128 = vpack.c.b16 %v1108, %v1107
        %v1129 = vpack.c.b16 %v1110, %v1109
        %v1130 = vpack.c.b16 %v1112, %v1111
        %v1131 = vpack.c.b16 %v1114, %v1113
        %v1132 = vpack.c.b16 %v1116, %v1115
        %v1165 = vunpack.c.l.b16 %v1033
        %v1166 = vunpack.c.l.b16 %v1034
        %v1167 = vunpack.c.l.b16 %v1035
        %v1168 = vunpack.c.l.b16 %v1036
        %v1169 = vunpack.c.l.b16 %v1037
        %v1170 = vunpack.c.l.b16 %v1038
        %v1171 = vunpack.c.l.b16 %v1039
        %v1172 = vunpack.c.l.b16 %v1040
        %v1173 = vunpack.c.l.b16 %v1041
        %v1174 = vunpack.c.l.b16 %v1042
        %v1175 = vunpack.c.l.b16 %v1043
        %v1176 = vunpack.c.l.b16 %v1044
        %v1177 = vunpack.c.l.b16 %v1045
        %v1178 = vunpack.c.l.b16 %v1046
        %v1179 = vunpack.c.l.b16 %v1047
        %v1180 = vunpack.c.l.b16 %v1048
        %v1181 = vpack.c.b16 %v1166, %v1165
        %v1182 = vpack.c.b16 %v1168, %v1167
        %v1183 = vpack.c.b16 %v1170, %v1169
        %v1184 = vpack.c.b16 %v1172, %v1171
        %v1185 = vpack.c.b16 %v1174, %v1173
        %v1186 = vpack.c.b16 %v1176, %v1175
        %v1187 = vpack.c.b16 %v1178, %v1177
        %v1188 = vpack.c.b16 %v1180, %v1179
        %1197 = vmatpush.bf16.msra.mxu0 %v1188
        %1198 = vmatpush.bf16.msra.mxu0 %v1187
        %1199 = vmatpush.bf16.msra.mxu0 %v1186
        %1200 = vmatpush.bf16.msra.mxu0 %v1185
        %1201 = vmatpush.bf16.msra.mxu0 %v1184
        %1202 = vmatpush.bf16.msra.mxu0 %v1183
        %1203 = vmatpush.bf16.msra.mxu0 %v1182
        %1204 = vmatpush.bf16.msra.mxu0 %v1181
        %1205 = vmatmul.bf16.gmra.mxu0 %v1117
        %v1206 = vpop.f32.mrf.mxu0
        %v1207 = vadd.f32 %v1051, %v1206
        %v1208 = vpop.f32.mrf.mxu0
        %v1209 = vadd.f32 %v1051, %v1208
        %1210 = vmatmul.bf16.gmra.mxu0 %v1118
        %v1211 = vpop.f32.mrf.mxu0
        %v1212 = vadd.f32 %v1051, %v1211
        %v1213 = vpop.f32.mrf.mxu0
        %v1214 = vadd.f32 %v1051, %v1213
        %1215 = vmatmul.bf16.gmra.mxu0 %v1119
        %v1216 = vpop.f32.mrf.mxu0
        %v1217 = vadd.f32 %v1051, %v1216
        %v1218 = vpop.f32.mrf.mxu0
        %v1219 = vadd.f32 %v1051, %v1218
        %1220 = vmatmul.bf16.gmra.mxu0 %v1120
        %v1221 = vpop.f32.mrf.mxu0
        %v1222 = vadd.f32 %v1051, %v1221
        %v1223 = vpop.f32.mrf.mxu0
        %v1224 = vadd.f32 %v1051, %v1223
        %1225 = vmatmul.bf16.gmra.mxu0 %v1121
        %v1226 = vpop.f32.mrf.mxu0
        %v1227 = vadd.f32 %v1051, %v1226
        %v1228 = vpop.f32.mrf.mxu0
        %v1229 = vadd.f32 %v1051, %v1228
        %1230 = vmatmul.bf16.gmra.mxu0 %v1122
        %v1231 = vpop.f32.mrf.mxu0
        %v1232 = vadd.f32 %v1051, %v1231
        %v1233 = vpop.f32.mrf.mxu0
        %v1234 = vadd.f32 %v1051, %v1233
        %1235 = vmatmul.bf16.gmra.mxu0 %v1123
        %v1236 = vpop.f32.mrf.mxu0
        %v1237 = vadd.f32 %v1051, %v1236
        %v1238 = vpop.f32.mrf.mxu0
        %v1239 = vadd.f32 %v1051, %v1238
        %1240 = vmatmul.bf16.gmra.mxu0 %v1124
        %v1241 = vpop.f32.mrf.mxu0
        %v1242 = vadd.f32 %v1051, %v1241
        %v1243 = vpop.f32.mrf.mxu0
        %v1244 = vadd.f32 %v1051, %v1243
        %1245 = vmatmul.bf16.gmra.mxu0 %v1125
        %v1246 = vpop.f32.mrf.mxu0
        %v1247 = vadd.f32 %v1051, %v1246
        %v1248 = vpop.f32.mrf.mxu0
        %v1249 = vadd.f32 %v1051, %v1248
        %1250 = vmatmul.bf16.gmra.mxu0 %v1126
        %v1251 = vpop.f32.mrf.mxu0
        %v1252 = vadd.f32 %v1051, %v1251
        %v1253 = vpop.f32.mrf.mxu0
        %v1254 = vadd.f32 %v1051, %v1253
        %1255 = vmatmul.bf16.gmra.mxu0 %v1127
        %v1256 = vpop.f32.mrf.mxu0
        %v1257 = vadd.f32 %v1051, %v1256
        %v1258 = vpop.f32.mrf.mxu0
        %v1259 = vadd.f32 %v1051, %v1258
        %1260 = vmatmul.bf16.gmra.mxu0 %v1128
        %v1261 = vpop.f32.mrf.mxu0
        %v1262 = vadd.f32 %v1051, %v1261
        %v1263 = vpop.f32.mrf.mxu0
        %v1264 = vadd.f32 %v1051, %v1263
        %1265 = vmatmul.bf16.gmra.mxu0 %v1129
        %v1266 = vpop.f32.mrf.mxu0
        %v1267 = vadd.f32 %v1051, %v1266
        %v1268 = vpop.f32.mrf.mxu0
        %v1269 = vadd.f32 %v1051, %v1268
        %1270 = vmatmul.bf16.gmra.mxu0 %v1130
        %v1271 = vpop.f32.mrf.mxu0
        %v1272 = vadd.f32 %v1051, %v1271
        %v1273 = vpop.f32.mrf.mxu0
        %v1274 = vadd.f32 %v1051, %v1273
        %1275 = vmatmul.bf16.gmra.mxu0 %v1131
        %v1276 = vpop.f32.mrf.mxu0
        %v1277 = vadd.f32 %v1051, %v1276
        %v1278 = vpop.f32.mrf.mxu0
        %v1279 = vadd.f32 %v1051, %v1278
        %1280 = vmatmul.bf16.gmra.mxu0 %v1132
        %v1281 = vpop.f32.mrf.mxu0
        %v1282 = vadd.f32 %v1051, %v1281
        %v1283 = vpop.f32.mrf.mxu0
        %v1284 = vadd.f32 %v1051, %v1283
        %1285 = vdwg.mxu0
        %v1286 = vpack.c.bf16 %v954, %v954
        %v1287 = vpack.c.bf16 %v956, %v956
        %v1288 = vpack.c.bf16 %v959, %v959
        %v1289 = vpack.c.bf16 %v961, %v961
        %v1290 = vpack.c.bf16 %v964, %v964
        %v1291 = vpack.c.bf16 %v966, %v966
        %v1292 = vpack.c.bf16 %v969, %v969
        %v1293 = vpack.c.bf16 %v971, %v971
        %v1294 = vpack.c.bf16 %v974, %v974
        %v1295 = vpack.c.bf16 %v976, %v976
        %v1296 = vpack.c.bf16 %v979, %v979
        %v1297 = vpack.c.bf16 %v981, %v981
        %v1298 = vpack.c.bf16 %v984, %v984
        %v1299 = vpack.c.bf16 %v986, %v986
        %v1300 = vpack.c.bf16 %v989, %v989
        %v1301 = vpack.c.bf16 %v991, %v991
        %v1302 = vpack.c.bf16 %v994, %v994
        %v1303 = vpack.c.bf16 %v996, %v996
        %v1304 = vpack.c.bf16 %v999, %v999
        %v1305 = vpack.c.bf16 %v1001, %v1001
        %v1306 = vpack.c.bf16 %v1004, %v1004
        %v1307 = vpack.c.bf16 %v1006, %v1006
        %v1308 = vpack.c.bf16 %v1009, %v1009
        %v1309 = vpack.c.bf16 %v1011, %v1011
        %v1310 = vpack.c.bf16 %v1014, %v1014
        %v1311 = vpack.c.bf16 %v1016, %v1016
        %v1312 = vpack.c.bf16 %v1019, %v1019
        %v1313 = vpack.c.bf16 %v1021, %v1021
        %v1314 = vpack.c.bf16 %v1024, %v1024
        %v1315 = vpack.c.bf16 %v1026, %v1026
        %v1316 = vpack.c.bf16 %v1029, %v1029
        %v1317 = vpack.c.bf16 %v1031, %v1031
        %v1318 = vunpack.c.l.bf16 %v1286
        %v1319 = vunpack.c.l.bf16 %v1287
        %v1320 = vunpack.c.l.bf16 %v1288
        %v1321 = vunpack.c.l.bf16 %v1289
        %v1322 = vunpack.c.l.bf16 %v1290
        %v1323 = vunpack.c.l.bf16 %v1291
        %v1324 = vunpack.c.l.bf16 %v1292
        %v1325 = vunpack.c.l.bf16 %v1293
        %v1326 = vunpack.c.l.bf16 %v1294
        %v1327 = vunpack.c.l.bf16 %v1295
        %v1328 = vunpack.c.l.bf16 %v1296
        %v1329 = vunpack.c.l.bf16 %v1297
        %v1330 = vunpack.c.l.bf16 %v1298
        %v1331 = vunpack.c.l.bf16 %v1299
        %v1332 = vunpack.c.l.bf16 %v1300
        %v1333 = vunpack.c.l.bf16 %v1301
        %v1334 = vunpack.c.l.bf16 %v1302
        %v1335 = vunpack.c.l.bf16 %v1303
        %v1336 = vunpack.c.l.bf16 %v1304
        %v1337 = vunpack.c.l.bf16 %v1305
        %v1338 = vunpack.c.l.bf16 %v1306
        %v1339 = vunpack.c.l.bf16 %v1307
        %v1340 = vunpack.c.l.bf16 %v1308
        %v1341 = vunpack.c.l.bf16 %v1309
        %v1342 = vunpack.c.l.bf16 %v1310
        %v1343 = vunpack.c.l.bf16 %v1311
        %v1344 = vunpack.c.l.bf16 %v1312
        %v1345 = vunpack.c.l.bf16 %v1313
        %v1346 = vunpack.c.l.bf16 %v1314
        %v1347 = vunpack.c.l.bf16 %v1315
        %v1348 = vunpack.c.l.bf16 %v1316
        %v1349 = vunpack.c.l.bf16 %v1317
        %vm1350 = vcmp.gt.f32.partialorder %v1318, 0.0
        %vm1351 = vcmp.gt.f32.partialorder %v1319, 0.0
        %vm1352 = vcmp.gt.f32.partialorder %v1320, 0.0
        %vm1353 = vcmp.gt.f32.partialorder %v1321, 0.0
        %vm1354 = vcmp.gt.f32.partialorder %v1322, 0.0
        %vm1355 = vcmp.gt.f32.partialorder %v1323, 0.0
        %vm1356 = vcmp.gt.f32.partialorder %v1324, 0.0
        %vm1357 = vcmp.gt.f32.partialorder %v1325, 0.0
        %vm1358 = vcmp.gt.f32.partialorder %v1326, 0.0
        %vm1359 = vcmp.gt.f32.partialorder %v1327, 0.0
        %vm1360 = vcmp.gt.f32.partialorder %v1328, 0.0
        %vm1361 = vcmp.gt.f32.partialorder %v1329, 0.0
        %vm1362 = vcmp.gt.f32.partialorder %v1330, 0.0
        %vm1363 = vcmp.gt.f32.partialorder %v1331, 0.0
        %vm1364 = vcmp.gt.f32.partialorder %v1332, 0.0
        %vm1365 = vcmp.gt.f32.partialorder %v1333, 0.0
        %vm1366 = vcmp.gt.f32.partialorder %v1334, 0.0
        %vm1367 = vcmp.gt.f32.partialorder %v1335, 0.0
        %vm1368 = vcmp.gt.f32.partialorder %v1336, 0.0
        %vm1369 = vcmp.gt.f32.partialorder %v1337, 0.0
        %vm1370 = vcmp.gt.f32.partialorder %v1338, 0.0
        %vm1371 = vcmp.gt.f32.partialorder %v1339, 0.0
        %vm1372 = vcmp.gt.f32.partialorder %v1340, 0.0
        %vm1373 = vcmp.gt.f32.partialorder %v1341, 0.0
        %vm1374 = vcmp.gt.f32.partialorder %v1342, 0.0
        %vm1375 = vcmp.gt.f32.partialorder %v1343, 0.0
        %vm1376 = vcmp.gt.f32.partialorder %v1344, 0.0
        %vm1377 = vcmp.gt.f32.partialorder %v1345, 0.0
        %vm1378 = vcmp.gt.f32.partialorder %v1346, 0.0
        %vm1379 = vcmp.gt.f32.partialorder %v1347, 0.0
        %vm1380 = vcmp.gt.f32.partialorder %v1348, 0.0
        %vm1381 = vcmp.gt.f32.partialorder %v1349, 0.0
        %v1382 = vadd.f32 %v1318, 1.0
        %v1383 = vadd.f32 %v1319, 1.0
        %v1384 = vadd.f32 %v1320, 1.0
        %v1385 = vadd.f32 %v1321, 1.0
        %v1386 = vadd.f32 %v1322, 1.0
        %v1387 = vadd.f32 %v1323, 1.0
        %v1388 = vadd.f32 %v1324, 1.0
        %v1389 = vadd.f32 %v1325, 1.0
        %v1390 = vadd.f32 %v1326, 1.0
        %v1391 = vadd.f32 %v1327, 1.0
        %v1392 = vadd.f32 %v1328, 1.0
        %v1393 = vadd.f32 %v1329, 1.0
        %v1394 = vadd.f32 %v1330, 1.0
        %v1395 = vadd.f32 %v1331, 1.0
        %v1396 = vadd.f32 %v1332, 1.0
        %v1397 = vadd.f32 %v1333, 1.0
        %v1398 = vadd.f32 %v1334, 1.0
        %v1399 = vadd.f32 %v1335, 1.0
        %v1400 = vadd.f32 %v1336, 1.0
        %v1401 = vadd.f32 %v1337, 1.0
        %v1402 = vadd.f32 %v1338, 1.0
        %v1403 = vadd.f32 %v1339, 1.0
        %v1404 = vadd.f32 %v1340, 1.0
        %v1405 = vadd.f32 %v1341, 1.0
        %v1406 = vadd.f32 %v1342, 1.0
        %v1407 = vadd.f32 %v1343, 1.0
        %v1408 = vadd.f32 %v1344, 1.0
        %v1409 = vadd.f32 %v1345, 1.0
        %v1410 = vadd.f32 %v1346, 1.0
        %v1411 = vadd.f32 %v1347, 1.0
        %v1412 = vadd.f32 %v1348, 1.0
        %v1413 = vadd.f32 %v1349, 1.0
        %v1414 = vpack.c.bf16 %v1382, %v1382
        %v1415 = vpack.c.bf16 %v1383, %v1383
        %v1416 = vpack.c.bf16 %v1384, %v1384
        %v1417 = vpack.c.bf16 %v1385, %v1385
        %v1418 = vpack.c.bf16 %v1386, %v1386
        %v1419 = vpack.c.bf16 %v1387, %v1387
        %v1420 = vpack.c.bf16 %v1388, %v1388
        %v1421 = vpack.c.bf16 %v1389, %v1389
        %v1422 = vpack.c.bf16 %v1390, %v1390
        %v1423 = vpack.c.bf16 %v1391, %v1391
        %v1424 = vpack.c.bf16 %v1392, %v1392
        %v1425 = vpack.c.bf16 %v1393, %v1393
        %v1426 = vpack.c.bf16 %v1394, %v1394
        %v1427 = vpack.c.bf16 %v1395, %v1395
        %v1428 = vpack.c.bf16 %v1396, %v1396
        %v1429 = vpack.c.bf16 %v1397, %v1397
        %v1430 = vpack.c.bf16 %v1398, %v1398
        %v1431 = vpack.c.bf16 %v1399, %v1399
        %v1432 = vpack.c.bf16 %v1400, %v1400
        %v1433 = vpack.c.bf16 %v1401, %v1401
        %v1434 = vpack.c.bf16 %v1402, %v1402
        %v1435 = vpack.c.bf16 %v1403, %v1403
        %v1436 = vpack.c.bf16 %v1404, %v1404
        %v1437 = vpack.c.bf16 %v1405, %v1405
        %v1438 = vpack.c.bf16 %v1406, %v1406
        %v1439 = vpack.c.bf16 %v1407, %v1407
        %v1440 = vpack.c.bf16 %v1408, %v1408
        %v1441 = vpack.c.bf16 %v1409, %v1409
        %v1442 = vpack.c.bf16 %v1410, %v1410
        %v1443 = vpack.c.bf16 %v1411, %v1411
        %v1444 = vpack.c.bf16 %v1412, %v1412
        %v1445 = vpack.c.bf16 %v1413, %v1413
        %v1446 = vmin.f32 %v1318, 0.0
        %v1447 = vmin.f32 %v1319, 0.0
        %v1448 = vmin.f32 %v1320, 0.0
        %v1449 = vmin.f32 %v1321, 0.0
        %v1450 = vmin.f32 %v1322, 0.0
        %v1451 = vmin.f32 %v1323, 0.0
        %v1452 = vmin.f32 %v1324, 0.0
        %v1453 = vmin.f32 %v1325, 0.0
        %v1454 = vmin.f32 %v1326, 0.0
        %v1455 = vmin.f32 %v1327, 0.0
        %v1456 = vmin.f32 %v1328, 0.0
        %v1457 = vmin.f32 %v1329, 0.0
        %v1458 = vmin.f32 %v1330, 0.0
        %v1459 = vmin.f32 %v1331, 0.0
        %v1460 = vmin.f32 %v1332, 0.0
        %v1461 = vmin.f32 %v1333, 0.0
        %v1462 = vmin.f32 %v1334, 0.0
        %v1463 = vmin.f32 %v1335, 0.0
        %v1464 = vmin.f32 %v1336, 0.0
        %v1465 = vmin.f32 %v1337, 0.0
        %v1466 = vmin.f32 %v1338, 0.0
        %v1467 = vmin.f32 %v1339, 0.0
        %v1468 = vmin.f32 %v1340, 0.0
        %v1469 = vmin.f32 %v1341, 0.0
        %v1470 = vmin.f32 %v1342, 0.0
        %v1471 = vmin.f32 %v1343, 0.0
        %v1472 = vmin.f32 %v1344, 0.0
        %v1473 = vmin.f32 %v1345, 0.0
        %v1474 = vmin.f32 %v1346, 0.0
        %v1475 = vmin.f32 %v1347, 0.0
        %v1476 = vmin.f32 %v1348, 0.0
        %v1477 = vmin.f32 %v1349, 0.0
        %v1478 = vpack.c.bf16 %v1446, %v1446
        %v1479 = vpack.c.bf16 %v1447, %v1447
        %v1480 = vpack.c.bf16 %v1448, %v1448
        %v1481 = vpack.c.bf16 %v1449, %v1449
        %v1482 = vpack.c.bf16 %v1450, %v1450
        %v1483 = vpack.c.bf16 %v1451, %v1451
        %v1484 = vpack.c.bf16 %v1452, %v1452
        %v1485 = vpack.c.bf16 %v1453, %v1453
        %v1486 = vpack.c.bf16 %v1454, %v1454
        %v1487 = vpack.c.bf16 %v1455, %v1455
        %v1488 = vpack.c.bf16 %v1456, %v1456
        %v1489 = vpack.c.bf16 %v1457, %v1457
        %v1490 = vpack.c.bf16 %v1458, %v1458
        %v1491 = vpack.c.bf16 %v1459, %v1459
        %v1492 = vpack.c.bf16 %v1460, %v1460
        %v1493 = vpack.c.bf16 %v1461, %v1461
        %v1494 = vpack.c.bf16 %v1462, %v1462
        %v1495 = vpack.c.bf16 %v1463, %v1463
        %v1496 = vpack.c.bf16 %v1464, %v1464
        %v1497 = vpack.c.bf16 %v1465, %v1465
        %v1498 = vpack.c.bf16 %v1466, %v1466
        %v1499 = vpack.c.bf16 %v1467, %v1467
        %v1500 = vpack.c.bf16 %v1468, %v1468
        %v1501 = vpack.c.bf16 %v1469, %v1469
        %v1502 = vpack.c.bf16 %v1470, %v1470
        %v1503 = vpack.c.bf16 %v1471, %v1471
        %v1504 = vpack.c.bf16 %v1472, %v1472
        %v1505 = vpack.c.bf16 %v1473, %v1473
        %v1506 = vpack.c.bf16 %v1474, %v1474
        %v1507 = vpack.c.bf16 %v1475, %v1475
        %v1508 = vpack.c.bf16 %v1476, %v1476
        %v1509 = vpack.c.bf16 %v1477, %v1477
        %v1510 = vunpack.c.l.bf16 %v1478
        %v1511 = vunpack.c.l.bf16 %v1479
        %v1512 = vunpack.c.l.bf16 %v1480
        %v1513 = vunpack.c.l.bf16 %v1481
        %v1514 = vunpack.c.l.bf16 %v1482
        %v1515 = vunpack.c.l.bf16 %v1483
        %v1516 = vunpack.c.l.bf16 %v1484
        %v1517 = vunpack.c.l.bf16 %v1485
        %v1518 = vunpack.c.l.bf16 %v1486
        %v1519 = vunpack.c.l.bf16 %v1487
        %v1520 = vunpack.c.l.bf16 %v1488
        %v1521 = vunpack.c.l.bf16 %v1489
        %v1522 = vunpack.c.l.bf16 %v1490
        %v1523 = vunpack.c.l.bf16 %v1491
        %v1524 = vunpack.c.l.bf16 %v1492
        %v1525 = vunpack.c.l.bf16 %v1493
        %v1526 = vunpack.c.l.bf16 %v1494
        %v1527 = vunpack.c.l.bf16 %v1495
        %v1528 = vunpack.c.l.bf16 %v1496
        %v1529 = vunpack.c.l.bf16 %v1497
        %v1530 = vunpack.c.l.bf16 %v1498
        %v1531 = vunpack.c.l.bf16 %v1499
        %v1532 = vunpack.c.l.bf16 %v1500
        %v1533 = vunpack.c.l.bf16 %v1501
        %v1534 = vunpack.c.l.bf16 %v1502
        %v1535 = vunpack.c.l.bf16 %v1503
        %v1536 = vunpack.c.l.bf16 %v1504
        %v1537 = vunpack.c.l.bf16 %v1505
        %v1538 = vunpack.c.l.bf16 %v1506
        %v1539 = vunpack.c.l.bf16 %v1507
        %v1540 = vunpack.c.l.bf16 %v1508
        %v1541 = vunpack.c.l.bf16 %v1509
        %v1542 = vmul.f32 %v1510, 1.442695
        %v1543 = vpow.pop %v1542
        %v1544 = vmul.f32 %v1511, 1.442695
        %v1545 = vpow.pop %v1544
        %v1546 = vmul.f32 %v1512, 1.442695
        %v1547 = vpow.pop %v1546
        %v1548 = vmul.f32 %v1513, 1.442695
        %v1549 = vpow.pop %v1548
        %v1550 = vmul.f32 %v1514, 1.442695
        %v1551 = vpow.pop %v1550
        %v1552 = vmul.f32 %v1515, 1.442695
        %v1553 = vpow.pop %v1552
        %v1554 = vmul.f32 %v1516, 1.442695
        %v1555 = vpow.pop %v1554
        %v1556 = vmul.f32 %v1517, 1.442695
        %v1557 = vpow.pop %v1556
        %v1558 = vmul.f32 %v1518, 1.442695
        %v1559 = vpow.pop %v1558
        %v1560 = vmul.f32 %v1519, 1.442695
        %v1561 = vpow.pop %v1560
        %v1562 = vmul.f32 %v1520, 1.442695
        %v1563 = vpow.pop %v1562
        %v1564 = vmul.f32 %v1521, 1.442695
        %v1565 = vpow.pop %v1564
        %v1566 = vmul.f32 %v1522, 1.442695
        %v1567 = vpow.pop %v1566
        %v1568 = vmul.f32 %v1523, 1.442695
        %v1569 = vpow.pop %v1568
        %v1570 = vmul.f32 %v1524, 1.442695
        %v1571 = vpow.pop %v1570
        %v1572 = vmul.f32 %v1525, 1.442695
        %v1573 = vpow.pop %v1572
        %v1574 = vmul.f32 %v1526, 1.442695
        %v1575 = vpow.pop %v1574
        %v1576 = vmul.f32 %v1527, 1.442695
        %v1577 = vpow.pop %v1576
        %v1578 = vmul.f32 %v1528, 1.442695
        %v1579 = vpow.pop %v1578
        %v1580 = vmul.f32 %v1529, 1.442695
        %v1581 = vpow.pop %v1580
        %v1582 = vmul.f32 %v1530, 1.442695
        %v1583 = vpow.pop %v1582
        %v1584 = vmul.f32 %v1531, 1.442695
        %v1585 = vpow.pop %v1584
        %v1586 = vmul.f32 %v1532, 1.442695
        %v1587 = vpow.pop %v1586
        %v1588 = vmul.f32 %v1533, 1.442695
        %v1589 = vpow.pop %v1588
        %v1590 = vmul.f32 %v1534, 1.442695
        %v1591 = vpow.pop %v1590
        %v1592 = vmul.f32 %v1535, 1.442695
        %v1593 = vpow.pop %v1592
        %v1594 = vmul.f32 %v1536, 1.442695
        %v1595 = vpow.pop %v1594
        %v1596 = vmul.f32 %v1537, 1.442695
        %v1597 = vpow.pop %v1596
        %v1598 = vmul.f32 %v1538, 1.442695
        %v1599 = vpow.pop %v1598
        %v1600 = vmul.f32 %v1539, 1.442695
        %v1601 = vpow.pop %v1600
        %v1602 = vmul.f32 %v1540, 1.442695
        %v1603 = vpow.pop %v1602
        %v1604 = vmul.f32 %v1541, 1.442695
        %v1605 = vpow.pop %v1604
        %v1606 = vpack.c.bf16 %v1543, %v1543
        %v1607 = vpack.c.bf16 %v1545, %v1545
        %v1608 = vpack.c.bf16 %v1547, %v1547
        %v1609 = vpack.c.bf16 %v1549, %v1549
        %v1610 = vpack.c.bf16 %v1551, %v1551
        %v1611 = vpack.c.bf16 %v1553, %v1553
        %v1612 = vpack.c.bf16 %v1555, %v1555
        %v1613 = vpack.c.bf16 %v1557, %v1557
        %v1614 = vpack.c.bf16 %v1559, %v1559
        %v1615 = vpack.c.bf16 %v1561, %v1561
        %v1616 = vpack.c.bf16 %v1563, %v1563
        %v1617 = vpack.c.bf16 %v1565, %v1565
        %v1618 = vpack.c.bf16 %v1567, %v1567
        %v1619 = vpack.c.bf16 %v1569, %v1569
        %v1620 = vpack.c.bf16 %v1571, %v1571
        %v1621 = vpack.c.bf16 %v1573, %v1573
        %v1622 = vpack.c.bf16 %v1575, %v1575
        %v1623 = vpack.c.bf16 %v1577, %v1577
        %v1624 = vpack.c.bf16 %v1579, %v1579
        %v1625 = vpack.c.bf16 %v1581, %v1581
        %v1626 = vpack.c.bf16 %v1583, %v1583
        %v1627 = vpack.c.bf16 %v1585, %v1585
        %v1628 = vpack.c.bf16 %v1587, %v1587
        %v1629 = vpack.c.bf16 %v1589, %v1589
        %v1630 = vpack.c.bf16 %v1591, %v1591
        %v1631 = vpack.c.bf16 %v1593, %v1593
        %v1632 = vpack.c.bf16 %v1595, %v1595
        %v1633 = vpack.c.bf16 %v1597, %v1597
        %v1634 = vpack.c.bf16 %v1599, %v1599
        %v1635 = vpack.c.bf16 %v1601, %v1601
        %v1636 = vpack.c.bf16 %v1603, %v1603
        %v1637 = vpack.c.bf16 %v1605, %v1605
        %vm1638 = vmpackc.low %vm1350, %vm1350
        %vm1639 = vmpackc.low %vm1351, %vm1351
        %vm1640 = vmpackc.low %vm1352, %vm1352
        %vm1641 = vmpackc.low %vm1353, %vm1353
        %vm1642 = vmpackc.low %vm1354, %vm1354
        %vm1643 = vmpackc.low %vm1355, %vm1355
        %vm1644 = vmpackc.low %vm1356, %vm1356
        %vm1645 = vmpackc.low %vm1357, %vm1357
        %vm1646 = vmpackc.low %vm1358, %vm1358
        %vm1647 = vmpackc.low %vm1359, %vm1359
        %vm1648 = vmpackc.low %vm1360, %vm1360
        %vm1649 = vmpackc.low %vm1361, %vm1361
        %vm1650 = vmpackc.low %vm1362, %vm1362
        %vm1651 = vmpackc.low %vm1363, %vm1363
        %vm1652 = vmpackc.low %vm1364, %vm1364
        %vm1653 = vmpackc.low %vm1365, %vm1365
        %vm1654 = vmpackc.low %vm1366, %vm1366
        %vm1655 = vmpackc.low %vm1367, %vm1367
        %vm1656 = vmpackc.low %vm1368, %vm1368
        %vm1657 = vmpackc.low %vm1369, %vm1369
        %vm1658 = vmpackc.low %vm1370, %vm1370
        %vm1659 = vmpackc.low %vm1371, %vm1371
        %vm1660 = vmpackc.low %vm1372, %vm1372
        %vm1661 = vmpackc.low %vm1373, %vm1373
        %vm1662 = vmpackc.low %vm1374, %vm1374
        %vm1663 = vmpackc.low %vm1375, %vm1375
        %vm1664 = vmpackc.low %vm1376, %vm1376
        %vm1665 = vmpackc.low %vm1377, %vm1377
        %vm1666 = vmpackc.low %vm1378, %vm1378
        %vm1667 = vmpackc.low %vm1379, %vm1379
        %vm1668 = vmpackc.low %vm1380, %vm1380
        %vm1669 = vmpackc.low %vm1381, %vm1381
        %v1670 = vsel %vm1638, %v1414, %v1606
        %v1671 = vsel %vm1639, %v1415, %v1607
        %v1672 = vsel %vm1640, %v1416, %v1608
        %v1673 = vsel %vm1641, %v1417, %v1609
        %v1674 = vsel %vm1642, %v1418, %v1610
        %v1675 = vsel %vm1643, %v1419, %v1611
        %v1676 = vsel %vm1644, %v1420, %v1612
        %v1677 = vsel %vm1645, %v1421, %v1613
        %v1678 = vsel %vm1646, %v1422, %v1614
        %v1679 = vsel %vm1647, %v1423, %v1615
        %v1680 = vsel %vm1648, %v1424, %v1616
        %v1681 = vsel %vm1649, %v1425, %v1617
        %v1682 = vsel %vm1650, %v1426, %v1618
        %v1683 = vsel %vm1651, %v1427, %v1619
        %v1684 = vsel %vm1652, %v1428, %v1620
        %v1685 = vsel %vm1653, %v1429, %v1621
        %v1686 = vsel %vm1654, %v1430, %v1622
        %v1687 = vsel %vm1655, %v1431, %v1623
        %v1688 = vsel %vm1656, %v1432, %v1624
        %v1689 = vsel %vm1657, %v1433, %v1625
        %v1690 = vsel %vm1658, %v1434, %v1626
        %v1691 = vsel %vm1659, %v1435, %v1627
        %v1692 = vsel %vm1660, %v1436, %v1628
        %v1693 = vsel %vm1661, %v1437, %v1629
        %v1694 = vsel %vm1662, %v1438, %v1630
        %v1695 = vsel %vm1663, %v1439, %v1631
        %v1696 = vsel %vm1664, %v1440, %v1632
        %v1697 = vsel %vm1665, %v1441, %v1633
        %v1698 = vsel %vm1666, %v1442, %v1634
        %v1699 = vsel %vm1667, %v1443, %v1635
        %v1700 = vsel %vm1668, %v1444, %v1636
        %v1701 = vsel %vm1669, %v1445, %v1637
        %v1702 = vpack.c.bf16 %v1207, %v1207
        %v1703 = vpack.c.bf16 %v1209, %v1209
        %v1704 = vpack.c.bf16 %v1212, %v1212
        %v1705 = vpack.c.bf16 %v1214, %v1214
        %v1706 = vpack.c.bf16 %v1217, %v1217
        %v1707 = vpack.c.bf16 %v1219, %v1219
        %v1708 = vpack.c.bf16 %v1222, %v1222
        %v1709 = vpack.c.bf16 %v1224, %v1224
        %v1710 = vpack.c.bf16 %v1227, %v1227
        %v1711 = vpack.c.bf16 %v1229, %v1229
        %v1712 = vpack.c.bf16 %v1232, %v1232
        %v1713 = vpack.c.bf16 %v1234, %v1234
        %v1714 = vpack.c.bf16 %v1237, %v1237
        %v1715 = vpack.c.bf16 %v1239, %v1239
        %v1716 = vpack.c.bf16 %v1242, %v1242
        %v1717 = vpack.c.bf16 %v1244, %v1244
        %v1718 = vpack.c.bf16 %v1247, %v1247
        %v1719 = vpack.c.bf16 %v1249, %v1249
        %v1720 = vpack.c.bf16 %v1252, %v1252
        %v1721 = vpack.c.bf16 %v1254, %v1254
        %v1722 = vpack.c.bf16 %v1257, %v1257
        %v1723 = vpack.c.bf16 %v1259, %v1259
        %v1724 = vpack.c.bf16 %v1262, %v1262
        %v1725 = vpack.c.bf16 %v1264, %v1264
        %v1726 = vpack.c.bf16 %v1267, %v1267
        %v1727 = vpack.c.bf16 %v1269, %v1269
        %v1728 = vpack.c.bf16 %v1272, %v1272
        %v1729 = vpack.c.bf16 %v1274, %v1274
        %v1730 = vpack.c.bf16 %v1277, %v1277
        %v1731 = vpack.c.bf16 %v1279, %v1279
        %v1732 = vpack.c.bf16 %v1282, %v1282
        %v1733 = vpack.c.bf16 %v1284, %v1284
        %v1734 = vunpack.c.l.bf16 %v1670
        %v1735 = vunpack.c.l.bf16 %v1671
        %v1736 = vunpack.c.l.bf16 %v1672
        %v1737 = vunpack.c.l.bf16 %v1673
        %v1738 = vunpack.c.l.bf16 %v1674
        %v1739 = vunpack.c.l.bf16 %v1675
        %v1740 = vunpack.c.l.bf16 %v1676
        %v1741 = vunpack.c.l.bf16 %v1677
        %v1742 = vunpack.c.l.bf16 %v1678
        %v1743 = vunpack.c.l.bf16 %v1679
        %v1744 = vunpack.c.l.bf16 %v1680
        %v1745 = vunpack.c.l.bf16 %v1681
        %v1746 = vunpack.c.l.bf16 %v1682
        %v1747 = vunpack.c.l.bf16 %v1683
        %v1748 = vunpack.c.l.bf16 %v1684
        %v1749 = vunpack.c.l.bf16 %v1685
        %v1750 = vunpack.c.l.bf16 %v1686
        %v1751 = vunpack.c.l.bf16 %v1687
        %v1752 = vunpack.c.l.bf16 %v1688
        %v1753 = vunpack.c.l.bf16 %v1689
        %v1754 = vunpack.c.l.bf16 %v1690
        %v1755 = vunpack.c.l.bf16 %v1691
        %v1756 = vunpack.c.l.bf16 %v1692
        %v1757 = vunpack.c.l.bf16 %v1693
        %v1758 = vunpack.c.l.bf16 %v1694
        %v1759 = vunpack.c.l.bf16 %v1695
        %v1760 = vunpack.c.l.bf16 %v1696
        %v1761 = vunpack.c.l.bf16 %v1697
        %v1762 = vunpack.c.l.bf16 %v1698
        %v1763 = vunpack.c.l.bf16 %v1699
        %v1764 = vunpack.c.l.bf16 %v1700
        %v1765 = vunpack.c.l.bf16 %v1701
        %v1766 = vunpack.c.l.bf16 %v1702
        %v1767 = vunpack.c.l.bf16 %v1703
        %v1768 = vunpack.c.l.bf16 %v1704
        %v1769 = vunpack.c.l.bf16 %v1705
        %v1770 = vunpack.c.l.bf16 %v1706
        %v1771 = vunpack.c.l.bf16 %v1707
        %v1772 = vunpack.c.l.bf16 %v1708
        %v1773 = vunpack.c.l.bf16 %v1709
        %v1774 = vunpack.c.l.bf16 %v1710
        %v1775 = vunpack.c.l.bf16 %v1711
        %v1776 = vunpack.c.l.bf16 %v1712
        %v1777 = vunpack.c.l.bf16 %v1713
        %v1778 = vunpack.c.l.bf16 %v1714
        %v1779 = vunpack.c.l.bf16 %v1715
        %v1780 = vunpack.c.l.bf16 %v1716
        %v1781 = vunpack.c.l.bf16 %v1717
        %v1782 = vunpack.c.l.bf16 %v1718
        %v1783 = vunpack.c.l.bf16 %v1719
        %v1784 = vunpack.c.l.bf16 %v1720
        %v1785 = vunpack.c.l.bf16 %v1721
        %v1786 = vunpack.c.l.bf16 %v1722
        %v1787 = vunpack.c.l.bf16 %v1723
        %v1788 = vunpack.c.l.bf16 %v1724
        %v1789 = vunpack.c.l.bf16 %v1725
        %v1790 = vunpack.c.l.bf16 %v1726
        %v1791 = vunpack.c.l.bf16 %v1727
        %v1792 = vunpack.c.l.bf16 %v1728
        %v1793 = vunpack.c.l.bf16 %v1729
        %v1794 = vunpack.c.l.bf16 %v1730
        %v1795 = vunpack.c.l.bf16 %v1731
        %v1796 = vunpack.c.l.bf16 %v1732
        %v1797 = vunpack.c.l.bf16 %v1733
        %v1798 = vmul.f32 %v1734, %v1766
        %v1799 = vmul.f32 %v1735, %v1767
        %v1800 = vmul.f32 %v1736, %v1768
        %v1801 = vmul.f32 %v1737, %v1769
        %v1802 = vmul.f32 %v1738, %v1770
        %v1803 = vmul.f32 %v1739, %v1771
        %v1804 = vmul.f32 %v1740, %v1772
        %v1805 = vmul.f32 %v1741, %v1773
        %v1806 = vmul.f32 %v1742, %v1774
        %v1807 = vmul.f32 %v1743, %v1775
        %v1808 = vmul.f32 %v1744, %v1776
        %v1809 = vmul.f32 %v1745, %v1777
        %v1810 = vmul.f32 %v1746, %v1778
        %v1811 = vmul.f32 %v1747, %v1779
        %v1812 = vmul.f32 %v1748, %v1780
        %v1813 = vmul.f32 %v1749, %v1781
        %v1814 = vmul.f32 %v1750, %v1782
        %v1815 = vmul.f32 %v1751, %v1783
        %v1816 = vmul.f32 %v1752, %v1784
        %v1817 = vmul.f32 %v1753, %v1785
        %v1818 = vmul.f32 %v1754, %v1786
        %v1819 = vmul.f32 %v1755, %v1787
        %v1820 = vmul.f32 %v1756, %v1788
        %v1821 = vmul.f32 %v1757, %v1789
        %v1822 = vmul.f32 %v1758, %v1790
        %v1823 = vmul.f32 %v1759, %v1791
        %v1824 = vmul.f32 %v1760, %v1792
        %v1825 = vmul.f32 %v1761, %v1793
        %v1826 = vmul.f32 %v1762, %v1794
        %v1827 = vmul.f32 %v1763, %v1795
        %v1828 = vmul.f32 %v1764, %v1796
        %v1829 = vmul.f32 %v1765, %v1797
        %v1830 = vpack.c.bf16 %v1799, %v1798
        %v1831 = vpack.c.bf16 %v1801, %v1800
        %v1832 = vpack.c.bf16 %v1803, %v1802
        %v1833 = vpack.c.bf16 %v1805, %v1804
        %v1834 = vpack.c.bf16 %v1807, %v1806
        %v1835 = vpack.c.bf16 %v1809, %v1808
        %v1836 = vpack.c.bf16 %v1811, %v1810
        %v1837 = vpack.c.bf16 %v1813, %v1812
        %v1838 = vpack.c.bf16 %v1815, %v1814
        %v1839 = vpack.c.bf16 %v1817, %v1816
        %v1840 = vpack.c.bf16 %v1819, %v1818
        %v1841 = vpack.c.bf16 %v1821, %v1820
        %v1842 = vpack.c.bf16 %v1823, %v1822
        %v1843 = vpack.c.bf16 %v1825, %v1824
        %v1844 = vpack.c.bf16 %v1827, %v1826
        %v1845 = vpack.c.bf16 %v1829, %v1828
        %v1846 = vld [vmem:[#allocation10] sm:$0xf]
        %v1847 = vld [vmem:[#allocation10 + $0x4] sm:$0xf]
        %v1848 = vld [vmem:[#allocation10 + $0x8] sm:$0xf]
        %v1849 = vld [vmem:[#allocation10 + $0xc] sm:$0xf]
        %v1850 = vld [vmem:[#allocation10 + $0x10] sm:$0xf]
        %v1851 = vld [vmem:[#allocation10 + $0x14] sm:$0xf]
        %v1852 = vld [vmem:[#allocation10 + $0x18] sm:$0xf]
        %v1853 = vld [vmem:[#allocation10 + $0x1c] sm:$0xf]
        %v1854 = vld [vmem:[#allocation10 + $0x20] sm:$0xf]
        %v1855 = vld [vmem:[#allocation10 + $0x24] sm:$0xf]
        %v1856 = vld [vmem:[#allocation10 + $0x28] sm:$0xf]
        %v1857 = vld [vmem:[#allocation10 + $0x2c] sm:$0xf]
        %v1858 = vld [vmem:[#allocation10 + $0x30] sm:$0xf]
        %v1859 = vld [vmem:[#allocation10 + $0x34] sm:$0xf]
        %v1860 = vld [vmem:[#allocation10 + $0x38] sm:$0xf]
        %v1861 = vld [vmem:[#allocation10 + $0x3c] sm:$0xf]
        %v1862 = vld [vmem:[%s7] sm:$0x1]
        %v1864 = vperm.slane %v1862, 0
        %v1882 = vunpack.c.l.b16 %v1846
        %v1883 = vunpack.c.l.b16 %v1847
        %v1884 = vunpack.c.l.b16 %v1848
        %v1885 = vunpack.c.l.b16 %v1849
        %v1886 = vunpack.c.l.b16 %v1850
        %v1887 = vunpack.c.l.b16 %v1851
        %v1888 = vunpack.c.l.b16 %v1852
        %v1889 = vunpack.c.l.b16 %v1853
        %v1890 = vunpack.c.l.b16 %v1854
        %v1891 = vunpack.c.l.b16 %v1855
        %v1892 = vunpack.c.l.b16 %v1856
        %v1893 = vunpack.c.l.b16 %v1857
        %v1894 = vunpack.c.l.b16 %v1858
        %v1895 = vunpack.c.l.b16 %v1859
        %v1896 = vunpack.c.l.b16 %v1860
        %v1897 = vunpack.c.l.b16 %v1861
        %v1898 = vpack.c.b16 %v1883, %v1882
        %v1899 = vpack.c.b16 %v1885, %v1884
        %v1900 = vpack.c.b16 %v1887, %v1886
        %v1901 = vpack.c.b16 %v1889, %v1888
        %v1902 = vpack.c.b16 %v1891, %v1890
        %v1903 = vpack.c.b16 %v1893, %v1892
        %v1904 = vpack.c.b16 %v1895, %v1894
        %v1905 = vpack.c.b16 %v1897, %v1896
        %1914 = vmatpush.bf16.msra.mxu0 %v1905
        %1915 = vmatpush.bf16.msra.mxu0 %v1904
        %1916 = vmatpush.bf16.msra.mxu0 %v1903
        %1917 = vmatpush.bf16.msra.mxu0 %v1902
        %1918 = vmatpush.bf16.msra.mxu0 %v1901
        %1919 = vmatpush.bf16.msra.mxu0 %v1900
        %1920 = vmatpush.bf16.msra.mxu0 %v1899
        %1921 = vmatpush.bf16.msra.mxu0 %v1898
        %1922 = vmatmul.bf16.gmra.mxu0 %v1830
        %v1923 = vpop.f32.mrf.mxu0
        %v1924 = vadd.f32 %v1864, %v1923
        %v1925 = vpop.f32.mrf.mxu0
        %v1926 = vadd.f32 %v1864, %v1925
        %1927 = vmatmul.bf16.gmra.mxu0 %v1831
        %v1928 = vpop.f32.mrf.mxu0
        %v1929 = vadd.f32 %v1864, %v1928
        %v1930 = vpop.f32.mrf.mxu0
        %v1931 = vadd.f32 %v1864, %v1930
        %1932 = vmatmul.bf16.gmra.mxu0 %v1832
        %v1933 = vpop.f32.mrf.mxu0
        %v1934 = vadd.f32 %v1864, %v1933
        %v1935 = vpop.f32.mrf.mxu0
        %v1936 = vadd.f32 %v1864, %v1935
        %1937 = vmatmul.bf16.gmra.mxu0 %v1833
        %v1938 = vpop.f32.mrf.mxu0
        %v1939 = vadd.f32 %v1864, %v1938
        %v1940 = vpop.f32.mrf.mxu0
        %v1941 = vadd.f32 %v1864, %v1940
        %1942 = vmatmul.bf16.gmra.mxu0 %v1834
        %v1943 = vpop.f32.mrf.mxu0
        %v1944 = vadd.f32 %v1864, %v1943
        %v1945 = vpop.f32.mrf.mxu0
        %v1946 = vadd.f32 %v1864, %v1945
        %1947 = vmatmul.bf16.gmra.mxu0 %v1835
        %v1948 = vpop.f32.mrf.mxu0
        %v1949 = vadd.f32 %v1864, %v1948
        %v1950 = vpop.f32.mrf.mxu0
        %v1951 = vadd.f32 %v1864, %v1950
        %1952 = vmatmul.bf16.gmra.mxu0 %v1836
        %v1953 = vpop.f32.mrf.mxu0
        %v1954 = vadd.f32 %v1864, %v1953
        %v1955 = vpop.f32.mrf.mxu0
        %v1956 = vadd.f32 %v1864, %v1955
        %1957 = vmatmul.bf16.gmra.mxu0 %v1837
        %v1958 = vpop.f32.mrf.mxu0
        %v1959 = vadd.f32 %v1864, %v1958
        %v1960 = vpop.f32.mrf.mxu0
        %v1961 = vadd.f32 %v1864, %v1960
        %1962 = vmatmul.bf16.gmra.mxu0 %v1838
        %v1963 = vpop.f32.mrf.mxu0
        %v1964 = vadd.f32 %v1864, %v1963
        %v1965 = vpop.f32.mrf.mxu0
        %v1966 = vadd.f32 %v1864, %v1965
        %1967 = vmatmul.bf16.gmra.mxu0 %v1839
        %v1968 = vpop.f32.mrf.mxu0
        %v1969 = vadd.f32 %v1864, %v1968
        %v1970 = vpop.f32.mrf.mxu0
        %v1971 = vadd.f32 %v1864, %v1970
        %1972 = vmatmul.bf16.gmra.mxu0 %v1840
        %v1973 = vpop.f32.mrf.mxu0
        %v1974 = vadd.f32 %v1864, %v1973
        %v1975 = vpop.f32.mrf.mxu0
        %v1976 = vadd.f32 %v1864, %v1975
        %1977 = vmatmul.bf16.gmra.mxu0 %v1841
        %v1978 = vpop.f32.mrf.mxu0
        %v1979 = vadd.f32 %v1864, %v1978
        %v1980 = vpop.f32.mrf.mxu0
        %v1981 = vadd.f32 %v1864, %v1980
        %1982 = vmatmul.bf16.gmra.mxu0 %v1842
        %v1983 = vpop.f32.mrf.mxu0
        %v1984 = vadd.f32 %v1864, %v1983
        %v1985 = vpop.f32.mrf.mxu0
        %v1986 = vadd.f32 %v1864, %v1985
        %1987 = vmatmul.bf16.gmra.mxu0 %v1843
        %v1988 = vpop.f32.mrf.mxu0
        %v1989 = vadd.f32 %v1864, %v1988
        %v1990 = vpop.f32.mrf.mxu0
        %v1991 = vadd.f32 %v1864, %v1990
        %1992 = vmatmul.bf16.gmra.mxu0 %v1844
        %v1993 = vpop.f32.mrf.mxu0
        %v1994 = vadd.f32 %v1864, %v1993
        %v1995 = vpop.f32.mrf.mxu0
        %v1996 = vadd.f32 %v1864, %v1995
        %1997 = vmatmul.bf16.gmra.mxu0 %v1845
        %v1998 = vpop.f32.mrf.mxu0
        %v1999 = vadd.f32 %v1864, %v1998
        %v2000 = vpop.f32.mrf.mxu0
        %v2001 = vadd.f32 %v1864, %v2000
        %2002 = vdwg.mxu0
        %v2003 = vadd.f32 %v748, %v1924
        %v2004 = vadd.f32 %v749, %v1926
        %v2005 = vadd.f32 %v750, %v1929
        %v2006 = vadd.f32 %v751, %v1931
        %v2007 = vadd.f32 %v752, %v1934
        %v2008 = vadd.f32 %v753, %v1936
        %v2009 = vadd.f32 %v754, %v1939
        %v2010 = vadd.f32 %v755, %v1941
        %v2011 = vadd.f32 %v756, %v1944
        %v2012 = vadd.f32 %v757, %v1946
        %v2013 = vadd.f32 %v758, %v1949
        %v2014 = vadd.f32 %v759, %v1951
        %v2015 = vadd.f32 %v760, %v1954
        %v2016 = vadd.f32 %v761, %v1956
        %v2017 = vadd.f32 %v762, %v1959
        %v2018 = vadd.f32 %v763, %v1961
        %v2019 = vadd.f32 %v764, %v1964
        %v2020 = vadd.f32 %v765, %v1966
        %v2021 = vadd.f32 %v766, %v1969
        %v2022 = vadd.f32 %v767, %v1971
        %v2023 = vadd.f32 %v768, %v1974
        %v2024 = vadd.f32 %v769, %v1976
        %v2025 = vadd.f32 %v770, %v1979
        %v2026 = vadd.f32 %v771, %v1981
        %v2027 = vadd.f32 %v772, %v1984
        %v2028 = vadd.f32 %v773, %v1986
        %v2029 = vadd.f32 %v774, %v1989
        %v2030 = vadd.f32 %v775, %v1991
        %v2031 = vadd.f32 %v776, %v1994
        %v2032 = vadd.f32 %v777, %v1996
        %v2033 = vadd.f32 %v778, %v1999
        %v2034 = vadd.f32 %v779, %v2001
        %v2035 = vld [vmem:[#allocation11] sm:$0x1]
        %v2036 = vld [vmem:[%s9] sm:$0x1]
        %2037 = vadd.xlane.f32.xlu0 %v2003
        %v2038 = vpop.xlane.xlu0 %2037
        %2039 = vadd.xlane.f32.xlu0 %v2004
        %v2040 = vpop.xlane.xlu0 %2039
        %2041 = vadd.xlane.f32.xlu0 %v2005
        %v2042 = vpop.xlane.xlu0 %2041
        %2043 = vadd.xlane.f32.xlu0 %v2006
        %v2044 = vpop.xlane.xlu0 %2043
        %2045 = vadd.xlane.f32.xlu0 %v2007
        %v2046 = vpop.xlane.xlu0 %2045
        %2047 = vadd.xlane.f32.xlu0 %v2008
        %v2048 = vpop.xlane.xlu0 %2047
        %2049 = vadd.xlane.f32.xlu0 %v2009
        %v2050 = vpop.xlane.xlu0 %2049
        %2051 = vadd.xlane.f32.xlu0 %v2010
        %v2052 = vpop.xlane.xlu0 %2051
        %2053 = vadd.xlane.f32.xlu0 %v2011
        %v2054 = vpop.xlane.xlu0 %2053
        %2055 = vadd.xlane.f32.xlu0 %v2012
        %v2056 = vpop.xlane.xlu0 %2055
        %2057 = vadd.xlane.f32.xlu0 %v2013
        %v2058 = vpop.xlane.xlu0 %2057
        %2059 = vadd.xlane.f32.xlu0 %v2014
        %v2060 = vpop.xlane.xlu0 %2059
        %2061 = vadd.xlane.f32.xlu0 %v2015
        %v2062 = vpop.xlane.xlu0 %2061
        %2063 = vadd.xlane.f32.xlu0 %v2016
        %v2064 = vpop.xlane.xlu0 %2063
        %2065 = vadd.xlane.f32.xlu0 %v2017
        %v2066 = vpop.xlane.xlu0 %2065
        %2067 = vadd.xlane.f32.xlu0 %v2018
        %v2068 = vpop.xlane.xlu0 %2067
        %2069 = vadd.xlane.f32.xlu0 %v2019
        %v2070 = vpop.xlane.xlu0 %2069
        %2071 = vadd.xlane.f32.xlu0 %v2020
        %v2072 = vpop.xlane.xlu0 %2071
        %2073 = vadd.xlane.f32.xlu0 %v2021
        %v2074 = vpop.xlane.xlu0 %2073
        %2075 = vadd.xlane.f32.xlu0 %v2022
        %v2076 = vpop.xlane.xlu0 %2075
        %2077 = vadd.xlane.f32.xlu0 %v2023
        %v2078 = vpop.xlane.xlu0 %2077
        %2079 = vadd.xlane.f32.xlu0 %v2024
        %v2080 = vpop.xlane.xlu0 %2079
        %2081 = vadd.xlane.f32.xlu0 %v2025
        %v2082 = vpop.xlane.xlu0 %2081
        %2083 = vadd.xlane.f32.xlu0 %v2026
        %v2084 = vpop.xlane.xlu0 %2083
        %2085 = vadd.xlane.f32.xlu0 %v2027
        %v2086 = vpop.xlane.xlu0 %2085
        %2087 = vadd.xlane.f32.xlu0 %v2028
        %v2088 = vpop.xlane.xlu0 %2087
        %2089 = vadd.xlane.f32.xlu0 %v2029
        %v2090 = vpop.xlane.xlu0 %2089
        %2091 = vadd.xlane.f32.xlu0 %v2030
        %v2092 = vpop.xlane.xlu0 %2091
        %2093 = vadd.xlane.f32.xlu0 %v2031
        %v2094 = vpop.xlane.xlu0 %2093
        %2095 = vadd.xlane.f32.xlu0 %v2032
        %v2096 = vpop.xlane.xlu0 %2095
        %2097 = vadd.xlane.f32.xlu0 %v2033
        %v2098 = vpop.xlane.xlu0 %2097
        %2099 = vadd.xlane.f32.xlu0 %v2034
        %v2100 = vpop.xlane.xlu0 %2099
        %v2101 = vrcp.pop 128.0
        %v2102 = vmul.f32 128.0, %v2101
        %v2103 = vsub.f32 1.0, %v2102
        %v2104 = vmul.f32 %v2101, %v2103
        %v2105 = vadd.f32 %v2101, %v2104
        %vm2106 = vweird.f32 %v2101
        %v2107 = vsel %vm2106, %v2101, %v2105
        %v2108 = vmul.f32 %v2038, %v2107
        %v2109 = vmul.f32 %v2040, %v2107
        %v2110 = vmul.f32 %v2042, %v2107
        %v2111 = vmul.f32 %v2044, %v2107
        %v2112 = vmul.f32 %v2046, %v2107
        %v2113 = vmul.f32 %v2048, %v2107
        %v2114 = vmul.f32 %v2050, %v2107
        %v2115 = vmul.f32 %v2052, %v2107
        %v2116 = vmul.f32 %v2054, %v2107
        %v2117 = vmul.f32 %v2056, %v2107
        %v2118 = vmul.f32 %v2058, %v2107
        %v2119 = vmul.f32 %v2060, %v2107
        %v2120 = vmul.f32 %v2062, %v2107
        %v2121 = vmul.f32 %v2064, %v2107
        %v2122 = vmul.f32 %v2066, %v2107
        %v2123 = vmul.f32 %v2068, %v2107
        %v2124 = vmul.f32 %v2070, %v2107
        %v2125 = vmul.f32 %v2072, %v2107
        %v2126 = vmul.f32 %v2074, %v2107
        %v2127 = vmul.f32 %v2076, %v2107
        %v2128 = vmul.f32 %v2078, %v2107
        %v2129 = vmul.f32 %v2080, %v2107
        %v2130 = vmul.f32 %v2082, %v2107
        %v2131 = vmul.f32 %v2084, %v2107
        %v2132 = vmul.f32 %v2086, %v2107
        %v2133 = vmul.f32 %v2088, %v2107
        %v2134 = vmul.f32 %v2090, %v2107
        %v2135 = vmul.f32 %v2092, %v2107
        %v2136 = vmul.f32 %v2094, %v2107
        %v2137 = vmul.f32 %v2096, %v2107
        %v2138 = vmul.f32 %v2098, %v2107
        %v2139 = vmul.f32 %v2100, %v2107
        %v2140 = vsub.f32 %v2003, %v2108
        %v2141 = vsub.f32 %v2004, %v2109
        %v2142 = vsub.f32 %v2005, %v2110
        %v2143 = vsub.f32 %v2006, %v2111
        %v2144 = vsub.f32 %v2007, %v2112
        %v2145 = vsub.f32 %v2008, %v2113
        %v2146 = vsub.f32 %v2009, %v2114
        %v2147 = vsub.f32 %v2010, %v2115
        %v2148 = vsub.f32 %v2011, %v2116
        %v2149 = vsub.f32 %v2012, %v2117
        %v2150 = vsub.f32 %v2013, %v2118
        %v2151 = vsub.f32 %v2014, %v2119
        %v2152 = vsub.f32 %v2015, %v2120
        %v2153 = vsub.f32 %v2016, %v2121
        %v2154 = vsub.f32 %v2017, %v2122
        %v2155 = vsub.f32 %v2018, %v2123
        %v2156 = vsub.f32 %v2019, %v2124
        %v2157 = vsub.f32 %v2020, %v2125
        %v2158 = vsub.f32 %v2021, %v2126
        %v2159 = vsub.f32 %v2022, %v2127
        %v2160 = vsub.f32 %v2023, %v2128
        %v2161 = vsub.f32 %v2024, %v2129
        %v2162 = vsub.f32 %v2025, %v2130
        %v2163 = vsub.f32 %v2026, %v2131
        %v2164 = vsub.f32 %v2027, %v2132
        %v2165 = vsub.f32 %v2028, %v2133
        %v2166 = vsub.f32 %v2029, %v2134
        %v2167 = vsub.f32 %v2030, %v2135
        %v2168 = vsub.f32 %v2031, %v2136
        %v2169 = vsub.f32 %v2032, %v2137
        %v2170 = vsub.f32 %v2033, %v2138
        %v2171 = vsub.f32 %v2034, %v2139
        %v2172 = vmul.f32 %v2140, %v2140
        %v2173 = vmul.f32 %v2141, %v2141
        %v2174 = vmul.f32 %v2142, %v2142
        %v2175 = vmul.f32 %v2143, %v2143
        %v2176 = vmul.f32 %v2144, %v2144
        %v2177 = vmul.f32 %v2145, %v2145
        %v2178 = vmul.f32 %v2146, %v2146
        %v2179 = vmul.f32 %v2147, %v2147
        %v2180 = vmul.f32 %v2148, %v2148
        %v2181 = vmul.f32 %v2149, %v2149
        %v2182 = vmul.f32 %v2150, %v2150
        %v2183 = vmul.f32 %v2151, %v2151
        %v2184 = vmul.f32 %v2152, %v2152
        %v2185 = vmul.f32 %v2153, %v2153
        %v2186 = vmul.f32 %v2154, %v2154
        %v2187 = vmul.f32 %v2155, %v2155
        %v2188 = vmul.f32 %v2156, %v2156
        %v2189 = vmul.f32 %v2157, %v2157
        %v2190 = vmul.f32 %v2158, %v2158
        %v2191 = vmul.f32 %v2159, %v2159
        %v2192 = vmul.f32 %v2160, %v2160
        %v2193 = vmul.f32 %v2161, %v2161
        %v2194 = vmul.f32 %v2162, %v2162
        %v2195 = vmul.f32 %v2163, %v2163
        %v2196 = vmul.f32 %v2164, %v2164
        %v2197 = vmul.f32 %v2165, %v2165
        %v2198 = vmul.f32 %v2166, %v2166
        %v2199 = vmul.f32 %v2167, %v2167
        %v2200 = vmul.f32 %v2168, %v2168
        %v2201 = vmul.f32 %v2169, %v2169
        %v2202 = vmul.f32 %v2170, %v2170
        %v2203 = vmul.f32 %v2171, %v2171
        %2204 = vadd.xlane.f32.xlu0 %v2172
        %v2205 = vpop.xlane.xlu0 %2204
        %2206 = vadd.xlane.f32.xlu0 %v2173
        %v2207 = vpop.xlane.xlu0 %2206
        %2208 = vadd.xlane.f32.xlu0 %v2174
        %v2209 = vpop.xlane.xlu0 %2208
        %2210 = vadd.xlane.f32.xlu0 %v2175
        %v2211 = vpop.xlane.xlu0 %2210
        %2212 = vadd.xlane.f32.xlu0 %v2176
        %v2213 = vpop.xlane.xlu0 %2212
        %2214 = vadd.xlane.f32.xlu0 %v2177
        %v2215 = vpop.xlane.xlu0 %2214
        %2216 = vadd.xlane.f32.xlu0 %v2178
        %v2217 = vpop.xlane.xlu0 %2216
        %2218 = vadd.xlane.f32.xlu0 %v2179
        %v2219 = vpop.xlane.xlu0 %2218
        %2220 = vadd.xlane.f32.xlu0 %v2180
        %v2221 = vpop.xlane.xlu0 %2220
        %2222 = vadd.xlane.f32.xlu0 %v2181
        %v2223 = vpop.xlane.xlu0 %2222
        %2224 = vadd.xlane.f32.xlu0 %v2182
        %v2225 = vpop.xlane.xlu0 %2224
        %2226 = vadd.xlane.f32.xlu0 %v2183
        %v2227 = vpop.xlane.xlu0 %2226
        %2228 = vadd.xlane.f32.xlu0 %v2184
        %v2229 = vpop.xlane.xlu0 %2228
        %2230 = vadd.xlane.f32.xlu0 %v2185
        %v2231 = vpop.xlane.xlu0 %2230
        %2232 = vadd.xlane.f32.xlu0 %v2186
        %v2233 = vpop.xlane.xlu0 %2232
        %2234 = vadd.xlane.f32.xlu0 %v2187
        %v2235 = vpop.xlane.xlu0 %2234
        %2236 = vadd.xlane.f32.xlu0 %v2188
        %v2237 = vpop.xlane.xlu0 %2236
        %2238 = vadd.xlane.f32.xlu0 %v2189
        %v2239 = vpop.xlane.xlu0 %2238
        %2240 = vadd.xlane.f32.xlu0 %v2190
        %v2241 = vpop.xlane.xlu0 %2240
        %2242 = vadd.xlane.f32.xlu0 %v2191
        %v2243 = vpop.xlane.xlu0 %2242
        %2244 = vadd.xlane.f32.xlu0 %v2192
        %v2245 = vpop.xlane.xlu0 %2244
        %2246 = vadd.xlane.f32.xlu0 %v2193
        %v2247 = vpop.xlane.xlu0 %2246
        %2248 = vadd.xlane.f32.xlu0 %v2194
        %v2249 = vpop.xlane.xlu0 %2248
        %2250 = vadd.xlane.f32.xlu0 %v2195
        %v2251 = vpop.xlane.xlu0 %2250
        %2252 = vadd.xlane.f32.xlu0 %v2196
        %v2253 = vpop.xlane.xlu0 %2252
        %2254 = vadd.xlane.f32.xlu0 %v2197
        %v2255 = vpop.xlane.xlu0 %2254
        %2256 = vadd.xlane.f32.xlu0 %v2198
        %v2257 = vpop.xlane.xlu0 %2256
        %2258 = vadd.xlane.f32.xlu0 %v2199
        %v2259 = vpop.xlane.xlu0 %2258
        %2260 = vadd.xlane.f32.xlu0 %v2200
        %v2261 = vpop.xlane.xlu0 %2260
        %2262 = vadd.xlane.f32.xlu0 %v2201
        %v2263 = vpop.xlane.xlu0 %2262
        %2264 = vadd.xlane.f32.xlu0 %v2202
        %v2265 = vpop.xlane.xlu0 %2264
        %2266 = vadd.xlane.f32.xlu0 %v2203
        %v2267 = vpop.xlane.xlu0 %2266
        %v2268 = vmul.f32 %v2205, %v2107
        %v2269 = vmul.f32 %v2207, %v2107
        %v2270 = vmul.f32 %v2209, %v2107
        %v2271 = vmul.f32 %v2211, %v2107
        %v2272 = vmul.f32 %v2213, %v2107
        %v2273 = vmul.f32 %v2215, %v2107
        %v2274 = vmul.f32 %v2217, %v2107
        %v2275 = vmul.f32 %v2219, %v2107
        %v2276 = vmul.f32 %v2221, %v2107
        %v2277 = vmul.f32 %v2223, %v2107
        %v2278 = vmul.f32 %v2225, %v2107
        %v2279 = vmul.f32 %v2227, %v2107
        %v2280 = vmul.f32 %v2229, %v2107
        %v2281 = vmul.f32 %v2231, %v2107
        %v2282 = vmul.f32 %v2233, %v2107
        %v2283 = vmul.f32 %v2235, %v2107
        %v2284 = vmul.f32 %v2237, %v2107
        %v2285 = vmul.f32 %v2239, %v2107
        %v2286 = vmul.f32 %v2241, %v2107
        %v2287 = vmul.f32 %v2243, %v2107
        %v2288 = vmul.f32 %v2245, %v2107
        %v2289 = vmul.f32 %v2247, %v2107
        %v2290 = vmul.f32 %v2249, %v2107
        %v2291 = vmul.f32 %v2251, %v2107
        %v2292 = vmul.f32 %v2253, %v2107
        %v2293 = vmul.f32 %v2255, %v2107
        %v2294 = vmul.f32 %v2257, %v2107
        %v2295 = vmul.f32 %v2259, %v2107
        %v2296 = vmul.f32 %v2261, %v2107
        %v2297 = vmul.f32 %v2263, %v2107
        %v2298 = vmul.f32 %v2265, %v2107
        %v2299 = vmul.f32 %v2267, %v2107
        %v2300 = vadd.f32 %v2268, 1e-05
        %v2301 = vadd.f32 %v2269, 1e-05
        %v2302 = vadd.f32 %v2270, 1e-05
        %v2303 = vadd.f32 %v2271, 1e-05
        %v2304 = vadd.f32 %v2272, 1e-05
        %v2305 = vadd.f32 %v2273, 1e-05
        %v2306 = vadd.f32 %v2274, 1e-05
        %v2307 = vadd.f32 %v2275, 1e-05
        %v2308 = vadd.f32 %v2276, 1e-05
        %v2309 = vadd.f32 %v2277, 1e-05
        %v2310 = vadd.f32 %v2278, 1e-05
        %v2311 = vadd.f32 %v2279, 1e-05
        %v2312 = vadd.f32 %v2280, 1e-05
        %v2313 = vadd.f32 %v2281, 1e-05
        %v2314 = vadd.f32 %v2282, 1e-05
        %v2315 = vadd.f32 %v2283, 1e-05
        %v2316 = vadd.f32 %v2284, 1e-05
        %v2317 = vadd.f32 %v2285, 1e-05
        %v2318 = vadd.f32 %v2286, 1e-05
        %v2319 = vadd.f32 %v2287, 1e-05
        %v2320 = vadd.f32 %v2288, 1e-05
        %v2321 = vadd.f32 %v2289, 1e-05
        %v2322 = vadd.f32 %v2290, 1e-05
        %v2323 = vadd.f32 %v2291, 1e-05
        %v2324 = vadd.f32 %v2292, 1e-05
        %v2325 = vadd.f32 %v2293, 1e-05
        %v2326 = vadd.f32 %v2294, 1e-05
        %v2327 = vadd.f32 %v2295, 1e-05
        %v2328 = vadd.f32 %v2296, 1e-05
        %v2329 = vadd.f32 %v2297, 1e-05
        %v2330 = vadd.f32 %v2298, 1e-05
        %v2331 = vadd.f32 %v2299, 1e-05
        %v2332 = vrsqrt.pop %v2300
        %v2333 = vmul.f32 %v2332, %v2300
        %v2334 = vmul.f32 %v2333, %v2332
        %v2335 = vmul.f32 0.5, %v2334
        %v2336 = vsub.f32 1.5, %v2335
        %v2337 = vmul.f32 %v2332, %v2336
        %vm2338 = vweird.f32 %v2300
        %vm2339 = vweird.f32 %v2332
        %vm2340 = vmor %vm2338, %vm2339
        %v2341 = vsel %vm2340, %v2332, %v2337
        %v2342 = vrsqrt.pop %v2301
        %v2343 = vmul.f32 %v2342, %v2301
        %v2344 = vmul.f32 %v2343, %v2342
        %v2345 = vmul.f32 0.5, %v2344
        %v2346 = vsub.f32 1.5, %v2345
        %v2347 = vmul.f32 %v2342, %v2346
        %vm2348 = vweird.f32 %v2301
        %vm2349 = vweird.f32 %v2342
        %vm2350 = vmor %vm2348, %vm2349
        %v2351 = vsel %vm2350, %v2342, %v2347
        %v2352 = vrsqrt.pop %v2302
        %v2353 = vmul.f32 %v2352, %v2302
        %v2354 = vmul.f32 %v2353, %v2352
        %v2355 = vmul.f32 0.5, %v2354
        %v2356 = vsub.f32 1.5, %v2355
        %v2357 = vmul.f32 %v2352, %v2356
        %vm2358 = vweird.f32 %v2302
        %vm2359 = vweird.f32 %v2352
        %vm2360 = vmor %vm2358, %vm2359
        %v2361 = vsel %vm2360, %v2352, %v2357
        %v2362 = vrsqrt.pop %v2303
        %v2363 = vmul.f32 %v2362, %v2303
        %v2364 = vmul.f32 %v2363, %v2362
        %v2365 = vmul.f32 0.5, %v2364
        %v2366 = vsub.f32 1.5, %v2365
        %v2367 = vmul.f32 %v2362, %v2366
        %vm2368 = vweird.f32 %v2303
        %vm2369 = vweird.f32 %v2362
        %vm2370 = vmor %vm2368, %vm2369
        %v2371 = vsel %vm2370, %v2362, %v2367
        %v2372 = vrsqrt.pop %v2304
        %v2373 = vmul.f32 %v2372, %v2304
        %v2374 = vmul.f32 %v2373, %v2372
        %v2375 = vmul.f32 0.5, %v2374
        %v2376 = vsub.f32 1.5, %v2375
        %v2377 = vmul.f32 %v2372, %v2376
        %vm2378 = vweird.f32 %v2304
        %vm2379 = vweird.f32 %v2372
        %vm2380 = vmor %vm2378, %vm2379
        %v2381 = vsel %vm2380, %v2372, %v2377
        %v2382 = vrsqrt.pop %v2305
        %v2383 = vmul.f32 %v2382, %v2305
        %v2384 = vmul.f32 %v2383, %v2382
        %v2385 = vmul.f32 0.5, %v2384
        %v2386 = vsub.f32 1.5, %v2385
        %v2387 = vmul.f32 %v2382, %v2386
        %vm2388 = vweird.f32 %v2305
        %vm2389 = vweird.f32 %v2382
        %vm2390 = vmor %vm2388, %vm2389
        %v2391 = vsel %vm2390, %v2382, %v2387
        %v2392 = vrsqrt.pop %v2306
        %v2393 = vmul.f32 %v2392, %v2306
        %v2394 = vmul.f32 %v2393, %v2392
        %v2395 = vmul.f32 0.5, %v2394
        %v2396 = vsub.f32 1.5, %v2395
        %v2397 = vmul.f32 %v2392, %v2396
        %vm2398 = vweird.f32 %v2306
        %vm2399 = vweird.f32 %v2392
        %vm2400 = vmor %vm2398, %vm2399
        %v2401 = vsel %vm2400, %v2392, %v2397
        %v2402 = vrsqrt.pop %v2307
        %v2403 = vmul.f32 %v2402, %v2307
        %v2404 = vmul.f32 %v2403, %v2402
        %v2405 = vmul.f32 0.5, %v2404
        %v2406 = vsub.f32 1.5, %v2405
        %v2407 = vmul.f32 %v2402, %v2406
        %vm2408 = vweird.f32 %v2307
        %vm2409 = vweird.f32 %v2402
        %vm2410 = vmor %vm2408, %vm2409
        %v2411 = vsel %vm2410, %v2402, %v2407
        %v2412 = vrsqrt.pop %v2308
        %v2413 = vmul.f32 %v2412, %v2308
        %v2414 = vmul.f32 %v2413, %v2412
        %v2415 = vmul.f32 0.5, %v2414
        %v2416 = vsub.f32 1.5, %v2415
        %v2417 = vmul.f32 %v2412, %v2416
        %vm2418 = vweird.f32 %v2308
        %vm2419 = vweird.f32 %v2412
        %vm2420 = vmor %vm2418, %vm2419
        %v2421 = vsel %vm2420, %v2412, %v2417
        %v2422 = vrsqrt.pop %v2309
        %v2423 = vmul.f32 %v2422, %v2309
        %v2424 = vmul.f32 %v2423, %v2422
        %v2425 = vmul.f32 0.5, %v2424
        %v2426 = vsub.f32 1.5, %v2425
        %v2427 = vmul.f32 %v2422, %v2426
        %vm2428 = vweird.f32 %v2309
        %vm2429 = vweird.f32 %v2422
        %vm2430 = vmor %vm2428, %vm2429
        %v2431 = vsel %vm2430, %v2422, %v2427
        %v2432 = vrsqrt.pop %v2310
        %v2433 = vmul.f32 %v2432, %v2310
        %v2434 = vmul.f32 %v2433, %v2432
        %v2435 = vmul.f32 0.5, %v2434
        %v2436 = vsub.f32 1.5, %v2435
        %v2437 = vmul.f32 %v2432, %v2436
        %vm2438 = vweird.f32 %v2310
        %vm2439 = vweird.f32 %v2432
        %vm2440 = vmor %vm2438, %vm2439
        %v2441 = vsel %vm2440, %v2432, %v2437
        %v2442 = vrsqrt.pop %v2311
        %v2443 = vmul.f32 %v2442, %v2311
        %v2444 = vmul.f32 %v2443, %v2442
        %v2445 = vmul.f32 0.5, %v2444
        %v2446 = vsub.f32 1.5, %v2445
        %v2447 = vmul.f32 %v2442, %v2446
        %vm2448 = vweird.f32 %v2311
        %vm2449 = vweird.f32 %v2442
        %vm2450 = vmor %vm2448, %vm2449
        %v2451 = vsel %vm2450, %v2442, %v2447
        %v2452 = vrsqrt.pop %v2312
        %v2453 = vmul.f32 %v2452, %v2312
        %v2454 = vmul.f32 %v2453, %v2452
        %v2455 = vmul.f32 0.5, %v2454
        %v2456 = vsub.f32 1.5, %v2455
        %v2457 = vmul.f32 %v2452, %v2456
        %vm2458 = vweird.f32 %v2312
        %vm2459 = vweird.f32 %v2452
        %vm2460 = vmor %vm2458, %vm2459
        %v2461 = vsel %vm2460, %v2452, %v2457
        %v2462 = vrsqrt.pop %v2313
        %v2463 = vmul.f32 %v2462, %v2313
        %v2464 = vmul.f32 %v2463, %v2462
        %v2465 = vmul.f32 0.5, %v2464
        %v2466 = vsub.f32 1.5, %v2465
        %v2467 = vmul.f32 %v2462, %v2466
        %vm2468 = vweird.f32 %v2313
        %vm2469 = vweird.f32 %v2462
        %vm2470 = vmor %vm2468, %vm2469
        %v2471 = vsel %vm2470, %v2462, %v2467
        %v2472 = vrsqrt.pop %v2314
        %v2473 = vmul.f32 %v2472, %v2314
        %v2474 = vmul.f32 %v2473, %v2472
        %v2475 = vmul.f32 0.5, %v2474
        %v2476 = vsub.f32 1.5, %v2475
        %v2477 = vmul.f32 %v2472, %v2476
        %vm2478 = vweird.f32 %v2314
        %vm2479 = vweird.f32 %v2472
        %vm2480 = vmor %vm2478, %vm2479
        %v2481 = vsel %vm2480, %v2472, %v2477
        %v2482 = vrsqrt.pop %v2315
        %v2483 = vmul.f32 %v2482, %v2315
        %v2484 = vmul.f32 %v2483, %v2482
        %v2485 = vmul.f32 0.5, %v2484
        %v2486 = vsub.f32 1.5, %v2485
        %v2487 = vmul.f32 %v2482, %v2486
        %vm2488 = vweird.f32 %v2315
        %vm2489 = vweird.f32 %v2482
        %vm2490 = vmor %vm2488, %vm2489
        %v2491 = vsel %vm2490, %v2482, %v2487
        %v2492 = vrsqrt.pop %v2316
        %v2493 = vmul.f32 %v2492, %v2316
        %v2494 = vmul.f32 %v2493, %v2492
        %v2495 = vmul.f32 0.5, %v2494
        %v2496 = vsub.f32 1.5, %v2495
        %v2497 = vmul.f32 %v2492, %v2496
        %vm2498 = vweird.f32 %v2316
        %vm2499 = vweird.f32 %v2492
        %vm2500 = vmor %vm2498, %vm2499
        %v2501 = vsel %vm2500, %v2492, %v2497
        %v2502 = vrsqrt.pop %v2317
        %v2503 = vmul.f32 %v2502, %v2317
        %v2504 = vmul.f32 %v2503, %v2502
        %v2505 = vmul.f32 0.5, %v2504
        %v2506 = vsub.f32 1.5, %v2505
        %v2507 = vmul.f32 %v2502, %v2506
        %vm2508 = vweird.f32 %v2317
        %vm2509 = vweird.f32 %v2502
        %vm2510 = vmor %vm2508, %vm2509
        %v2511 = vsel %vm2510, %v2502, %v2507
        %v2512 = vrsqrt.pop %v2318
        %v2513 = vmul.f32 %v2512, %v2318
        %v2514 = vmul.f32 %v2513, %v2512
        %v2515 = vmul.f32 0.5, %v2514
        %v2516 = vsub.f32 1.5, %v2515
        %v2517 = vmul.f32 %v2512, %v2516
        %vm2518 = vweird.f32 %v2318
        %vm2519 = vweird.f32 %v2512
        %vm2520 = vmor %vm2518, %vm2519
        %v2521 = vsel %vm2520, %v2512, %v2517
        %v2522 = vrsqrt.pop %v2319
        %v2523 = vmul.f32 %v2522, %v2319
        %v2524 = vmul.f32 %v2523, %v2522
        %v2525 = vmul.f32 0.5, %v2524
        %v2526 = vsub.f32 1.5, %v2525
        %v2527 = vmul.f32 %v2522, %v2526
        %vm2528 = vweird.f32 %v2319
        %vm2529 = vweird.f32 %v2522
        %vm2530 = vmor %vm2528, %vm2529
        %v2531 = vsel %vm2530, %v2522, %v2527
        %v2532 = vrsqrt.pop %v2320
        %v2533 = vmul.f32 %v2532, %v2320
        %v2534 = vmul.f32 %v2533, %v2532
        %v2535 = vmul.f32 0.5, %v2534
        %v2536 = vsub.f32 1.5, %v2535
        %v2537 = vmul.f32 %v2532, %v2536
        %vm2538 = vweird.f32 %v2320
        %vm2539 = vweird.f32 %v2532
        %vm2540 = vmor %vm2538, %vm2539
        %v2541 = vsel %vm2540, %v2532, %v2537
        %v2542 = vrsqrt.pop %v2321
        %v2543 = vmul.f32 %v2542, %v2321
        %v2544 = vmul.f32 %v2543, %v2542
        %v2545 = vmul.f32 0.5, %v2544
        %v2546 = vsub.f32 1.5, %v2545
        %v2547 = vmul.f32 %v2542, %v2546
        %vm2548 = vweird.f32 %v2321
        %vm2549 = vweird.f32 %v2542
        %vm2550 = vmor %vm2548, %vm2549
        %v2551 = vsel %vm2550, %v2542, %v2547
        %v2552 = vrsqrt.pop %v2322
        %v2553 = vmul.f32 %v2552, %v2322
        %v2554 = vmul.f32 %v2553, %v2552
        %v2555 = vmul.f32 0.5, %v2554
        %v2556 = vsub.f32 1.5, %v2555
        %v2557 = vmul.f32 %v2552, %v2556
        %vm2558 = vweird.f32 %v2322
        %vm2559 = vweird.f32 %v2552
        %vm2560 = vmor %vm2558, %vm2559
        %v2561 = vsel %vm2560, %v2552, %v2557
        %v2562 = vrsqrt.pop %v2323
        %v2563 = vmul.f32 %v2562, %v2323
        %v2564 = vmul.f32 %v2563, %v2562
        %v2565 = vmul.f32 0.5, %v2564
        %v2566 = vsub.f32 1.5, %v2565
        %v2567 = vmul.f32 %v2562, %v2566
        %vm2568 = vweird.f32 %v2323
        %vm2569 = vweird.f32 %v2562
        %vm2570 = vmor %vm2568, %vm2569
        %v2571 = vsel %vm2570, %v2562, %v2567
        %v2572 = vrsqrt.pop %v2324
        %v2573 = vmul.f32 %v2572, %v2324
        %v2574 = vmul.f32 %v2573, %v2572
        %v2575 = vmul.f32 0.5, %v2574
        %v2576 = vsub.f32 1.5, %v2575
        %v2577 = vmul.f32 %v2572, %v2576
        %vm2578 = vweird.f32 %v2324
        %vm2579 = vweird.f32 %v2572
        %vm2580 = vmor %vm2578, %vm2579
        %v2581 = vsel %vm2580, %v2572, %v2577
        %v2582 = vrsqrt.pop %v2325
        %v2583 = vmul.f32 %v2582, %v2325
        %v2584 = vmul.f32 %v2583, %v2582
        %v2585 = vmul.f32 0.5, %v2584
        %v2586 = vsub.f32 1.5, %v2585
        %v2587 = vmul.f32 %v2582, %v2586
        %vm2588 = vweird.f32 %v2325
        %vm2589 = vweird.f32 %v2582
        %vm2590 = vmor %vm2588, %vm2589
        %v2591 = vsel %vm2590, %v2582, %v2587
        %v2592 = vrsqrt.pop %v2326
        %v2593 = vmul.f32 %v2592, %v2326
        %v2594 = vmul.f32 %v2593, %v2592
        %v2595 = vmul.f32 0.5, %v2594
        %v2596 = vsub.f32 1.5, %v2595
        %v2597 = vmul.f32 %v2592, %v2596
        %vm2598 = vweird.f32 %v2326
        %vm2599 = vweird.f32 %v2592
        %vm2600 = vmor %vm2598, %vm2599
        %v2601 = vsel %vm2600, %v2592, %v2597
        %v2602 = vrsqrt.pop %v2327
        %v2603 = vmul.f32 %v2602, %v2327
        %v2604 = vmul.f32 %v2603, %v2602
        %v2605 = vmul.f32 0.5, %v2604
        %v2606 = vsub.f32 1.5, %v2605
        %v2607 = vmul.f32 %v2602, %v2606
        %vm2608 = vweird.f32 %v2327
        %vm2609 = vweird.f32 %v2602
        %vm2610 = vmor %vm2608, %vm2609
        %v2611 = vsel %vm2610, %v2602, %v2607
        %v2612 = vrsqrt.pop %v2328
        %v2613 = vmul.f32 %v2612, %v2328
        %v2614 = vmul.f32 %v2613, %v2612
        %v2615 = vmul.f32 0.5, %v2614
        %v2616 = vsub.f32 1.5, %v2615
        %v2617 = vmul.f32 %v2612, %v2616
        %vm2618 = vweird.f32 %v2328
        %vm2619 = vweird.f32 %v2612
        %vm2620 = vmor %vm2618, %vm2619
        %v2621 = vsel %vm2620, %v2612, %v2617
        %v2622 = vrsqrt.pop %v2329
        %v2623 = vmul.f32 %v2622, %v2329
        %v2624 = vmul.f32 %v2623, %v2622
        %v2625 = vmul.f32 0.5, %v2624
        %v2626 = vsub.f32 1.5, %v2625
        %v2627 = vmul.f32 %v2622, %v2626
        %vm2628 = vweird.f32 %v2329
        %vm2629 = vweird.f32 %v2622
        %vm2630 = vmor %vm2628, %vm2629
        %v2631 = vsel %vm2630, %v2622, %v2627
        %v2632 = vrsqrt.pop %v2330
        %v2633 = vmul.f32 %v2632, %v2330
        %v2634 = vmul.f32 %v2633, %v2632
        %v2635 = vmul.f32 0.5, %v2634
        %v2636 = vsub.f32 1.5, %v2635
        %v2637 = vmul.f32 %v2632, %v2636
        %vm2638 = vweird.f32 %v2330
        %vm2639 = vweird.f32 %v2632
        %vm2640 = vmor %vm2638, %vm2639
        %v2641 = vsel %vm2640, %v2632, %v2637
        %v2642 = vrsqrt.pop %v2331
        %v2643 = vmul.f32 %v2642, %v2331
        %v2644 = vmul.f32 %v2643, %v2642
        %v2645 = vmul.f32 0.5, %v2644
        %v2646 = vsub.f32 1.5, %v2645
        %v2647 = vmul.f32 %v2642, %v2646
        %vm2648 = vweird.f32 %v2331
        %vm2649 = vweird.f32 %v2642
        %vm2650 = vmor %vm2648, %vm2649
        %v2651 = vsel %vm2650, %v2642, %v2647
        %v2652 = vmul.f32 %v2140, %v2341
        %v2653 = vmul.f32 %v2141, %v2351
        %v2654 = vmul.f32 %v2142, %v2361
        %v2655 = vmul.f32 %v2143, %v2371
        %v2656 = vmul.f32 %v2144, %v2381
        %v2657 = vmul.f32 %v2145, %v2391
        %v2658 = vmul.f32 %v2146, %v2401
        %v2659 = vmul.f32 %v2147, %v2411
        %v2660 = vmul.f32 %v2148, %v2421
        %v2661 = vmul.f32 %v2149, %v2431
        %v2662 = vmul.f32 %v2150, %v2441
        %v2663 = vmul.f32 %v2151, %v2451
        %v2664 = vmul.f32 %v2152, %v2461
        %v2665 = vmul.f32 %v2153, %v2471
        %v2666 = vmul.f32 %v2154, %v2481
        %v2667 = vmul.f32 %v2155, %v2491
        %v2668 = vmul.f32 %v2156, %v2501
        %v2669 = vmul.f32 %v2157, %v2511
        %v2670 = vmul.f32 %v2158, %v2521
        %v2671 = vmul.f32 %v2159, %v2531
        %v2672 = vmul.f32 %v2160, %v2541
        %v2673 = vmul.f32 %v2161, %v2551
        %v2674 = vmul.f32 %v2162, %v2561
        %v2675 = vmul.f32 %v2163, %v2571
        %v2676 = vmul.f32 %v2164, %v2581
        %v2677 = vmul.f32 %v2165, %v2591
        %v2678 = vmul.f32 %v2166, %v2601
        %v2679 = vmul.f32 %v2167, %v2611
        %v2680 = vmul.f32 %v2168, %v2621
        %v2681 = vmul.f32 %v2169, %v2631
        %v2682 = vmul.f32 %v2170, %v2641
        %v2683 = vmul.f32 %v2171, %v2651
        %v2685 = vperm.slane %v2035, 0
        %v2687 = vmul.f32 %v2652, %v2685
        %v2688 = vmul.f32 %v2653, %v2685
        %v2689 = vmul.f32 %v2654, %v2685
        %v2690 = vmul.f32 %v2655, %v2685
        %v2691 = vmul.f32 %v2656, %v2685
        %v2692 = vmul.f32 %v2657, %v2685
        %v2693 = vmul.f32 %v2658, %v2685
        %v2694 = vmul.f32 %v2659, %v2685
        %v2695 = vmul.f32 %v2660, %v2685
        %v2696 = vmul.f32 %v2661, %v2685
        %v2697 = vmul.f32 %v2662, %v2685
        %v2698 = vmul.f32 %v2663, %v2685
        %v2699 = vmul.f32 %v2664, %v2685
        %v2700 = vmul.f32 %v2665, %v2685
        %v2701 = vmul.f32 %v2666, %v2685
        %v2702 = vmul.f32 %v2667, %v2685
        %v2703 = vmul.f32 %v2668, %v2685
        %v2704 = vmul.f32 %v2669, %v2685
        %v2705 = vmul.f32 %v2670, %v2685
        %v2706 = vmul.f32 %v2671, %v2685
        %v2707 = vmul.f32 %v2672, %v2685
        %v2708 = vmul.f32 %v2673, %v2685
        %v2709 = vmul.f32 %v2674, %v2685
        %v2710 = vmul.f32 %v2675, %v2685
        %v2711 = vmul.f32 %v2676, %v2685
        %v2712 = vmul.f32 %v2677, %v2685
        %v2713 = vmul.f32 %v2678, %v2685
        %v2714 = vmul.f32 %v2679, %v2685
        %v2715 = vmul.f32 %v2680, %v2685
        %v2716 = vmul.f32 %v2681, %v2685
        %v2717 = vmul.f32 %v2682, %v2685
        %v2718 = vmul.f32 %v2683, %v2685
        %v2720 = vperm.slane %v2036, 0
        %v2722 = vadd.f32 %v2687, %v2720
        %v2723 = vadd.f32 %v2688, %v2720
        %v2724 = vadd.f32 %v2689, %v2720
        %v2725 = vadd.f32 %v2690, %v2720
        %v2726 = vadd.f32 %v2691, %v2720
        %v2727 = vadd.f32 %v2692, %v2720
        %v2728 = vadd.f32 %v2693, %v2720
        %v2729 = vadd.f32 %v2694, %v2720
        %v2730 = vadd.f32 %v2695, %v2720
        %v2731 = vadd.f32 %v2696, %v2720
        %v2732 = vadd.f32 %v2697, %v2720
        %v2733 = vadd.f32 %v2698, %v2720
        %v2734 = vadd.f32 %v2699, %v2720
        %v2735 = vadd.f32 %v2700, %v2720
        %v2736 = vadd.f32 %v2701, %v2720
        %v2737 = vadd.f32 %v2702, %v2720
        %v2738 = vadd.f32 %v2703, %v2720
        %v2739 = vadd.f32 %v2704, %v2720
        %v2740 = vadd.f32 %v2705, %v2720
        %v2741 = vadd.f32 %v2706, %v2720
        %v2742 = vadd.f32 %v2707, %v2720
        %v2743 = vadd.f32 %v2708, %v2720
        %v2744 = vadd.f32 %v2709, %v2720
        %v2745 = vadd.f32 %v2710, %v2720
        %v2746 = vadd.f32 %v2711, %v2720
        %v2747 = vadd.f32 %v2712, %v2720
        %v2748 = vadd.f32 %v2713, %v2720
        %v2749 = vadd.f32 %v2714, %v2720
        %v2750 = vadd.f32 %v2715, %v2720
        %v2751 = vadd.f32 %v2716, %v2720
        %v2752 = vadd.f32 %v2717, %v2720
        %v2753 = vadd.f32 %v2718, %v2720
        %v2754 = vpack.c.bf16 %v2723, %v2722
        %v2755 = vpack.c.bf16 %v2725, %v2724
        %v2756 = vpack.c.bf16 %v2727, %v2726
        %v2757 = vpack.c.bf16 %v2729, %v2728
        %v2758 = vpack.c.bf16 %v2731, %v2730
        %v2759 = vpack.c.bf16 %v2733, %v2732
        %v2760 = vpack.c.bf16 %v2735, %v2734
        %v2761 = vpack.c.bf16 %v2737, %v2736
        %v2762 = vpack.c.bf16 %v2739, %v2738
        %v2763 = vpack.c.bf16 %v2741, %v2740
        %v2764 = vpack.c.bf16 %v2743, %v2742
        %v2765 = vpack.c.bf16 %v2745, %v2744
        %v2766 = vpack.c.bf16 %v2747, %v2746
        %v2767 = vpack.c.bf16 %v2749, %v2748
        %v2768 = vpack.c.bf16 %v2751, %v2750
        %v2769 = vpack.c.bf16 %v2753, %v2752
        %v2770 = vld [vmem:[#allocation13] sm:$0xff]
        %v2771 = vld [vmem:[#allocation13 + $0x8] sm:$0xff]
        %v2772 = vld [vmem:[#allocation13 + $0x10] sm:$0xff]
        %v2773 = vld [vmem:[#allocation13 + $0x18] sm:$0xff]
        %v2774 = vld [vmem:[#allocation13 + $0x20] sm:$0xff]
        %v2775 = vld [vmem:[#allocation13 + $0x28] sm:$0xff]
        %v2776 = vld [vmem:[#allocation13 + $0x30] sm:$0xff]
        %v2777 = vld [vmem:[#allocation13 + $0x38] sm:$0xff]
        %v2778 = vld [vmem:[#allocation13 + $0x40] sm:$0xff]
        %v2779 = vld [vmem:[#allocation13 + $0x48] sm:$0xff]
        %v2780 = vld [vmem:[#allocation13 + $0x50] sm:$0xff]
        %v2781 = vld [vmem:[#allocation13 + $0x58] sm:$0xff]
        %v2782 = vld [vmem:[#allocation13 + $0x60] sm:$0xff]
        %v2783 = vld [vmem:[#allocation13 + $0x68] sm:$0xff]
        %v2784 = vld [vmem:[#allocation13 + $0x70] sm:$0xff]
        %v2785 = vld [vmem:[#allocation13 + $0x78] sm:$0xff]
        %v2786 = vld [vmem:[#allocation13 + $0x80] sm:$0xff]
        %v2787 = vld [vmem:[#allocation13 + $0x88] sm:$0xff]
        %v2788 = vld [vmem:[#allocation13 + $0x90] sm:$0xff]
        %v2789 = vld [vmem:[#allocation13 + $0x98] sm:$0xff]
        %v2790 = vld [vmem:[#allocation13 + $0xa0] sm:$0xff]
        %v2791 = vld [vmem:[#allocation13 + $0xa8] sm:$0xff]
        %v2792 = vld [vmem:[#allocation13 + $0xb0] sm:$0xff]
        %v2793 = vld [vmem:[#allocation13 + $0xb8] sm:$0xff]
        %v2794 = vld [vmem:[#allocation13 + $0xc0] sm:$0xff]
        %v2795 = vld [vmem:[#allocation13 + $0xc8] sm:$0xff]
        %v2796 = vld [vmem:[#allocation13 + $0xd0] sm:$0xff]
        %v2797 = vld [vmem:[#allocation13 + $0xd8] sm:$0xff]
        %v2798 = vld [vmem:[#allocation13 + $0xe0] sm:$0xff]
        %v2799 = vld [vmem:[#allocation13 + $0xe8] sm:$0xff]
        %v2800 = vld [vmem:[#allocation13 + $0xf0] sm:$0xff]
        %v2801 = vld [vmem:[#allocation13 + $0xf8] sm:$0xff]
        %v2802 = vld [vmem:[%s11] sm:$0xf]
        %v2804 = vperm.slane %v2802, 0
        %v2805 = vperm.slane %v2802, 1
        %v2806 = vperm.slane %v2802, 2
        %v2807 = vperm.slane %v2802, 3
        %v2844 = vunpack.c.l.b16 %v2770
        %v2845 = vunpack.c.h.b16 %v2770
        %v2846 = vunpack.c.l.b16 %v2771
        %v2847 = vunpack.c.h.b16 %v2771
        %v2848 = vunpack.c.l.b16 %v2772
        %v2849 = vunpack.c.h.b16 %v2772
        %v2850 = vunpack.c.l.b16 %v2773
        %v2851 = vunpack.c.h.b16 %v2773
        %v2852 = vunpack.c.l.b16 %v2774
        %v2853 = vunpack.c.h.b16 %v2774
        %v2854 = vunpack.c.l.b16 %v2775
        %v2855 = vunpack.c.h.b16 %v2775
        %v2856 = vunpack.c.l.b16 %v2776
        %v2857 = vunpack.c.h.b16 %v2776
        %v2858 = vunpack.c.l.b16 %v2777
        %v2859 = vunpack.c.h.b16 %v2777
        %v2860 = vunpack.c.l.b16 %v2778
        %v2861 = vunpack.c.h.b16 %v2778
        %v2862 = vunpack.c.l.b16 %v2779
        %v2863 = vunpack.c.h.b16 %v2779
        %v2864 = vunpack.c.l.b16 %v2780
        %v2865 = vunpack.c.h.b16 %v2780
        %v2866 = vunpack.c.l.b16 %v2781
        %v2867 = vunpack.c.h.b16 %v2781
        %v2868 = vunpack.c.l.b16 %v2782
        %v2869 = vunpack.c.h.b16 %v2782
        %v2870 = vunpack.c.l.b16 %v2783
        %v2871 = vunpack.c.h.b16 %v2783
        %v2872 = vunpack.c.l.b16 %v2784
        %v2873 = vunpack.c.h.b16 %v2784
        %v2874 = vunpack.c.l.b16 %v2785
        %v2875 = vunpack.c.h.b16 %v2785
        %v2876 = vunpack.c.l.b16 %v2786
        %v2877 = vunpack.c.h.b16 %v2786
        %v2878 = vunpack.c.l.b16 %v2787
        %v2879 = vunpack.c.h.b16 %v2787
        %v2880 = vunpack.c.l.b16 %v2788
        %v2881 = vunpack.c.h.b16 %v2788
        %v2882 = vunpack.c.l.b16 %v2789
        %v2883 = vunpack.c.h.b16 %v2789
        %v2884 = vunpack.c.l.b16 %v2790
        %v2885 = vunpack.c.h.b16 %v2790
        %v2886 = vunpack.c.l.b16 %v2791
        %v2887 = vunpack.c.h.b16 %v2791
        %v2888 = vunpack.c.l.b16 %v2792
        %v2889 = vunpack.c.h.b16 %v2792
        %v2890 = vunpack.c.l.b16 %v2793
        %v2891 = vunpack.c.h.b16 %v2793
        %v2892 = vunpack.c.l.b16 %v2794
        %v2893 = vunpack.c.h.b16 %v2794
        %v2894 = vunpack.c.l.b16 %v2795
        %v2895 = vunpack.c.h.b16 %v2795
        %v2896 = vunpack.c.l.b16 %v2796
        %v2897 = vunpack.c.h.b16 %v2796
        %v2898 = vunpack.c.l.b16 %v2797
        %v2899 = vunpack.c.h.b16 %v2797
        %v2900 = vunpack.c.l.b16 %v2798
        %v2901 = vunpack.c.h.b16 %v2798
        %v2902 = vunpack.c.l.b16 %v2799
        %v2903 = vunpack.c.h.b16 %v2799
        %v2904 = vunpack.c.l.b16 %v2800
        %v2905 = vunpack.c.h.b16 %v2800
        %v2906 = vunpack.c.l.b16 %v2801
        %v2907 = vunpack.c.h.b16 %v2801
        %v2908 = vpack.c.b16 %v2848, %v2844
        %v2909 = vpack.c.b16 %v2849, %v2845
        %v2910 = vpack.c.b16 %v2850, %v2846
        %v2911 = vpack.c.b16 %v2851, %v2847
        %v2912 = vpack.c.b16 %v2856, %v2852
        %v2913 = vpack.c.b16 %v2857, %v2853
        %v2914 = vpack.c.b16 %v2858, %v2854
        %v2915 = vpack.c.b16 %v2859, %v2855
        %v2916 = vpack.c.b16 %v2864, %v2860
        %v2917 = vpack.c.b16 %v2865, %v2861
        %v2918 = vpack.c.b16 %v2866, %v2862
        %v2919 = vpack.c.b16 %v2867, %v2863
        %v2920 = vpack.c.b16 %v2872, %v2868
        %v2921 = vpack.c.b16 %v2873, %v2869
        %v2922 = vpack.c.b16 %v2874, %v2870
        %v2923 = vpack.c.b16 %v2875, %v2871
        %v2924 = vpack.c.b16 %v2880, %v2876
        %v2925 = vpack.c.b16 %v2881, %v2877
        %v2926 = vpack.c.b16 %v2882, %v2878
        %v2927 = vpack.c.b16 %v2883, %v2879
        %v2928 = vpack.c.b16 %v2888, %v2884
        %v2929 = vpack.c.b16 %v2889, %v2885
        %v2930 = vpack.c.b16 %v2890, %v2886
        %v2931 = vpack.c.b16 %v2891, %v2887
        %v2932 = vpack.c.b16 %v2896, %v2892
        %v2933 = vpack.c.b16 %v2897, %v2893
        %v2934 = vpack.c.b16 %v2898, %v2894
        %v2935 = vpack.c.b16 %v2899, %v2895
        %v2936 = vpack.c.b16 %v2904, %v2900
        %v2937 = vpack.c.b16 %v2905, %v2901
        %v2938 = vpack.c.b16 %v2906, %v2902
        %v2939 = vpack.c.b16 %v2907, %v2903
        %2972 = vmatpush.bf16.msra.mxu0 %v2936
        %2973 = vmatpush.bf16.msra.mxu0 %v2932
        %2974 = vmatpush.bf16.msra.mxu0 %v2928
        %2975 = vmatpush.bf16.msra.mxu0 %v2924
        %2976 = vmatpush.bf16.msra.mxu0 %v2920
        %2977 = vmatpush.bf16.msra.mxu0 %v2916
        %2978 = vmatpush.bf16.msra.mxu0 %v2912
        %2979 = vmatpush.bf16.msra.mxu0 %v2908
        %2980 = vmatmul.bf16.gmra.mxu0 %v2754
        %v2981 = vpop.f32.mrf.mxu0
        %v2982 = vadd.f32 %v2804, %v2981
        %v2983 = vpop.f32.mrf.mxu0
        %v2984 = vadd.f32 %v2804, %v2983
        %2985 = vmatmul.bf16.gmra.mxu0 %v2755
        %v2986 = vpop.f32.mrf.mxu0
        %v2987 = vadd.f32 %v2804, %v2986
        %v2988 = vpop.f32.mrf.mxu0
        %v2989 = vadd.f32 %v2804, %v2988
        %2990 = vmatmul.bf16.gmra.mxu0 %v2756
        %v2991 = vpop.f32.mrf.mxu0
        %v2992 = vadd.f32 %v2804, %v2991
        %v2993 = vpop.f32.mrf.mxu0
        %v2994 = vadd.f32 %v2804, %v2993
        %2995 = vmatmul.bf16.gmra.mxu0 %v2757
        %v2996 = vpop.f32.mrf.mxu0
        %v2997 = vadd.f32 %v2804, %v2996
        %v2998 = vpop.f32.mrf.mxu0
        %v2999 = vadd.f32 %v2804, %v2998
        %3000 = vmatmul.bf16.gmra.mxu0 %v2758
        %v3001 = vpop.f32.mrf.mxu0
        %v3002 = vadd.f32 %v2804, %v3001
        %v3003 = vpop.f32.mrf.mxu0
        %v3004 = vadd.f32 %v2804, %v3003
        %3005 = vmatmul.bf16.gmra.mxu0 %v2759
        %v3006 = vpop.f32.mrf.mxu0
        %v3007 = vadd.f32 %v2804, %v3006
        %v3008 = vpop.f32.mrf.mxu0
        %v3009 = vadd.f32 %v2804, %v3008
        %3010 = vmatmul.bf16.gmra.mxu0 %v2760
        %v3011 = vpop.f32.mrf.mxu0
        %v3012 = vadd.f32 %v2804, %v3011
        %v3013 = vpop.f32.mrf.mxu0
        %v3014 = vadd.f32 %v2804, %v3013
        %3015 = vmatmul.bf16.gmra.mxu0 %v2761
        %v3016 = vpop.f32.mrf.mxu0
        %v3017 = vadd.f32 %v2804, %v3016
        %v3018 = vpop.f32.mrf.mxu0
        %v3019 = vadd.f32 %v2804, %v3018
        %3020 = vmatmul.bf16.gmra.mxu0 %v2762
        %v3021 = vpop.f32.mrf.mxu0
        %v3022 = vadd.f32 %v2804, %v3021
        %v3023 = vpop.f32.mrf.mxu0
        %v3024 = vadd.f32 %v2804, %v3023
        %3025 = vmatmul.bf16.gmra.mxu0 %v2763
        %v3026 = vpop.f32.mrf.mxu0
        %v3027 = vadd.f32 %v2804, %v3026
        %v3028 = vpop.f32.mrf.mxu0
        %v3029 = vadd.f32 %v2804, %v3028
        %3030 = vmatmul.bf16.gmra.mxu0 %v2764
        %v3031 = vpop.f32.mrf.mxu0
        %v3032 = vadd.f32 %v2804, %v3031
        %v3033 = vpop.f32.mrf.mxu0
        %v3034 = vadd.f32 %v2804, %v3033
        %3035 = vmatmul.bf16.gmra.mxu0 %v2765
        %v3036 = vpop.f32.mrf.mxu0
        %v3037 = vadd.f32 %v2804, %v3036
        %v3038 = vpop.f32.mrf.mxu0
        %v3039 = vadd.f32 %v2804, %v3038
        %3040 = vmatmul.bf16.gmra.mxu0 %v2766
        %v3041 = vpop.f32.mrf.mxu0
        %v3042 = vadd.f32 %v2804, %v3041
        %v3043 = vpop.f32.mrf.mxu0
        %v3044 = vadd.f32 %v2804, %v3043
        %3045 = vmatmul.bf16.gmra.mxu0 %v2767
        %v3046 = vpop.f32.mrf.mxu0
        %v3047 = vadd.f32 %v2804, %v3046
        %v3048 = vpop.f32.mrf.mxu0
        %v3049 = vadd.f32 %v2804, %v3048
        %3050 = vmatmul.bf16.gmra.mxu0 %v2768
        %v3051 = vpop.f32.mrf.mxu0
        %v3052 = vadd.f32 %v2804, %v3051
        %v3053 = vpop.f32.mrf.mxu0
        %v3054 = vadd.f32 %v2804, %v3053
        %3055 = vmatmul.bf16.gmra.mxu0 %v2769
        %v3056 = vpop.f32.mrf.mxu0
        %v3057 = vadd.f32 %v2804, %v3056
        %v3058 = vpop.f32.mrf.mxu0
        %v3059 = vadd.f32 %v2804, %v3058
        %3060 = vdwg.mxu0
        %3061 = vmatpush.bf16.msra.mxu0 %v2937
        %3062 = vmatpush.bf16.msra.mxu0 %v2933
        %3063 = vmatpush.bf16.msra.mxu0 %v2929
        %3064 = vmatpush.bf16.msra.mxu0 %v2925
        %3065 = vmatpush.bf16.msra.mxu0 %v2921
        %3066 = vmatpush.bf16.msra.mxu0 %v2917
        %3067 = vmatpush.bf16.msra.mxu0 %v2913
        %3068 = vmatpush.bf16.msra.mxu0 %v2909
        %3069 = vmatmul.bf16.gmra.mxu0 %v2754
        %v3070 = vpop.f32.mrf.mxu0
        %v3071 = vadd.f32 %v2805, %v3070
        %v3072 = vpop.f32.mrf.mxu0
        %v3073 = vadd.f32 %v2805, %v3072
        %3074 = vmatmul.bf16.gmra.mxu0 %v2755
        %v3075 = vpop.f32.mrf.mxu0
        %v3076 = vadd.f32 %v2805, %v3075
        %v3077 = vpop.f32.mrf.mxu0
        %v3078 = vadd.f32 %v2805, %v3077
        %3079 = vmatmul.bf16.gmra.mxu0 %v2756
        %v3080 = vpop.f32.mrf.mxu0
        %v3081 = vadd.f32 %v2805, %v3080
        %v3082 = vpop.f32.mrf.mxu0
        %v3083 = vadd.f32 %v2805, %v3082
        %3084 = vmatmul.bf16.gmra.mxu0 %v2757
        %v3085 = vpop.f32.mrf.mxu0
        %v3086 = vadd.f32 %v2805, %v3085
        %v3087 = vpop.f32.mrf.mxu0
        %v3088 = vadd.f32 %v2805, %v3087
        %3089 = vmatmul.bf16.gmra.mxu0 %v2758
        %v3090 = vpop.f32.mrf.mxu0
        %v3091 = vadd.f32 %v2805, %v3090
        %v3092 = vpop.f32.mrf.mxu0
        %v3093 = vadd.f32 %v2805, %v3092
        %3094 = vmatmul.bf16.gmra.mxu0 %v2759
        %v3095 = vpop.f32.mrf.mxu0
        %v3096 = vadd.f32 %v2805, %v3095
        %v3097 = vpop.f32.mrf.mxu0
        %v3098 = vadd.f32 %v2805, %v3097
        %3099 = vmatmul.bf16.gmra.mxu0 %v2760
        %v3100 = vpop.f32.mrf.mxu0
        %v3101 = vadd.f32 %v2805, %v3100
        %v3102 = vpop.f32.mrf.mxu0
        %v3103 = vadd.f32 %v2805, %v3102
        %3104 = vmatmul.bf16.gmra.mxu0 %v2761
        %v3105 = vpop.f32.mrf.mxu0
        %v3106 = vadd.f32 %v2805, %v3105
        %v3107 = vpop.f32.mrf.mxu0
        %v3108 = vadd.f32 %v2805, %v3107
        %3109 = vmatmul.bf16.gmra.mxu0 %v2762
        %v3110 = vpop.f32.mrf.mxu0
        %v3111 = vadd.f32 %v2805, %v3110
        %v3112 = vpop.f32.mrf.mxu0
        %v3113 = vadd.f32 %v2805, %v3112
        %3114 = vmatmul.bf16.gmra.mxu0 %v2763
        %v3115 = vpop.f32.mrf.mxu0
        %v3116 = vadd.f32 %v2805, %v3115
        %v3117 = vpop.f32.mrf.mxu0
        %v3118 = vadd.f32 %v2805, %v3117
        %3119 = vmatmul.bf16.gmra.mxu0 %v2764
        %v3120 = vpop.f32.mrf.mxu0
        %v3121 = vadd.f32 %v2805, %v3120
        %v3122 = vpop.f32.mrf.mxu0
        %v3123 = vadd.f32 %v2805, %v3122
        %3124 = vmatmul.bf16.gmra.mxu0 %v2765
        %v3125 = vpop.f32.mrf.mxu0
        %v3126 = vadd.f32 %v2805, %v3125
        %v3127 = vpop.f32.mrf.mxu0
        %v3128 = vadd.f32 %v2805, %v3127
        %3129 = vmatmul.bf16.gmra.mxu0 %v2766
        %v3130 = vpop.f32.mrf.mxu0
        %v3131 = vadd.f32 %v2805, %v3130
        %v3132 = vpop.f32.mrf.mxu0
        %v3133 = vadd.f32 %v2805, %v3132
        %3134 = vmatmul.bf16.gmra.mxu0 %v2767
        %v3135 = vpop.f32.mrf.mxu0
        %v3136 = vadd.f32 %v2805, %v3135
        %v3137 = vpop.f32.mrf.mxu0
        %v3138 = vadd.f32 %v2805, %v3137
        %3139 = vmatmul.bf16.gmra.mxu0 %v2768
        %v3140 = vpop.f32.mrf.mxu0
        %v3141 = vadd.f32 %v2805, %v3140
        %v3142 = vpop.f32.mrf.mxu0
        %v3143 = vadd.f32 %v2805, %v3142
        %3144 = vmatmul.bf16.gmra.mxu0 %v2769
        %v3145 = vpop.f32.mrf.mxu0
        %v3146 = vadd.f32 %v2805, %v3145
        %v3147 = vpop.f32.mrf.mxu0
        %v3148 = vadd.f32 %v2805, %v3147
        %3149 = vdwg.mxu0
        %3150 = vmatpush.bf16.msra.mxu0 %v2938
        %3151 = vmatpush.bf16.msra.mxu0 %v2934
        %3152 = vmatpush.bf16.msra.mxu0 %v2930
        %3153 = vmatpush.bf16.msra.mxu0 %v2926
        %3154 = vmatpush.bf16.msra.mxu0 %v2922
        %3155 = vmatpush.bf16.msra.mxu0 %v2918
        %3156 = vmatpush.bf16.msra.mxu0 %v2914
        %3157 = vmatpush.bf16.msra.mxu0 %v2910
        %3158 = vmatmul.bf16.gmra.mxu0 %v2754
        %v3159 = vpop.f32.mrf.mxu0
        %v3160 = vadd.f32 %v2806, %v3159
        %v3161 = vpop.f32.mrf.mxu0
        %v3162 = vadd.f32 %v2806, %v3161
        %3163 = vmatmul.bf16.gmra.mxu0 %v2755
        %v3164 = vpop.f32.mrf.mxu0
        %v3165 = vadd.f32 %v2806, %v3164
        %v3166 = vpop.f32.mrf.mxu0
        %v3167 = vadd.f32 %v2806, %v3166
        %3168 = vmatmul.bf16.gmra.mxu0 %v2756
        %v3169 = vpop.f32.mrf.mxu0
        %v3170 = vadd.f32 %v2806, %v3169
        %v3171 = vpop.f32.mrf.mxu0
        %v3172 = vadd.f32 %v2806, %v3171
        %3173 = vmatmul.bf16.gmra.mxu0 %v2757
        %v3174 = vpop.f32.mrf.mxu0
        %v3175 = vadd.f32 %v2806, %v3174
        %v3176 = vpop.f32.mrf.mxu0
        %v3177 = vadd.f32 %v2806, %v3176
        %3178 = vmatmul.bf16.gmra.mxu0 %v2758
        %v3179 = vpop.f32.mrf.mxu0
        %v3180 = vadd.f32 %v2806, %v3179
        %v3181 = vpop.f32.mrf.mxu0
        %v3182 = vadd.f32 %v2806, %v3181
        %3183 = vmatmul.bf16.gmra.mxu0 %v2759
        %v3184 = vpop.f32.mrf.mxu0
        %v3185 = vadd.f32 %v2806, %v3184
        %v3186 = vpop.f32.mrf.mxu0
        %v3187 = vadd.f32 %v2806, %v3186
        %3188 = vmatmul.bf16.gmra.mxu0 %v2760
        %v3189 = vpop.f32.mrf.mxu0
        %v3190 = vadd.f32 %v2806, %v3189
        %v3191 = vpop.f32.mrf.mxu0
        %v3192 = vadd.f32 %v2806, %v3191
        %3193 = vmatmul.bf16.gmra.mxu0 %v2761
        %v3194 = vpop.f32.mrf.mxu0
        %v3195 = vadd.f32 %v2806, %v3194
        %v3196 = vpop.f32.mrf.mxu0
        %v3197 = vadd.f32 %v2806, %v3196
        %3198 = vmatmul.bf16.gmra.mxu0 %v2762
        %v3199 = vpop.f32.mrf.mxu0
        %v3200 = vadd.f32 %v2806, %v3199
        %v3201 = vpop.f32.mrf.mxu0
        %v3202 = vadd.f32 %v2806, %v3201
        %3203 = vmatmul.bf16.gmra.mxu0 %v2763
        %v3204 = vpop.f32.mrf.mxu0
        %v3205 = vadd.f32 %v2806, %v3204
        %v3206 = vpop.f32.mrf.mxu0
        %v3207 = vadd.f32 %v2806, %v3206
        %3208 = vmatmul.bf16.gmra.mxu0 %v2764
        %v3209 = vpop.f32.mrf.mxu0
        %v3210 = vadd.f32 %v2806, %v3209
        %v3211 = vpop.f32.mrf.mxu0
        %v3212 = vadd.f32 %v2806, %v3211
        %3213 = vmatmul.bf16.gmra.mxu0 %v2765
        %v3214 = vpop.f32.mrf.mxu0
        %v3215 = vadd.f32 %v2806, %v3214
        %v3216 = vpop.f32.mrf.mxu0
        %v3217 = vadd.f32 %v2806, %v3216
        %3218 = vmatmul.bf16.gmra.mxu0 %v2766
        %v3219 = vpop.f32.mrf.mxu0
        %v3220 = vadd.f32 %v2806, %v3219
        %v3221 = vpop.f32.mrf.mxu0
        %v3222 = vadd.f32 %v2806, %v3221
        %3223 = vmatmul.bf16.gmra.mxu0 %v2767
        %v3224 = vpop.f32.mrf.mxu0
        %v3225 = vadd.f32 %v2806, %v3224
        %v3226 = vpop.f32.mrf.mxu0
        %v3227 = vadd.f32 %v2806, %v3226
        %3228 = vmatmul.bf16.gmra.mxu0 %v2768
        %v3229 = vpop.f32.mrf.mxu0
        %v3230 = vadd.f32 %v2806, %v3229
        %v3231 = vpop.f32.mrf.mxu0
        %v3232 = vadd.f32 %v2806, %v3231
        %3233 = vmatmul.bf16.gmra.mxu0 %v2769
        %v3234 = vpop.f32.mrf.mxu0
        %v3235 = vadd.f32 %v2806, %v3234
        %v3236 = vpop.f32.mrf.mxu0
        %v3237 = vadd.f32 %v2806, %v3236
        %3238 = vdwg.mxu0
        %3239 = vmatpush.bf16.msra.mxu0 %v2939
        %3240 = vmatpush.bf16.msra.mxu0 %v2935
        %3241 = vmatpush.bf16.msra.mxu0 %v2931
        %3242 = vmatpush.bf16.msra.mxu0 %v2927
        %3243 = vmatpush.bf16.msra.mxu0 %v2923
        %3244 = vmatpush.bf16.msra.mxu0 %v2919
        %3245 = vmatpush.bf16.msra.mxu0 %v2915
        %3246 = vmatpush.bf16.msra.mxu0 %v2911
        %3247 = vmatmul.bf16.gmra.mxu0 %v2754
        %v3248 = vpop.f32.mrf.mxu0
        %v3249 = vadd.f32 %v2807, %v3248
        %v3250 = vpop.f32.mrf.mxu0
        %v3251 = vadd.f32 %v2807, %v3250
        %3252 = vmatmul.bf16.gmra.mxu0 %v2755
        %v3253 = vpop.f32.mrf.mxu0
        %v3254 = vadd.f32 %v2807, %v3253
        %v3255 = vpop.f32.mrf.mxu0
        %v3256 = vadd.f32 %v2807, %v3255
        %3257 = vmatmul.bf16.gmra.mxu0 %v2756
        %v3258 = vpop.f32.mrf.mxu0
        %v3259 = vadd.f32 %v2807, %v3258
        %v3260 = vpop.f32.mrf.mxu0
        %v3261 = vadd.f32 %v2807, %v3260
        %3262 = vmatmul.bf16.gmra.mxu0 %v2757
        %v3263 = vpop.f32.mrf.mxu0
        %v3264 = vadd.f32 %v2807, %v3263
        %v3265 = vpop.f32.mrf.mxu0
        %v3266 = vadd.f32 %v2807, %v3265
        %3267 = vmatmul.bf16.gmra.mxu0 %v2758
        %v3268 = vpop.f32.mrf.mxu0
        %v3269 = vadd.f32 %v2807, %v3268
        %v3270 = vpop.f32.mrf.mxu0
        %v3271 = vadd.f32 %v2807, %v3270
        %3272 = vmatmul.bf16.gmra.mxu0 %v2759
        %v3273 = vpop.f32.mrf.mxu0
        %v3274 = vadd.f32 %v2807, %v3273
        %v3275 = vpop.f32.mrf.mxu0
        %v3276 = vadd.f32 %v2807, %v3275
        %3277 = vmatmul.bf16.gmra.mxu0 %v2760
        %v3278 = vpop.f32.mrf.mxu0
        %v3279 = vadd.f32 %v2807, %v3278
        %v3280 = vpop.f32.mrf.mxu0
        %v3281 = vadd.f32 %v2807, %v3280
        %3282 = vmatmul.bf16.gmra.mxu0 %v2761
        %v3283 = vpop.f32.mrf.mxu0
        %v3284 = vadd.f32 %v2807, %v3283
        %v3285 = vpop.f32.mrf.mxu0
        %v3286 = vadd.f32 %v2807, %v3285
        %3287 = vmatmul.bf16.gmra.mxu0 %v2762
        %v3288 = vpop.f32.mrf.mxu0
        %v3289 = vadd.f32 %v2807, %v3288
        %v3290 = vpop.f32.mrf.mxu0
        %v3291 = vadd.f32 %v2807, %v3290
        %3292 = vmatmul.bf16.gmra.mxu0 %v2763
        %v3293 = vpop.f32.mrf.mxu0
        %v3294 = vadd.f32 %v2807, %v3293
        %v3295 = vpop.f32.mrf.mxu0
        %v3296 = vadd.f32 %v2807, %v3295
        %3297 = vmatmul.bf16.gmra.mxu0 %v2764
        %v3298 = vpop.f32.mrf.mxu0
        %v3299 = vadd.f32 %v2807, %v3298
        %v3300 = vpop.f32.mrf.mxu0
        %v3301 = vadd.f32 %v2807, %v3300
        %3302 = vmatmul.bf16.gmra.mxu0 %v2765
        %v3303 = vpop.f32.mrf.mxu0
        %v3304 = vadd.f32 %v2807, %v3303
        %v3305 = vpop.f32.mrf.mxu0
        %v3306 = vadd.f32 %v2807, %v3305
        %3307 = vmatmul.bf16.gmra.mxu0 %v2766
        %v3308 = vpop.f32.mrf.mxu0
        %v3309 = vadd.f32 %v2807, %v3308
        %v3310 = vpop.f32.mrf.mxu0
        %v3311 = vadd.f32 %v2807, %v3310
        %3312 = vmatmul.bf16.gmra.mxu0 %v2767
        %v3313 = vpop.f32.mrf.mxu0
        %v3314 = vadd.f32 %v2807, %v3313
        %v3315 = vpop.f32.mrf.mxu0
        %v3316 = vadd.f32 %v2807, %v3315
        %3317 = vmatmul.bf16.gmra.mxu0 %v2768
        %v3318 = vpop.f32.mrf.mxu0
        %v3319 = vadd.f32 %v2807, %v3318
        %v3320 = vpop.f32.mrf.mxu0
        %v3321 = vadd.f32 %v2807, %v3320
        %3322 = vmatmul.bf16.gmra.mxu0 %v2769
        %v3323 = vpop.f32.mrf.mxu0
        %v3324 = vadd.f32 %v2807, %v3323
        %v3325 = vpop.f32.mrf.mxu0
        %v3326 = vadd.f32 %v2807, %v3325
        %3327 = vdwg.mxu0
        %v3328 = vmax.f32 %v2982, 0.0
        %v3329 = vmax.f32 %v3071, 0.0
        %v3330 = vmax.f32 %v3160, 0.0
        %v3331 = vmax.f32 %v3249, 0.0
        %v3332 = vmax.f32 %v2984, 0.0
        %v3333 = vmax.f32 %v3073, 0.0
        %v3334 = vmax.f32 %v3162, 0.0
        %v3335 = vmax.f32 %v3251, 0.0
        %v3336 = vmax.f32 %v2987, 0.0
        %v3337 = vmax.f32 %v3076, 0.0
        %v3338 = vmax.f32 %v3165, 0.0
        %v3339 = vmax.f32 %v3254, 0.0
        %v3340 = vmax.f32 %v2989, 0.0
        %v3341 = vmax.f32 %v3078, 0.0
        %v3342 = vmax.f32 %v3167, 0.0
        %v3343 = vmax.f32 %v3256, 0.0
        %v3344 = vmax.f32 %v2992, 0.0
        %v3345 = vmax.f32 %v3081, 0.0
        %v3346 = vmax.f32 %v3170, 0.0
        %v3347 = vmax.f32 %v3259, 0.0
        %v3348 = vmax.f32 %v2994, 0.0
        %v3349 = vmax.f32 %v3083, 0.0
        %v3350 = vmax.f32 %v3172, 0.0
        %v3351 = vmax.f32 %v3261, 0.0
        %v3352 = vmax.f32 %v2997, 0.0
        %v3353 = vmax.f32 %v3086, 0.0
        %v3354 = vmax.f32 %v3175, 0.0
        %v3355 = vmax.f32 %v3264, 0.0
        %v3356 = vmax.f32 %v2999, 0.0
        %v3357 = vmax.f32 %v3088, 0.0
        %v3358 = vmax.f32 %v3177, 0.0
        %v3359 = vmax.f32 %v3266, 0.0
        %v3360 = vmax.f32 %v3002, 0.0
        %v3361 = vmax.f32 %v3091, 0.0
        %v3362 = vmax.f32 %v3180, 0.0
        %v3363 = vmax.f32 %v3269, 0.0
        %v3364 = vmax.f32 %v3004, 0.0
        %v3365 = vmax.f32 %v3093, 0.0
        %v3366 = vmax.f32 %v3182, 0.0
        %v3367 = vmax.f32 %v3271, 0.0
        %v3368 = vmax.f32 %v3007, 0.0
        %v3369 = vmax.f32 %v3096, 0.0
        %v3370 = vmax.f32 %v3185, 0.0
        %v3371 = vmax.f32 %v3274, 0.0
        %v3372 = vmax.f32 %v3009, 0.0
        %v3373 = vmax.f32 %v3098, 0.0
        %v3374 = vmax.f32 %v3187, 0.0
        %v3375 = vmax.f32 %v3276, 0.0
        %v3376 = vmax.f32 %v3012, 0.0
        %v3377 = vmax.f32 %v3101, 0.0
        %v3378 = vmax.f32 %v3190, 0.0
        %v3379 = vmax.f32 %v3279, 0.0
        %v3380 = vmax.f32 %v3014, 0.0
        %v3381 = vmax.f32 %v3103, 0.0
        %v3382 = vmax.f32 %v3192, 0.0
        %v3383 = vmax.f32 %v3281, 0.0
        %v3384 = vmax.f32 %v3017, 0.0
        %v3385 = vmax.f32 %v3106, 0.0
        %v3386 = vmax.f32 %v3195, 0.0
        %v3387 = vmax.f32 %v3284, 0.0
        %v3388 = vmax.f32 %v3019, 0.0
        %v3389 = vmax.f32 %v3108, 0.0
        %v3390 = vmax.f32 %v3197, 0.0
        %v3391 = vmax.f32 %v3286, 0.0
        %v3392 = vmax.f32 %v3022, 0.0
        %v3393 = vmax.f32 %v3111, 0.0
        %v3394 = vmax.f32 %v3200, 0.0
        %v3395 = vmax.f32 %v3289, 0.0
        %v3396 = vmax.f32 %v3024, 0.0
        %v3397 = vmax.f32 %v3113, 0.0
        %v3398 = vmax.f32 %v3202, 0.0
        %v3399 = vmax.f32 %v3291, 0.0
        %v3400 = vmax.f32 %v3027, 0.0
        %v3401 = vmax.f32 %v3116, 0.0
        %v3402 = vmax.f32 %v3205, 0.0
        %v3403 = vmax.f32 %v3294, 0.0
        %v3404 = vmax.f32 %v3029, 0.0
        %v3405 = vmax.f32 %v3118, 0.0
        %v3406 = vmax.f32 %v3207, 0.0
        %v3407 = vmax.f32 %v3296, 0.0
        %v3408 = vmax.f32 %v3032, 0.0
        %v3409 = vmax.f32 %v3121, 0.0
        %v3410 = vmax.f32 %v3210, 0.0
        %v3411 = vmax.f32 %v3299, 0.0
        %v3412 = vmax.f32 %v3034, 0.0
        %v3413 = vmax.f32 %v3123, 0.0
        %v3414 = vmax.f32 %v3212, 0.0
        %v3415 = vmax.f32 %v3301, 0.0
        %v3416 = vmax.f32 %v3037, 0.0
        %v3417 = vmax.f32 %v3126, 0.0
        %v3418 = vmax.f32 %v3215, 0.0
        %v3419 = vmax.f32 %v3304, 0.0
        %v3420 = vmax.f32 %v3039, 0.0
        %v3421 = vmax.f32 %v3128, 0.0
        %v3422 = vmax.f32 %v3217, 0.0
        %v3423 = vmax.f32 %v3306, 0.0
        %v3424 = vmax.f32 %v3042, 0.0
        %v3425 = vmax.f32 %v3131, 0.0
        %v3426 = vmax.f32 %v3220, 0.0
        %v3427 = vmax.f32 %v3309, 0.0
        %v3428 = vmax.f32 %v3044, 0.0
        %v3429 = vmax.f32 %v3133, 0.0
        %v3430 = vmax.f32 %v3222, 0.0
        %v3431 = vmax.f32 %v3311, 0.0
        %v3432 = vmax.f32 %v3047, 0.0
        %v3433 = vmax.f32 %v3136, 0.0
        %v3434 = vmax.f32 %v3225, 0.0
        %v3435 = vmax.f32 %v3314, 0.0
        %v3436 = vmax.f32 %v3049, 0.0
        %v3437 = vmax.f32 %v3138, 0.0
        %v3438 = vmax.f32 %v3227, 0.0
        %v3439 = vmax.f32 %v3316, 0.0
        %v3440 = vmax.f32 %v3052, 0.0
        %v3441 = vmax.f32 %v3141, 0.0
        %v3442 = vmax.f32 %v3230, 0.0
        %v3443 = vmax.f32 %v3319, 0.0
        %v3444 = vmax.f32 %v3054, 0.0
        %v3445 = vmax.f32 %v3143, 0.0
        %v3446 = vmax.f32 %v3232, 0.0
        %v3447 = vmax.f32 %v3321, 0.0
        %v3448 = vmax.f32 %v3057, 0.0
        %v3449 = vmax.f32 %v3146, 0.0
        %v3450 = vmax.f32 %v3235, 0.0
        %v3451 = vmax.f32 %v3324, 0.0
        %v3452 = vmax.f32 %v3059, 0.0
        %v3453 = vmax.f32 %v3148, 0.0
        %v3454 = vmax.f32 %v3237, 0.0
        %v3455 = vmax.f32 %v3326, 0.0
        %v3456 = vpack.c.bf16 %v3332, %v3328
        %v3457 = vpack.c.bf16 %v3333, %v3329
        %v3458 = vpack.c.bf16 %v3334, %v3330
        %v3459 = vpack.c.bf16 %v3335, %v3331
        %v3460 = vpack.c.bf16 %v3340, %v3336
        %v3461 = vpack.c.bf16 %v3341, %v3337
        %v3462 = vpack.c.bf16 %v3342, %v3338
        %v3463 = vpack.c.bf16 %v3343, %v3339
        %v3464 = vpack.c.bf16 %v3348, %v3344
        %v3465 = vpack.c.bf16 %v3349, %v3345
        %v3466 = vpack.c.bf16 %v3350, %v3346
        %v3467 = vpack.c.bf16 %v3351, %v3347
        %v3468 = vpack.c.bf16 %v3356, %v3352
        %v3469 = vpack.c.bf16 %v3357, %v3353
        %v3470 = vpack.c.bf16 %v3358, %v3354
        %v3471 = vpack.c.bf16 %v3359, %v3355
        %v3472 = vpack.c.bf16 %v3364, %v3360
        %v3473 = vpack.c.bf16 %v3365, %v3361
        %v3474 = vpack.c.bf16 %v3366, %v3362
        %v3475 = vpack.c.bf16 %v3367, %v3363
        %v3476 = vpack.c.bf16 %v3372, %v3368
        %v3477 = vpack.c.bf16 %v3373, %v3369
        %v3478 = vpack.c.bf16 %v3374, %v3370
        %v3479 = vpack.c.bf16 %v3375, %v3371
        %v3480 = vpack.c.bf16 %v3380, %v3376
        %v3481 = vpack.c.bf16 %v3381, %v3377
        %v3482 = vpack.c.bf16 %v3382, %v3378
        %v3483 = vpack.c.bf16 %v3383, %v3379
        %v3484 = vpack.c.bf16 %v3388, %v3384
        %v3485 = vpack.c.bf16 %v3389, %v3385
        %v3486 = vpack.c.bf16 %v3390, %v3386
        %v3487 = vpack.c.bf16 %v3391, %v3387
        %v3488 = vpack.c.bf16 %v3396, %v3392
        %v3489 = vpack.c.bf16 %v3397, %v3393
        %v3490 = vpack.c.bf16 %v3398, %v3394
        %v3491 = vpack.c.bf16 %v3399, %v3395
        %v3492 = vpack.c.bf16 %v3404, %v3400
        %v3493 = vpack.c.bf16 %v3405, %v3401
        %v3494 = vpack.c.bf16 %v3406, %v3402
        %v3495 = vpack.c.bf16 %v3407, %v3403
        %v3496 = vpack.c.bf16 %v3412, %v3408
        %v3497 = vpack.c.bf16 %v3413, %v3409
        %v3498 = vpack.c.bf16 %v3414, %v3410
        %v3499 = vpack.c.bf16 %v3415, %v3411
        %v3500 = vpack.c.bf16 %v3420, %v3416
        %v3501 = vpack.c.bf16 %v3421, %v3417
        %v3502 = vpack.c.bf16 %v3422, %v3418
        %v3503 = vpack.c.bf16 %v3423, %v3419
        %v3504 = vpack.c.bf16 %v3428, %v3424
        %v3505 = vpack.c.bf16 %v3429, %v3425
        %v3506 = vpack.c.bf16 %v3430, %v3426
        %v3507 = vpack.c.bf16 %v3431, %v3427
        %v3508 = vpack.c.bf16 %v3436, %v3432
        %v3509 = vpack.c.bf16 %v3437, %v3433
        %v3510 = vpack.c.bf16 %v3438, %v3434
        %v3511 = vpack.c.bf16 %v3439, %v3435
        %v3512 = vpack.c.bf16 %v3444, %v3440
        %v3513 = vpack.c.bf16 %v3445, %v3441
        %v3514 = vpack.c.bf16 %v3446, %v3442
        %v3515 = vpack.c.bf16 %v3447, %v3443
        %v3516 = vpack.c.bf16 %v3452, %v3448
        %v3517 = vpack.c.bf16 %v3453, %v3449
        %v3518 = vpack.c.bf16 %v3454, %v3450
        %v3519 = vpack.c.bf16 %v3455, %v3451
        %v3520 = vld [vmem:[#allocation14] sm:$0xf]
        %v3521 = vld [vmem:[#allocation14 + $0x4] sm:$0xf]
        %v3522 = vld [vmem:[#allocation14 + $0x8] sm:$0xf]
        %v3523 = vld [vmem:[#allocation14 + $0xc] sm:$0xf]
        %v3524 = vld [vmem:[#allocation14 + $0x10] sm:$0xf]
        %v3525 = vld [vmem:[#allocation14 + $0x14] sm:$0xf]
        %v3526 = vld [vmem:[#allocation14 + $0x18] sm:$0xf]
        %v3527 = vld [vmem:[#allocation14 + $0x1c] sm:$0xf]
        %v3528 = vld [vmem:[#allocation14 + $0x20] sm:$0xf]
        %v3529 = vld [vmem:[#allocation14 + $0x24] sm:$0xf]
        %v3530 = vld [vmem:[#allocation14 + $0x28] sm:$0xf]
        %v3531 = vld [vmem:[#allocation14 + $0x2c] sm:$0xf]
        %v3532 = vld [vmem:[#allocation14 + $0x30] sm:$0xf]
        %v3533 = vld [vmem:[#allocation14 + $0x34] sm:$0xf]
        %v3534 = vld [vmem:[#allocation14 + $0x38] sm:$0xf]
        %v3535 = vld [vmem:[#allocation14 + $0x3c] sm:$0xf]
        %v3536 = vld [vmem:[#allocation14 + $0x40] sm:$0xf]
        %v3537 = vld [vmem:[#allocation14 + $0x44] sm:$0xf]
        %v3538 = vld [vmem:[#allocation14 + $0x48] sm:$0xf]
        %v3539 = vld [vmem:[#allocation14 + $0x4c] sm:$0xf]
        %v3540 = vld [vmem:[#allocation14 + $0x50] sm:$0xf]
        %v3541 = vld [vmem:[#allocation14 + $0x54] sm:$0xf]
        %v3542 = vld [vmem:[#allocation14 + $0x58] sm:$0xf]
        %v3543 = vld [vmem:[#allocation14 + $0x5c] sm:$0xf]
        %v3544 = vld [vmem:[#allocation14 + $0x60] sm:$0xf]
        %v3545 = vld [vmem:[#allocation14 + $0x64] sm:$0xf]
        %v3546 = vld [vmem:[#allocation14 + $0x68] sm:$0xf]
        %v3547 = vld [vmem:[#allocation14 + $0x6c] sm:$0xf]
        %v3548 = vld [vmem:[#allocation14 + $0x70] sm:$0xf]
        %v3549 = vld [vmem:[#allocation14 + $0x74] sm:$0xf]
        %v3550 = vld [vmem:[#allocation14 + $0x78] sm:$0xf]
        %v3551 = vld [vmem:[#allocation14 + $0x7c] sm:$0xf]
        %v3552 = vld [vmem:[#allocation14 + $0x80] sm:$0xf]
        %v3553 = vld [vmem:[#allocation14 + $0x84] sm:$0xf]
        %v3554 = vld [vmem:[#allocation14 + $0x88] sm:$0xf]
        %v3555 = vld [vmem:[#allocation14 + $0x8c] sm:$0xf]
        %v3556 = vld [vmem:[#allocation14 + $0x90] sm:$0xf]
        %v3557 = vld [vmem:[#allocation14 + $0x94] sm:$0xf]
        %v3558 = vld [vmem:[#allocation14 + $0x98] sm:$0xf]
        %v3559 = vld [vmem:[#allocation14 + $0x9c] sm:$0xf]
        %v3560 = vld [vmem:[#allocation14 + $0xa0] sm:$0xf]
        %v3561 = vld [vmem:[#allocation14 + $0xa4] sm:$0xf]
        %v3562 = vld [vmem:[#allocation14 + $0xa8] sm:$0xf]
        %v3563 = vld [vmem:[#allocation14 + $0xac] sm:$0xf]
        %v3564 = vld [vmem:[#allocation14 + $0xb0] sm:$0xf]
        %v3565 = vld [vmem:[#allocation14 + $0xb4] sm:$0xf]
        %v3566 = vld [vmem:[#allocation14 + $0xb8] sm:$0xf]
        %v3567 = vld [vmem:[#allocation14 + $0xbc] sm:$0xf]
        %v3568 = vld [vmem:[#allocation14 + $0xc0] sm:$0xf]
        %v3569 = vld [vmem:[#allocation14 + $0xc4] sm:$0xf]
        %v3570 = vld [vmem:[#allocation14 + $0xc8] sm:$0xf]
        %v3571 = vld [vmem:[#allocation14 + $0xcc] sm:$0xf]
        %v3572 = vld [vmem:[#allocation14 + $0xd0] sm:$0xf]
        %v3573 = vld [vmem:[#allocation14 + $0xd4] sm:$0xf]
        %v3574 = vld [vmem:[#allocation14 + $0xd8] sm:$0xf]
        %v3575 = vld [vmem:[#allocation14 + $0xdc] sm:$0xf]
        %v3576 = vld [vmem:[#allocation14 + $0xe0] sm:$0xf]
        %v3577 = vld [vmem:[#allocation14 + $0xe4] sm:$0xf]
        %v3578 = vld [vmem:[#allocation14 + $0xe8] sm:$0xf]
        %v3579 = vld [vmem:[#allocation14 + $0xec] sm:$0xf]
        %v3580 = vld [vmem:[#allocation14 + $0xf0] sm:$0xf]
        %v3581 = vld [vmem:[#allocation14 + $0xf4] sm:$0xf]
        %v3582 = vld [vmem:[#allocation14 + $0xf8] sm:$0xf]
        %v3583 = vld [vmem:[#allocation14 + $0xfc] sm:$0xf]
        %v3584 = vld [vmem:[%s13] sm:$0x1]
        %v3586 = vperm.slane %v3584, 0
        %v3652 = vunpack.c.l.b16 %v3520
        %v3653 = vunpack.c.l.b16 %v3521
        %v3654 = vunpack.c.l.b16 %v3522
        %v3655 = vunpack.c.l.b16 %v3523
        %v3656 = vunpack.c.l.b16 %v3524
        %v3657 = vunpack.c.l.b16 %v3525
        %v3658 = vunpack.c.l.b16 %v3526
        %v3659 = vunpack.c.l.b16 %v3527
        %v3660 = vunpack.c.l.b16 %v3528
        %v3661 = vunpack.c.l.b16 %v3529
        %v3662 = vunpack.c.l.b16 %v3530
        %v3663 = vunpack.c.l.b16 %v3531
        %v3664 = vunpack.c.l.b16 %v3532
        %v3665 = vunpack.c.l.b16 %v3533
        %v3666 = vunpack.c.l.b16 %v3534
        %v3667 = vunpack.c.l.b16 %v3535
        %v3668 = vunpack.c.l.b16 %v3536
        %v3669 = vunpack.c.l.b16 %v3537
        %v3670 = vunpack.c.l.b16 %v3538
        %v3671 = vunpack.c.l.b16 %v3539
        %v3672 = vunpack.c.l.b16 %v3540
        %v3673 = vunpack.c.l.b16 %v3541
        %v3674 = vunpack.c.l.b16 %v3542
        %v3675 = vunpack.c.l.b16 %v3543
        %v3676 = vunpack.c.l.b16 %v3544
        %v3677 = vunpack.c.l.b16 %v3545
        %v3678 = vunpack.c.l.b16 %v3546
        %v3679 = vunpack.c.l.b16 %v3547
        %v3680 = vunpack.c.l.b16 %v3548
        %v3681 = vunpack.c.l.b16 %v3549
        %v3682 = vunpack.c.l.b16 %v3550
        %v3683 = vunpack.c.l.b16 %v3551
        %v3684 = vunpack.c.l.b16 %v3552
        %v3685 = vunpack.c.l.b16 %v3553
        %v3686 = vunpack.c.l.b16 %v3554
        %v3687 = vunpack.c.l.b16 %v3555
        %v3688 = vunpack.c.l.b16 %v3556
        %v3689 = vunpack.c.l.b16 %v3557
        %v3690 = vunpack.c.l.b16 %v3558
        %v3691 = vunpack.c.l.b16 %v3559
        %v3692 = vunpack.c.l.b16 %v3560
        %v3693 = vunpack.c.l.b16 %v3561
        %v3694 = vunpack.c.l.b16 %v3562
        %v3695 = vunpack.c.l.b16 %v3563
        %v3696 = vunpack.c.l.b16 %v3564
        %v3697 = vunpack.c.l.b16 %v3565
        %v3698 = vunpack.c.l.b16 %v3566
        %v3699 = vunpack.c.l.b16 %v3567
        %v3700 = vunpack.c.l.b16 %v3568
        %v3701 = vunpack.c.l.b16 %v3569
        %v3702 = vunpack.c.l.b16 %v3570
        %v3703 = vunpack.c.l.b16 %v3571
        %v3704 = vunpack.c.l.b16 %v3572
        %v3705 = vunpack.c.l.b16 %v3573
        %v3706 = vunpack.c.l.b16 %v3574
        %v3707 = vunpack.c.l.b16 %v3575
        %v3708 = vunpack.c.l.b16 %v3576
        %v3709 = vunpack.c.l.b16 %v3577
        %v3710 = vunpack.c.l.b16 %v3578
        %v3711 = vunpack.c.l.b16 %v3579
        %v3712 = vunpack.c.l.b16 %v3580
        %v3713 = vunpack.c.l.b16 %v3581
        %v3714 = vunpack.c.l.b16 %v3582
        %v3715 = vunpack.c.l.b16 %v3583
        %v3716 = vpack.c.b16 %v3653, %v3652
        %v3717 = vpack.c.b16 %v3655, %v3654
        %v3718 = vpack.c.b16 %v3657, %v3656
        %v3719 = vpack.c.b16 %v3659, %v3658
        %v3720 = vpack.c.b16 %v3661, %v3660
        %v3721 = vpack.c.b16 %v3663, %v3662
        %v3722 = vpack.c.b16 %v3665, %v3664
        %v3723 = vpack.c.b16 %v3667, %v3666
        %v3724 = vpack.c.b16 %v3669, %v3668
        %v3725 = vpack.c.b16 %v3671, %v3670
        %v3726 = vpack.c.b16 %v3673, %v3672
        %v3727 = vpack.c.b16 %v3675, %v3674
        %v3728 = vpack.c.b16 %v3677, %v3676
        %v3729 = vpack.c.b16 %v3679, %v3678
        %v3730 = vpack.c.b16 %v3681, %v3680
        %v3731 = vpack.c.b16 %v3683, %v3682
        %v3732 = vpack.c.b16 %v3685, %v3684
        %v3733 = vpack.c.b16 %v3687, %v3686
        %v3734 = vpack.c.b16 %v3689, %v3688
        %v3735 = vpack.c.b16 %v3691, %v3690
        %v3736 = vpack.c.b16 %v3693, %v3692
        %v3737 = vpack.c.b16 %v3695, %v3694
        %v3738 = vpack.c.b16 %v3697, %v3696
        %v3739 = vpack.c.b16 %v3699, %v3698
        %v3740 = vpack.c.b16 %v3701, %v3700
        %v3741 = vpack.c.b16 %v3703, %v3702
        %v3742 = vpack.c.b16 %v3705, %v3704
        %v3743 = vpack.c.b16 %v3707, %v3706
        %v3744 = vpack.c.b16 %v3709, %v3708
        %v3745 = vpack.c.b16 %v3711, %v3710
        %v3746 = vpack.c.b16 %v3713, %v3712
        %v3747 = vpack.c.b16 %v3715, %v3714
        %3780 = vmatpush.bf16.msra.mxu0 %v3723
        %3781 = vmatpush.bf16.msra.mxu0 %v3722
        %3782 = vmatpush.bf16.msra.mxu0 %v3721
        %3783 = vmatpush.bf16.msra.mxu0 %v3720
        %3784 = vmatpush.bf16.msra.mxu0 %v3719
        %3785 = vmatpush.bf16.msra.mxu0 %v3718
        %3786 = vmatpush.bf16.msra.mxu0 %v3717
        %3787 = vmatpush.bf16.msra.mxu0 %v3716
        %3788 = vmatmul.bf16.gmra.mxu0 %v3456
        %v3789 = vpop.f32.mrf.mxu0
        %v3790 = vadd.f32 %v3586, %v3789
        %v3791 = vpop.f32.mrf.mxu0
        %v3792 = vadd.f32 %v3586, %v3791
        %3793 = vmatmul.bf16.gmra.mxu0 %v3460
        %v3794 = vpop.f32.mrf.mxu0
        %v3795 = vadd.f32 %v3586, %v3794
        %v3796 = vpop.f32.mrf.mxu0
        %v3797 = vadd.f32 %v3586, %v3796
        %3798 = vmatmul.bf16.gmra.mxu0 %v3464
        %v3799 = vpop.f32.mrf.mxu0
        %v3800 = vadd.f32 %v3586, %v3799
        %v3801 = vpop.f32.mrf.mxu0
        %v3802 = vadd.f32 %v3586, %v3801
        %3803 = vmatmul.bf16.gmra.mxu0 %v3468
        %v3804 = vpop.f32.mrf.mxu0
        %v3805 = vadd.f32 %v3586, %v3804
        %v3806 = vpop.f32.mrf.mxu0
        %v3807 = vadd.f32 %v3586, %v3806
        %3808 = vmatmul.bf16.gmra.mxu0 %v3472
        %v3809 = vpop.f32.mrf.mxu0
        %v3810 = vadd.f32 %v3586, %v3809
        %v3811 = vpop.f32.mrf.mxu0
        %v3812 = vadd.f32 %v3586, %v3811
        %3813 = vmatmul.bf16.gmra.mxu0 %v3476
        %v3814 = vpop.f32.mrf.mxu0
        %v3815 = vadd.f32 %v3586, %v3814
        %v3816 = vpop.f32.mrf.mxu0
        %v3817 = vadd.f32 %v3586, %v3816
        %3818 = vmatmul.bf16.gmra.mxu0 %v3480
        %v3819 = vpop.f32.mrf.mxu0
        %v3820 = vadd.f32 %v3586, %v3819
        %v3821 = vpop.f32.mrf.mxu0
        %v3822 = vadd.f32 %v3586, %v3821
        %3823 = vmatmul.bf16.gmra.mxu0 %v3484
        %v3824 = vpop.f32.mrf.mxu0
        %v3825 = vadd.f32 %v3586, %v3824
        %v3826 = vpop.f32.mrf.mxu0
        %v3827 = vadd.f32 %v3586, %v3826
        %3828 = vmatmul.bf16.gmra.mxu0 %v3488
        %v3829 = vpop.f32.mrf.mxu0
        %v3830 = vadd.f32 %v3586, %v3829
        %v3831 = vpop.f32.mrf.mxu0
        %v3832 = vadd.f32 %v3586, %v3831
        %3833 = vmatmul.bf16.gmra.mxu0 %v3492
        %v3834 = vpop.f32.mrf.mxu0
        %v3835 = vadd.f32 %v3586, %v3834
        %v3836 = vpop.f32.mrf.mxu0
        %v3837 = vadd.f32 %v3586, %v3836
        %3838 = vmatmul.bf16.gmra.mxu0 %v3496
        %v3839 = vpop.f32.mrf.mxu0
        %v3840 = vadd.f32 %v3586, %v3839
        %v3841 = vpop.f32.mrf.mxu0
        %v3842 = vadd.f32 %v3586, %v3841
        %3843 = vmatmul.bf16.gmra.mxu0 %v3500
        %v3844 = vpop.f32.mrf.mxu0
        %v3845 = vadd.f32 %v3586, %v3844
        %v3846 = vpop.f32.mrf.mxu0
        %v3847 = vadd.f32 %v3586, %v3846
        %3848 = vmatmul.bf16.gmra.mxu0 %v3504
        %v3849 = vpop.f32.mrf.mxu0
        %v3850 = vadd.f32 %v3586, %v3849
        %v3851 = vpop.f32.mrf.mxu0
        %v3852 = vadd.f32 %v3586, %v3851
        %3853 = vmatmul.bf16.gmra.mxu0 %v3508
        %v3854 = vpop.f32.mrf.mxu0
        %v3855 = vadd.f32 %v3586, %v3854
        %v3856 = vpop.f32.mrf.mxu0
        %v3857 = vadd.f32 %v3586, %v3856
        %3858 = vmatmul.bf16.gmra.mxu0 %v3512
        %v3859 = vpop.f32.mrf.mxu0
        %v3860 = vadd.f32 %v3586, %v3859
        %v3861 = vpop.f32.mrf.mxu0
        %v3862 = vadd.f32 %v3586, %v3861
        %3863 = vmatmul.bf16.gmra.mxu0 %v3516
        %v3864 = vpop.f32.mrf.mxu0
        %v3865 = vadd.f32 %v3586, %v3864
        %v3866 = vpop.f32.mrf.mxu0
        %v3867 = vadd.f32 %v3586, %v3866
        %3868 = vdwg.mxu0
        %3869 = vmatpush.bf16.msra.mxu0 %v3731
        %3870 = vmatpush.bf16.msra.mxu0 %v3730
        %3871 = vmatpush.bf16.msra.mxu0 %v3729
        %3872 = vmatpush.bf16.msra.mxu0 %v3728
        %3873 = vmatpush.bf16.msra.mxu0 %v3727
        %3874 = vmatpush.bf16.msra.mxu0 %v3726
        %3875 = vmatpush.bf16.msra.mxu0 %v3725
        %3876 = vmatpush.bf16.msra.mxu0 %v3724
        %3877 = vmatmul.bf16.gmra.mxu0 %v3457
        %v3878 = vpop.f32.mrf.mxu0
        %v3879 = vadd.f32 %v3790, %v3878
        %v3880 = vpop.f32.mrf.mxu0
        %v3881 = vadd.f32 %v3792, %v3880
        %3882 = vmatmul.bf16.gmra.mxu0 %v3461
        %v3883 = vpop.f32.mrf.mxu0
        %v3884 = vadd.f32 %v3795, %v3883
        %v3885 = vpop.f32.mrf.mxu0
        %v3886 = vadd.f32 %v3797, %v3885
        %3887 = vmatmul.bf16.gmra.mxu0 %v3465
        %v3888 = vpop.f32.mrf.mxu0
        %v3889 = vadd.f32 %v3800, %v3888
        %v3890 = vpop.f32.mrf.mxu0
        %v3891 = vadd.f32 %v3802, %v3890
        %3892 = vmatmul.bf16.gmra.mxu0 %v3469
        %v3893 = vpop.f32.mrf.mxu0
        %v3894 = vadd.f32 %v3805, %v3893
        %v3895 = vpop.f32.mrf.mxu0
        %v3896 = vadd.f32 %v3807, %v3895
        %3897 = vmatmul.bf16.gmra.mxu0 %v3473
        %v3898 = vpop.f32.mrf.mxu0
        %v3899 = vadd.f32 %v3810, %v3898
        %v3900 = vpop.f32.mrf.mxu0
        %v3901 = vadd.f32 %v3812, %v3900
        %3902 = vmatmul.bf16.gmra.mxu0 %v3477
        %v3903 = vpop.f32.mrf.mxu0
        %v3904 = vadd.f32 %v3815, %v3903
        %v3905 = vpop.f32.mrf.mxu0
        %v3906 = vadd.f32 %v3817, %v3905
        %3907 = vmatmul.bf16.gmra.mxu0 %v3481
        %v3908 = vpop.f32.mrf.mxu0
        %v3909 = vadd.f32 %v3820, %v3908
        %v3910 = vpop.f32.mrf.mxu0
        %v3911 = vadd.f32 %v3822, %v3910
        %3912 = vmatmul.bf16.gmra.mxu0 %v3485
        %v3913 = vpop.f32.mrf.mxu0
        %v3914 = vadd.f32 %v3825, %v3913
        %v3915 = vpop.f32.mrf.mxu0
        %v3916 = vadd.f32 %v3827, %v3915
        %3917 = vmatmul.bf16.gmra.mxu0 %v3489
        %v3918 = vpop.f32.mrf.mxu0
        %v3919 = vadd.f32 %v3830, %v3918
        %v3920 = vpop.f32.mrf.mxu0
        %v3921 = vadd.f32 %v3832, %v3920
        %3922 = vmatmul.bf16.gmra.mxu0 %v3493
        %v3923 = vpop.f32.mrf.mxu0
        %v3924 = vadd.f32 %v3835, %v3923
        %v3925 = vpop.f32.mrf.mxu0
        %v3926 = vadd.f32 %v3837, %v3925
        %3927 = vmatmul.bf16.gmra.mxu0 %v3497
        %v3928 = vpop.f32.mrf.mxu0
        %v3929 = vadd.f32 %v3840, %v3928
        %v3930 = vpop.f32.mrf.mxu0
        %v3931 = vadd.f32 %v3842, %v3930
        %3932 = vmatmul.bf16.gmra.mxu0 %v3501
        %v3933 = vpop.f32.mrf.mxu0
        %v3934 = vadd.f32 %v3845, %v3933
        %v3935 = vpop.f32.mrf.mxu0
        %v3936 = vadd.f32 %v3847, %v3935
        %3937 = vmatmul.bf16.gmra.mxu0 %v3505
        %v3938 = vpop.f32.mrf.mxu0
        %v3939 = vadd.f32 %v3850, %v3938
        %v3940 = vpop.f32.mrf.mxu0
        %v3941 = vadd.f32 %v3852, %v3940
        %3942 = vmatmul.bf16.gmra.mxu0 %v3509
        %v3943 = vpop.f32.mrf.mxu0
        %v3944 = vadd.f32 %v3855, %v3943
        %v3945 = vpop.f32.mrf.mxu0
        %v3946 = vadd.f32 %v3857, %v3945
        %3947 = vmatmul.bf16.gmra.mxu0 %v3513
        %v3948 = vpop.f32.mrf.mxu0
        %v3949 = vadd.f32 %v3860, %v3948
        %v3950 = vpop.f32.mrf.mxu0
        %v3951 = vadd.f32 %v3862, %v3950
        %3952 = vmatmul.bf16.gmra.mxu0 %v3517
        %v3953 = vpop.f32.mrf.mxu0
        %v3954 = vadd.f32 %v3865, %v3953
        %v3955 = vpop.f32.mrf.mxu0
        %v3956 = vadd.f32 %v3867, %v3955
        %3957 = vdwg.mxu0
        %3958 = vmatpush.bf16.msra.mxu0 %v3739
        %3959 = vmatpush.bf16.msra.mxu0 %v3738
        %3960 = vmatpush.bf16.msra.mxu0 %v3737
        %3961 = vmatpush.bf16.msra.mxu0 %v3736
        %3962 = vmatpush.bf16.msra.mxu0 %v3735
        %3963 = vmatpush.bf16.msra.mxu0 %v3734
        %3964 = vmatpush.bf16.msra.mxu0 %v3733
        %3965 = vmatpush.bf16.msra.mxu0 %v3732
        %3966 = vmatmul.bf16.gmra.mxu0 %v3458
        %v3967 = vpop.f32.mrf.mxu0
        %v3968 = vadd.f32 %v3879, %v3967
        %v3969 = vpop.f32.mrf.mxu0
        %v3970 = vadd.f32 %v3881, %v3969
        %3971 = vmatmul.bf16.gmra.mxu0 %v3462
        %v3972 = vpop.f32.mrf.mxu0
        %v3973 = vadd.f32 %v3884, %v3972
        %v3974 = vpop.f32.mrf.mxu0
        %v3975 = vadd.f32 %v3886, %v3974
        %3976 = vmatmul.bf16.gmra.mxu0 %v3466
        %v3977 = vpop.f32.mrf.mxu0
        %v3978 = vadd.f32 %v3889, %v3977
        %v3979 = vpop.f32.mrf.mxu0
        %v3980 = vadd.f32 %v3891, %v3979
        %3981 = vmatmul.bf16.gmra.mxu0 %v3470
        %v3982 = vpop.f32.mrf.mxu0
        %v3983 = vadd.f32 %v3894, %v3982
        %v3984 = vpop.f32.mrf.mxu0
        %v3985 = vadd.f32 %v3896, %v3984
        %3986 = vmatmul.bf16.gmra.mxu0 %v3474
        %v3987 = vpop.f32.mrf.mxu0
        %v3988 = vadd.f32 %v3899, %v3987
        %v3989 = vpop.f32.mrf.mxu0
        %v3990 = vadd.f32 %v3901, %v3989
        %3991 = vmatmul.bf16.gmra.mxu0 %v3478
        %v3992 = vpop.f32.mrf.mxu0
        %v3993 = vadd.f32 %v3904, %v3992
        %v3994 = vpop.f32.mrf.mxu0
        %v3995 = vadd.f32 %v3906, %v3994
        %3996 = vmatmul.bf16.gmra.mxu0 %v3482
        %v3997 = vpop.f32.mrf.mxu0
        %v3998 = vadd.f32 %v3909, %v3997
        %v3999 = vpop.f32.mrf.mxu0
        %v4000 = vadd.f32 %v3911, %v3999
        %4001 = vmatmul.bf16.gmra.mxu0 %v3486
        %v4002 = vpop.f32.mrf.mxu0
        %v4003 = vadd.f32 %v3914, %v4002
        %v4004 = vpop.f32.mrf.mxu0
        %v4005 = vadd.f32 %v3916, %v4004
        %4006 = vmatmul.bf16.gmra.mxu0 %v3490
        %v4007 = vpop.f32.mrf.mxu0
        %v4008 = vadd.f32 %v3919, %v4007
        %v4009 = vpop.f32.mrf.mxu0
        %v4010 = vadd.f32 %v3921, %v4009
        %4011 = vmatmul.bf16.gmra.mxu0 %v3494
        %v4012 = vpop.f32.mrf.mxu0
        %v4013 = vadd.f32 %v3924, %v4012
        %v4014 = vpop.f32.mrf.mxu0
        %v4015 = vadd.f32 %v3926, %v4014
        %4016 = vmatmul.bf16.gmra.mxu0 %v3498
        %v4017 = vpop.f32.mrf.mxu0
        %v4018 = vadd.f32 %v3929, %v4017
        %v4019 = vpop.f32.mrf.mxu0
        %v4020 = vadd.f32 %v3931, %v4019
        %4021 = vmatmul.bf16.gmra.mxu0 %v3502
        %v4022 = vpop.f32.mrf.mxu0
        %v4023 = vadd.f32 %v3934, %v4022
        %v4024 = vpop.f32.mrf.mxu0
        %v4025 = vadd.f32 %v3936, %v4024
        %4026 = vmatmul.bf16.gmra.mxu0 %v3506
        %v4027 = vpop.f32.mrf.mxu0
        %v4028 = vadd.f32 %v3939, %v4027
        %v4029 = vpop.f32.mrf.mxu0
        %v4030 = vadd.f32 %v3941, %v4029
        %4031 = vmatmul.bf16.gmra.mxu0 %v3510
        %v4032 = vpop.f32.mrf.mxu0
        %v4033 = vadd.f32 %v3944, %v4032
        %v4034 = vpop.f32.mrf.mxu0
        %v4035 = vadd.f32 %v3946, %v4034
        %4036 = vmatmul.bf16.gmra.mxu0 %v3514
        %v4037 = vpop.f32.mrf.mxu0
        %v4038 = vadd.f32 %v3949, %v4037
        %v4039 = vpop.f32.mrf.mxu0
        %v4040 = vadd.f32 %v3951, %v4039
        %4041 = vmatmul.bf16.gmra.mxu0 %v3518
        %v4042 = vpop.f32.mrf.mxu0
        %v4043 = vadd.f32 %v3954, %v4042
        %v4044 = vpop.f32.mrf.mxu0
        %v4045 = vadd.f32 %v3956, %v4044
        %4046 = vdwg.mxu0
        %4047 = vmatpush.bf16.msra.mxu0 %v3747
        %4048 = vmatpush.bf16.msra.mxu0 %v3746
        %4049 = vmatpush.bf16.msra.mxu0 %v3745
        %4050 = vmatpush.bf16.msra.mxu0 %v3744
        %4051 = vmatpush.bf16.msra.mxu0 %v3743
        %4052 = vmatpush.bf16.msra.mxu0 %v3742
        %4053 = vmatpush.bf16.msra.mxu0 %v3741
        %4054 = vmatpush.bf16.msra.mxu0 %v3740
        %4055 = vmatmul.bf16.gmra.mxu0 %v3459
        %v4056 = vpop.f32.mrf.mxu0
        %v4057 = vadd.f32 %v3968, %v4056
        %v4058 = vpop.f32.mrf.mxu0
        %v4059 = vadd.f32 %v3970, %v4058
        %4060 = vmatmul.bf16.gmra.mxu0 %v3463
        %v4061 = vpop.f32.mrf.mxu0
        %v4062 = vadd.f32 %v3973, %v4061
        %v4063 = vpop.f32.mrf.mxu0
        %v4064 = vadd.f32 %v3975, %v4063
        %4065 = vmatmul.bf16.gmra.mxu0 %v3467
        %v4066 = vpop.f32.mrf.mxu0
        %v4067 = vadd.f32 %v3978, %v4066
        %v4068 = vpop.f32.mrf.mxu0
        %v4069 = vadd.f32 %v3980, %v4068
        %4070 = vmatmul.bf16.gmra.mxu0 %v3471
        %v4071 = vpop.f32.mrf.mxu0
        %v4072 = vadd.f32 %v3983, %v4071
        %v4073 = vpop.f32.mrf.mxu0
        %v4074 = vadd.f32 %v3985, %v4073
        %4075 = vmatmul.bf16.gmra.mxu0 %v3475
        %v4076 = vpop.f32.mrf.mxu0
        %v4077 = vadd.f32 %v3988, %v4076
        %v4078 = vpop.f32.mrf.mxu0
        %v4079 = vadd.f32 %v3990, %v4078
        %4080 = vmatmul.bf16.gmra.mxu0 %v3479
        %v4081 = vpop.f32.mrf.mxu0
        %v4082 = vadd.f32 %v3993, %v4081
        %v4083 = vpop.f32.mrf.mxu0
        %v4084 = vadd.f32 %v3995, %v4083
        %4085 = vmatmul.bf16.gmra.mxu0 %v3483
        %v4086 = vpop.f32.mrf.mxu0
        %v4087 = vadd.f32 %v3998, %v4086
        %v4088 = vpop.f32.mrf.mxu0
        %v4089 = vadd.f32 %v4000, %v4088
        %4090 = vmatmul.bf16.gmra.mxu0 %v3487
        %v4091 = vpop.f32.mrf.mxu0
        %v4092 = vadd.f32 %v4003, %v4091
        %v4093 = vpop.f32.mrf.mxu0
        %v4094 = vadd.f32 %v4005, %v4093
        %4095 = vmatmul.bf16.gmra.mxu0 %v3491
        %v4096 = vpop.f32.mrf.mxu0
        %v4097 = vadd.f32 %v4008, %v4096
        %v4098 = vpop.f32.mrf.mxu0
        %v4099 = vadd.f32 %v4010, %v4098
        %4100 = vmatmul.bf16.gmra.mxu0 %v3495
        %v4101 = vpop.f32.mrf.mxu0
        %v4102 = vadd.f32 %v4013, %v4101
        %v4103 = vpop.f32.mrf.mxu0
        %v4104 = vadd.f32 %v4015, %v4103
        %4105 = vmatmul.bf16.gmra.mxu0 %v3499
        %v4106 = vpop.f32.mrf.mxu0
        %v4107 = vadd.f32 %v4018, %v4106
        %v4108 = vpop.f32.mrf.mxu0
        %v4109 = vadd.f32 %v4020, %v4108
        %4110 = vmatmul.bf16.gmra.mxu0 %v3503
        %v4111 = vpop.f32.mrf.mxu0
        %v4112 = vadd.f32 %v4023, %v4111
        %v4113 = vpop.f32.mrf.mxu0
        %v4114 = vadd.f32 %v4025, %v4113
        %4115 = vmatmul.bf16.gmra.mxu0 %v3507
        %v4116 = vpop.f32.mrf.mxu0
        %v4117 = vadd.f32 %v4028, %v4116
        %v4118 = vpop.f32.mrf.mxu0
        %v4119 = vadd.f32 %v4030, %v4118
        %4120 = vmatmul.bf16.gmra.mxu0 %v3511
        %v4121 = vpop.f32.mrf.mxu0
        %v4122 = vadd.f32 %v4033, %v4121
        %v4123 = vpop.f32.mrf.mxu0
        %v4124 = vadd.f32 %v4035, %v4123
        %4125 = vmatmul.bf16.gmra.mxu0 %v3515
        %v4126 = vpop.f32.mrf.mxu0
        %v4127 = vadd.f32 %v4038, %v4126
        %v4128 = vpop.f32.mrf.mxu0
        %v4129 = vadd.f32 %v4040, %v4128
        %4130 = vmatmul.bf16.gmra.mxu0 %v3519
        %v4131 = vpop.f32.mrf.mxu0
        %v4132 = vadd.f32 %v4043, %v4131
        %v4133 = vpop.f32.mrf.mxu0
        %v4134 = vadd.f32 %v4045, %v4133
        %4135 = vdwg.mxu0
        %v4136 = vadd.f32 %v2722, %v4057
        %v4137 = vadd.f32 %v2723, %v4059
        %v4138 = vadd.f32 %v2724, %v4062
        %v4139 = vadd.f32 %v2725, %v4064
        %v4140 = vadd.f32 %v2726, %v4067
        %v4141 = vadd.f32 %v2727, %v4069
        %v4142 = vadd.f32 %v2728, %v4072
        %v4143 = vadd.f32 %v2729, %v4074
        %v4144 = vadd.f32 %v2730, %v4077
        %v4145 = vadd.f32 %v2731, %v4079
        %v4146 = vadd.f32 %v2732, %v4082
        %v4147 = vadd.f32 %v2733, %v4084
        %v4148 = vadd.f32 %v2734, %v4087
        %v4149 = vadd.f32 %v2735, %v4089
        %v4150 = vadd.f32 %v2736, %v4092
        %v4151 = vadd.f32 %v2737, %v4094
        %v4152 = vadd.f32 %v2738, %v4097
        %v4153 = vadd.f32 %v2739, %v4099
        %v4154 = vadd.f32 %v2740, %v4102
        %v4155 = vadd.f32 %v2741, %v4104
        %v4156 = vadd.f32 %v2742, %v4107
        %v4157 = vadd.f32 %v2743, %v4109
        %v4158 = vadd.f32 %v2744, %v4112
        %v4159 = vadd.f32 %v2745, %v4114
        %v4160 = vadd.f32 %v2746, %v4117
        %v4161 = vadd.f32 %v2747, %v4119
        %v4162 = vadd.f32 %v2748, %v4122
        %v4163 = vadd.f32 %v2749, %v4124
        %v4164 = vadd.f32 %v2750, %v4127
        %v4165 = vadd.f32 %v2751, %v4129
        %v4166 = vadd.f32 %v2752, %v4132
        %v4167 = vadd.f32 %v2753, %v4134
        %v4168 = vld [vmem:[%s14] sm:$0x1]
        %v4169 = vld [vmem:[%s15] sm:$0x1]
        %4170 = vadd.xlane.f32.xlu0 %v4136
        %v4171 = vpop.xlane.xlu0 %4170
        %4172 = vadd.xlane.f32.xlu0 %v4137
        %v4173 = vpop.xlane.xlu0 %4172
        %4174 = vadd.xlane.f32.xlu0 %v4138
        %v4175 = vpop.xlane.xlu0 %4174
        %4176 = vadd.xlane.f32.xlu0 %v4139
        %v4177 = vpop.xlane.xlu0 %4176
        %4178 = vadd.xlane.f32.xlu0 %v4140
        %v4179 = vpop.xlane.xlu0 %4178
        %4180 = vadd.xlane.f32.xlu0 %v4141
        %v4181 = vpop.xlane.xlu0 %4180
        %4182 = vadd.xlane.f32.xlu0 %v4142
        %v4183 = vpop.xlane.xlu0 %4182
        %4184 = vadd.xlane.f32.xlu0 %v4143
        %v4185 = vpop.xlane.xlu0 %4184
        %4186 = vadd.xlane.f32.xlu0 %v4144
        %v4187 = vpop.xlane.xlu0 %4186
        %4188 = vadd.xlane.f32.xlu0 %v4145
        %v4189 = vpop.xlane.xlu0 %4188
        %4190 = vadd.xlane.f32.xlu0 %v4146
        %v4191 = vpop.xlane.xlu0 %4190
        %4192 = vadd.xlane.f32.xlu0 %v4147
        %v4193 = vpop.xlane.xlu0 %4192
        %4194 = vadd.xlane.f32.xlu0 %v4148
        %v4195 = vpop.xlane.xlu0 %4194
        %4196 = vadd.xlane.f32.xlu0 %v4149
        %v4197 = vpop.xlane.xlu0 %4196
        %4198 = vadd.xlane.f32.xlu0 %v4150
        %v4199 = vpop.xlane.xlu0 %4198
        %4200 = vadd.xlane.f32.xlu0 %v4151
        %v4201 = vpop.xlane.xlu0 %4200
        %4202 = vadd.xlane.f32.xlu0 %v4152
        %v4203 = vpop.xlane.xlu0 %4202
        %4204 = vadd.xlane.f32.xlu0 %v4153
        %v4205 = vpop.xlane.xlu0 %4204
        %4206 = vadd.xlane.f32.xlu0 %v4154
        %v4207 = vpop.xlane.xlu0 %4206
        %4208 = vadd.xlane.f32.xlu0 %v4155
        %v4209 = vpop.xlane.xlu0 %4208
        %4210 = vadd.xlane.f32.xlu0 %v4156
        %v4211 = vpop.xlane.xlu0 %4210
        %4212 = vadd.xlane.f32.xlu0 %v4157
        %v4213 = vpop.xlane.xlu0 %4212
        %4214 = vadd.xlane.f32.xlu0 %v4158
        %v4215 = vpop.xlane.xlu0 %4214
        %4216 = vadd.xlane.f32.xlu0 %v4159
        %v4217 = vpop.xlane.xlu0 %4216
        %4218 = vadd.xlane.f32.xlu0 %v4160
        %v4219 = vpop.xlane.xlu0 %4218
        %4220 = vadd.xlane.f32.xlu0 %v4161
        %v4221 = vpop.xlane.xlu0 %4220
        %4222 = vadd.xlane.f32.xlu0 %v4162
        %v4223 = vpop.xlane.xlu0 %4222
        %4224 = vadd.xlane.f32.xlu0 %v4163
        %v4225 = vpop.xlane.xlu0 %4224
        %4226 = vadd.xlane.f32.xlu0 %v4164
        %v4227 = vpop.xlane.xlu0 %4226
        %4228 = vadd.xlane.f32.xlu0 %v4165
        %v4229 = vpop.xlane.xlu0 %4228
        %4230 = vadd.xlane.f32.xlu0 %v4166
        %v4231 = vpop.xlane.xlu0 %4230
        %4232 = vadd.xlane.f32.xlu0 %v4167
        %v4233 = vpop.xlane.xlu0 %4232
        %v4234 = vmul.f32 %v4171, %v2107
        %v4235 = vmul.f32 %v4173, %v2107
        %v4236 = vmul.f32 %v4175, %v2107
        %v4237 = vmul.f32 %v4177, %v2107
        %v4238 = vmul.f32 %v4179, %v2107
        %v4239 = vmul.f32 %v4181, %v2107
        %v4240 = vmul.f32 %v4183, %v2107
        %v4241 = vmul.f32 %v4185, %v2107
        %v4242 = vmul.f32 %v4187, %v2107
        %v4243 = vmul.f32 %v4189, %v2107
        %v4244 = vmul.f32 %v4191, %v2107
        %v4245 = vmul.f32 %v4193, %v2107
        %v4246 = vmul.f32 %v4195, %v2107
        %v4247 = vmul.f32 %v4197, %v2107
        %v4248 = vmul.f32 %v4199, %v2107
        %v4249 = vmul.f32 %v4201, %v2107
        %v4250 = vmul.f32 %v4203, %v2107
        %v4251 = vmul.f32 %v4205, %v2107
        %v4252 = vmul.f32 %v4207, %v2107
        %v4253 = vmul.f32 %v4209, %v2107
        %v4254 = vmul.f32 %v4211, %v2107
        %v4255 = vmul.f32 %v4213, %v2107
        %v4256 = vmul.f32 %v4215, %v2107
        %v4257 = vmul.f32 %v4217, %v2107
        %v4258 = vmul.f32 %v4219, %v2107
        %v4259 = vmul.f32 %v4221, %v2107
        %v4260 = vmul.f32 %v4223, %v2107
        %v4261 = vmul.f32 %v4225, %v2107
        %v4262 = vmul.f32 %v4227, %v2107
        %v4263 = vmul.f32 %v4229, %v2107
        %v4264 = vmul.f32 %v4231, %v2107
        %v4265 = vmul.f32 %v4233, %v2107
        %v4266 = vsub.f32 %v4136, %v4234
        %v4267 = vsub.f32 %v4137, %v4235
        %v4268 = vsub.f32 %v4138, %v4236
        %v4269 = vsub.f32 %v4139, %v4237
        %v4270 = vsub.f32 %v4140, %v4238
        %v4271 = vsub.f32 %v4141, %v4239
        %v4272 = vsub.f32 %v4142, %v4240
        %v4273 = vsub.f32 %v4143, %v4241
        %v4274 = vsub.f32 %v4144, %v4242
        %v4275 = vsub.f32 %v4145, %v4243
        %v4276 = vsub.f32 %v4146, %v4244
        %v4277 = vsub.f32 %v4147, %v4245
        %v4278 = vsub.f32 %v4148, %v4246
        %v4279 = vsub.f32 %v4149, %v4247
        %v4280 = vsub.f32 %v4150, %v4248
        %v4281 = vsub.f32 %v4151, %v4249
        %v4282 = vsub.f32 %v4152, %v4250
        %v4283 = vsub.f32 %v4153, %v4251
        %v4284 = vsub.f32 %v4154, %v4252
        %v4285 = vsub.f32 %v4155, %v4253
        %v4286 = vsub.f32 %v4156, %v4254
        %v4287 = vsub.f32 %v4157, %v4255
        %v4288 = vsub.f32 %v4158, %v4256
        %v4289 = vsub.f32 %v4159, %v4257
        %v4290 = vsub.f32 %v4160, %v4258
        %v4291 = vsub.f32 %v4161, %v4259
        %v4292 = vsub.f32 %v4162, %v4260
        %v4293 = vsub.f32 %v4163, %v4261
        %v4294 = vsub.f32 %v4164, %v4262
        %v4295 = vsub.f32 %v4165, %v4263
        %v4296 = vsub.f32 %v4166, %v4264
        %v4297 = vsub.f32 %v4167, %v4265
        %v4298 = vmul.f32 %v4266, %v4266
        %v4299 = vmul.f32 %v4267, %v4267
        %v4300 = vmul.f32 %v4268, %v4268
        %v4301 = vmul.f32 %v4269, %v4269
        %v4302 = vmul.f32 %v4270, %v4270
        %v4303 = vmul.f32 %v4271, %v4271
        %v4304 = vmul.f32 %v4272, %v4272
        %v4305 = vmul.f32 %v4273, %v4273
        %v4306 = vmul.f32 %v4274, %v4274
        %v4307 = vmul.f32 %v4275, %v4275
        %v4308 = vmul.f32 %v4276, %v4276
        %v4309 = vmul.f32 %v4277, %v4277
        %v4310 = vmul.f32 %v4278, %v4278
        %v4311 = vmul.f32 %v4279, %v4279
        %v4312 = vmul.f32 %v4280, %v4280
        %v4313 = vmul.f32 %v4281, %v4281
        %v4314 = vmul.f32 %v4282, %v4282
        %v4315 = vmul.f32 %v4283, %v4283
        %v4316 = vmul.f32 %v4284, %v4284
        %v4317 = vmul.f32 %v4285, %v4285
        %v4318 = vmul.f32 %v4286, %v4286
        %v4319 = vmul.f32 %v4287, %v4287
        %v4320 = vmul.f32 %v4288, %v4288
        %v4321 = vmul.f32 %v4289, %v4289
        %v4322 = vmul.f32 %v4290, %v4290
        %v4323 = vmul.f32 %v4291, %v4291
        %v4324 = vmul.f32 %v4292, %v4292
        %v4325 = vmul.f32 %v4293, %v4293
        %v4326 = vmul.f32 %v4294, %v4294
        %v4327 = vmul.f32 %v4295, %v4295
        %v4328 = vmul.f32 %v4296, %v4296
        %v4329 = vmul.f32 %v4297, %v4297
        %4330 = vadd.xlane.f32.xlu0 %v4298
        %v4331 = vpop.xlane.xlu0 %4330
        %4332 = vadd.xlane.f32.xlu0 %v4299
        %v4333 = vpop.xlane.xlu0 %4332
        %4334 = vadd.xlane.f32.xlu0 %v4300
        %v4335 = vpop.xlane.xlu0 %4334
        %4336 = vadd.xlane.f32.xlu0 %v4301
        %v4337 = vpop.xlane.xlu0 %4336
        %4338 = vadd.xlane.f32.xlu0 %v4302
        %v4339 = vpop.xlane.xlu0 %4338
        %4340 = vadd.xlane.f32.xlu0 %v4303
        %v4341 = vpop.xlane.xlu0 %4340
        %4342 = vadd.xlane.f32.xlu0 %v4304
        %v4343 = vpop.xlane.xlu0 %4342
        %4344 = vadd.xlane.f32.xlu0 %v4305
        %v4345 = vpop.xlane.xlu0 %4344
        %4346 = vadd.xlane.f32.xlu0 %v4306
        %v4347 = vpop.xlane.xlu0 %4346
        %4348 = vadd.xlane.f32.xlu0 %v4307
        %v4349 = vpop.xlane.xlu0 %4348
        %4350 = vadd.xlane.f32.xlu0 %v4308
        %v4351 = vpop.xlane.xlu0 %4350
        %4352 = vadd.xlane.f32.xlu0 %v4309
        %v4353 = vpop.xlane.xlu0 %4352
        %4354 = vadd.xlane.f32.xlu0 %v4310
        %v4355 = vpop.xlane.xlu0 %4354
        %4356 = vadd.xlane.f32.xlu0 %v4311
        %v4357 = vpop.xlane.xlu0 %4356
        %4358 = vadd.xlane.f32.xlu0 %v4312
        %v4359 = vpop.xlane.xlu0 %4358
        %4360 = vadd.xlane.f32.xlu0 %v4313
        %v4361 = vpop.xlane.xlu0 %4360
        %4362 = vadd.xlane.f32.xlu0 %v4314
        %v4363 = vpop.xlane.xlu0 %4362
        %4364 = vadd.xlane.f32.xlu0 %v4315
        %v4365 = vpop.xlane.xlu0 %4364
        %4366 = vadd.xlane.f32.xlu0 %v4316
        %v4367 = vpop.xlane.xlu0 %4366
        %4368 = vadd.xlane.f32.xlu0 %v4317
        %v4369 = vpop.xlane.xlu0 %4368
        %4370 = vadd.xlane.f32.xlu0 %v4318
        %v4371 = vpop.xlane.xlu0 %4370
        %4372 = vadd.xlane.f32.xlu0 %v4319
        %v4373 = vpop.xlane.xlu0 %4372
        %4374 = vadd.xlane.f32.xlu0 %v4320
        %v4375 = vpop.xlane.xlu0 %4374
        %4376 = vadd.xlane.f32.xlu0 %v4321
        %v4377 = vpop.xlane.xlu0 %4376
        %4378 = vadd.xlane.f32.xlu0 %v4322
        %v4379 = vpop.xlane.xlu0 %4378
        %4380 = vadd.xlane.f32.xlu0 %v4323
        %v4381 = vpop.xlane.xlu0 %4380
        %4382 = vadd.xlane.f32.xlu0 %v4324
        %v4383 = vpop.xlane.xlu0 %4382
        %4384 = vadd.xlane.f32.xlu0 %v4325
        %v4385 = vpop.xlane.xlu0 %4384
        %4386 = vadd.xlane.f32.xlu0 %v4326
        %v4387 = vpop.xlane.xlu0 %4386
        %4388 = vadd.xlane.f32.xlu0 %v4327
        %v4389 = vpop.xlane.xlu0 %4388
        %4390 = vadd.xlane.f32.xlu0 %v4328
        %v4391 = vpop.xlane.xlu0 %4390
        %4392 = vadd.xlane.f32.xlu0 %v4329
        %v4393 = vpop.xlane.xlu0 %4392
        %v4394 = vmul.f32 %v4331, %v2107
        %v4395 = vmul.f32 %v4333, %v2107
        %v4396 = vmul.f32 %v4335, %v2107
        %v4397 = vmul.f32 %v4337, %v2107
        %v4398 = vmul.f32 %v4339, %v2107
        %v4399 = vmul.f32 %v4341, %v2107
        %v4400 = vmul.f32 %v4343, %v2107
        %v4401 = vmul.f32 %v4345, %v2107
        %v4402 = vmul.f32 %v4347, %v2107
        %v4403 = vmul.f32 %v4349, %v2107
        %v4404 = vmul.f32 %v4351, %v2107
        %v4405 = vmul.f32 %v4353, %v2107
        %v4406 = vmul.f32 %v4355, %v2107
        %v4407 = vmul.f32 %v4357, %v2107
        %v4408 = vmul.f32 %v4359, %v2107
        %v4409 = vmul.f32 %v4361, %v2107
        %v4410 = vmul.f32 %v4363, %v2107
        %v4411 = vmul.f32 %v4365, %v2107
        %v4412 = vmul.f32 %v4367, %v2107
        %v4413 = vmul.f32 %v4369, %v2107
        %v4414 = vmul.f32 %v4371, %v2107
        %v4415 = vmul.f32 %v4373, %v2107
        %v4416 = vmul.f32 %v4375, %v2107
        %v4417 = vmul.f32 %v4377, %v2107
        %v4418 = vmul.f32 %v4379, %v2107
        %v4419 = vmul.f32 %v4381, %v2107
        %v4420 = vmul.f32 %v4383, %v2107
        %v4421 = vmul.f32 %v4385, %v2107
        %v4422 = vmul.f32 %v4387, %v2107
        %v4423 = vmul.f32 %v4389, %v2107
        %v4424 = vmul.f32 %v4391, %v2107
        %v4425 = vmul.f32 %v4393, %v2107
        %v4426 = vadd.f32 %v4394, 1e-05
        %v4427 = vadd.f32 %v4395, 1e-05
        %v4428 = vadd.f32 %v4396, 1e-05
        %v4429 = vadd.f32 %v4397, 1e-05
        %v4430 = vadd.f32 %v4398, 1e-05
        %v4431 = vadd.f32 %v4399, 1e-05
        %v4432 = vadd.f32 %v4400, 1e-05
        %v4433 = vadd.f32 %v4401, 1e-05
        %v4434 = vadd.f32 %v4402, 1e-05
        %v4435 = vadd.f32 %v4403, 1e-05
        %v4436 = vadd.f32 %v4404, 1e-05
        %v4437 = vadd.f32 %v4405, 1e-05
        %v4438 = vadd.f32 %v4406, 1e-05
        %v4439 = vadd.f32 %v4407, 1e-05
        %v4440 = vadd.f32 %v4408, 1e-05
        %v4441 = vadd.f32 %v4409, 1e-05
        %v4442 = vadd.f32 %v4410, 1e-05
        %v4443 = vadd.f32 %v4411, 1e-05
        %v4444 = vadd.f32 %v4412, 1e-05
        %v4445 = vadd.f32 %v4413, 1e-05
        %v4446 = vadd.f32 %v4414, 1e-05
        %v4447 = vadd.f32 %v4415, 1e-05
        %v4448 = vadd.f32 %v4416, 1e-05
        %v4449 = vadd.f32 %v4417, 1e-05
        %v4450 = vadd.f32 %v4418, 1e-05
        %v4451 = vadd.f32 %v4419, 1e-05
        %v4452 = vadd.f32 %v4420, 1e-05
        %v4453 = vadd.f32 %v4421, 1e-05
        %v4454 = vadd.f32 %v4422, 1e-05
        %v4455 = vadd.f32 %v4423, 1e-05
        %v4456 = vadd.f32 %v4424, 1e-05
        %v4457 = vadd.f32 %v4425, 1e-05
        %v4458 = vrsqrt.pop %v4426
        %v4459 = vmul.f32 %v4458, %v4426
        %v4460 = vmul.f32 %v4459, %v4458
        %v4461 = vmul.f32 0.5, %v4460
        %v4462 = vsub.f32 1.5, %v4461
        %v4463 = vmul.f32 %v4458, %v4462
        %vm4464 = vweird.f32 %v4426
        %vm4465 = vweird.f32 %v4458
        %vm4466 = vmor %vm4464, %vm4465
        %v4467 = vsel %vm4466, %v4458, %v4463
        %v4468 = vrsqrt.pop %v4427
        %v4469 = vmul.f32 %v4468, %v4427
        %v4470 = vmul.f32 %v4469, %v4468
        %v4471 = vmul.f32 0.5, %v4470
        %v4472 = vsub.f32 1.5, %v4471
        %v4473 = vmul.f32 %v4468, %v4472
        %vm4474 = vweird.f32 %v4427
        %vm4475 = vweird.f32 %v4468
        %vm4476 = vmor %vm4474, %vm4475
        %v4477 = vsel %vm4476, %v4468, %v4473
        %v4478 = vrsqrt.pop %v4428
        %v4479 = vmul.f32 %v4478, %v4428
        %v4480 = vmul.f32 %v4479, %v4478
        %v4481 = vmul.f32 0.5, %v4480
        %v4482 = vsub.f32 1.5, %v4481
        %v4483 = vmul.f32 %v4478, %v4482
        %vm4484 = vweird.f32 %v4428
        %vm4485 = vweird.f32 %v4478
        %vm4486 = vmor %vm4484, %vm4485
        %v4487 = vsel %vm4486, %v4478, %v4483
        %v4488 = vrsqrt.pop %v4429
        %v4489 = vmul.f32 %v4488, %v4429
        %v4490 = vmul.f32 %v4489, %v4488
        %v4491 = vmul.f32 0.5, %v4490
        %v4492 = vsub.f32 1.5, %v4491
        %v4493 = vmul.f32 %v4488, %v4492
        %vm4494 = vweird.f32 %v4429
        %vm4495 = vweird.f32 %v4488
        %vm4496 = vmor %vm4494, %vm4495
        %v4497 = vsel %vm4496, %v4488, %v4493
        %v4498 = vrsqrt.pop %v4430
        %v4499 = vmul.f32 %v4498, %v4430
        %v4500 = vmul.f32 %v4499, %v4498
        %v4501 = vmul.f32 0.5, %v4500
        %v4502 = vsub.f32 1.5, %v4501
        %v4503 = vmul.f32 %v4498, %v4502
        %vm4504 = vweird.f32 %v4430
        %vm4505 = vweird.f32 %v4498
        %vm4506 = vmor %vm4504, %vm4505
        %v4507 = vsel %vm4506, %v4498, %v4503
        %v4508 = vrsqrt.pop %v4431
        %v4509 = vmul.f32 %v4508, %v4431
        %v4510 = vmul.f32 %v4509, %v4508
        %v4511 = vmul.f32 0.5, %v4510
        %v4512 = vsub.f32 1.5, %v4511
        %v4513 = vmul.f32 %v4508, %v4512
        %vm4514 = vweird.f32 %v4431
        %vm4515 = vweird.f32 %v4508
        %vm4516 = vmor %vm4514, %vm4515
        %v4517 = vsel %vm4516, %v4508, %v4513
        %v4518 = vrsqrt.pop %v4432
        %v4519 = vmul.f32 %v4518, %v4432
        %v4520 = vmul.f32 %v4519, %v4518
        %v4521 = vmul.f32 0.5, %v4520
        %v4522 = vsub.f32 1.5, %v4521
        %v4523 = vmul.f32 %v4518, %v4522
        %vm4524 = vweird.f32 %v4432
        %vm4525 = vweird.f32 %v4518
        %vm4526 = vmor %vm4524, %vm4525
        %v4527 = vsel %vm4526, %v4518, %v4523
        %v4528 = vrsqrt.pop %v4433
        %v4529 = vmul.f32 %v4528, %v4433
        %v4530 = vmul.f32 %v4529, %v4528
        %v4531 = vmul.f32 0.5, %v4530
        %v4532 = vsub.f32 1.5, %v4531
        %v4533 = vmul.f32 %v4528, %v4532
        %vm4534 = vweird.f32 %v4433
        %vm4535 = vweird.f32 %v4528
        %vm4536 = vmor %vm4534, %vm4535
        %v4537 = vsel %vm4536, %v4528, %v4533
        %v4538 = vrsqrt.pop %v4434
        %v4539 = vmul.f32 %v4538, %v4434
        %v4540 = vmul.f32 %v4539, %v4538
        %v4541 = vmul.f32 0.5, %v4540
        %v4542 = vsub.f32 1.5, %v4541
        %v4543 = vmul.f32 %v4538, %v4542
        %vm4544 = vweird.f32 %v4434
        %vm4545 = vweird.f32 %v4538
        %vm4546 = vmor %vm4544, %vm4545
        %v4547 = vsel %vm4546, %v4538, %v4543
        %v4548 = vrsqrt.pop %v4435
        %v4549 = vmul.f32 %v4548, %v4435
        %v4550 = vmul.f32 %v4549, %v4548
        %v4551 = vmul.f32 0.5, %v4550
        %v4552 = vsub.f32 1.5, %v4551
        %v4553 = vmul.f32 %v4548, %v4552
        %vm4554 = vweird.f32 %v4435
        %vm4555 = vweird.f32 %v4548
        %vm4556 = vmor %vm4554, %vm4555
        %v4557 = vsel %vm4556, %v4548, %v4553
        %v4558 = vrsqrt.pop %v4436
        %v4559 = vmul.f32 %v4558, %v4436
        %v4560 = vmul.f32 %v4559, %v4558
        %v4561 = vmul.f32 0.5, %v4560
        %v4562 = vsub.f32 1.5, %v4561
        %v4563 = vmul.f32 %v4558, %v4562
        %vm4564 = vweird.f32 %v4436
        %vm4565 = vweird.f32 %v4558
        %vm4566 = vmor %vm4564, %vm4565
        %v4567 = vsel %vm4566, %v4558, %v4563
        %v4568 = vrsqrt.pop %v4437
        %v4569 = vmul.f32 %v4568, %v4437
        %v4570 = vmul.f32 %v4569, %v4568
        %v4571 = vmul.f32 0.5, %v4570
        %v4572 = vsub.f32 1.5, %v4571
        %v4573 = vmul.f32 %v4568, %v4572
        %vm4574 = vweird.f32 %v4437
        %vm4575 = vweird.f32 %v4568
        %vm4576 = vmor %vm4574, %vm4575
        %v4577 = vsel %vm4576, %v4568, %v4573
        %v4578 = vrsqrt.pop %v4438
        %v4579 = vmul.f32 %v4578, %v4438
        %v4580 = vmul.f32 %v4579, %v4578
        %v4581 = vmul.f32 0.5, %v4580
        %v4582 = vsub.f32 1.5, %v4581
        %v4583 = vmul.f32 %v4578, %v4582
        %vm4584 = vweird.f32 %v4438
        %vm4585 = vweird.f32 %v4578
        %vm4586 = vmor %vm4584, %vm4585
        %v4587 = vsel %vm4586, %v4578, %v4583
        %v4588 = vrsqrt.pop %v4439
        %v4589 = vmul.f32 %v4588, %v4439
        %v4590 = vmul.f32 %v4589, %v4588
        %v4591 = vmul.f32 0.5, %v4590
        %v4592 = vsub.f32 1.5, %v4591
        %v4593 = vmul.f32 %v4588, %v4592
        %vm4594 = vweird.f32 %v4439
        %vm4595 = vweird.f32 %v4588
        %vm4596 = vmor %vm4594, %vm4595
        %v4597 = vsel %vm4596, %v4588, %v4593
        %v4598 = vrsqrt.pop %v4440
        %v4599 = vmul.f32 %v4598, %v4440
        %v4600 = vmul.f32 %v4599, %v4598
        %v4601 = vmul.f32 0.5, %v4600
        %v4602 = vsub.f32 1.5, %v4601
        %v4603 = vmul.f32 %v4598, %v4602
        %vm4604 = vweird.f32 %v4440
        %vm4605 = vweird.f32 %v4598
        %vm4606 = vmor %vm4604, %vm4605
        %v4607 = vsel %vm4606, %v4598, %v4603
        %v4608 = vrsqrt.pop %v4441
        %v4609 = vmul.f32 %v4608, %v4441
        %v4610 = vmul.f32 %v4609, %v4608
        %v4611 = vmul.f32 0.5, %v4610
        %v4612 = vsub.f32 1.5, %v4611
        %v4613 = vmul.f32 %v4608, %v4612
        %vm4614 = vweird.f32 %v4441
        %vm4615 = vweird.f32 %v4608
        %vm4616 = vmor %vm4614, %vm4615
        %v4617 = vsel %vm4616, %v4608, %v4613
        %v4618 = vrsqrt.pop %v4442
        %v4619 = vmul.f32 %v4618, %v4442
        %v4620 = vmul.f32 %v4619, %v4618
        %v4621 = vmul.f32 0.5, %v4620
        %v4622 = vsub.f32 1.5, %v4621
        %v4623 = vmul.f32 %v4618, %v4622
        %vm4624 = vweird.f32 %v4442
        %vm4625 = vweird.f32 %v4618
        %vm4626 = vmor %vm4624, %vm4625
        %v4627 = vsel %vm4626, %v4618, %v4623
        %v4628 = vrsqrt.pop %v4443
        %v4629 = vmul.f32 %v4628, %v4443
        %v4630 = vmul.f32 %v4629, %v4628
        %v4631 = vmul.f32 0.5, %v4630
        %v4632 = vsub.f32 1.5, %v4631
        %v4633 = vmul.f32 %v4628, %v4632
        %vm4634 = vweird.f32 %v4443
        %vm4635 = vweird.f32 %v4628
        %vm4636 = vmor %vm4634, %vm4635
        %v4637 = vsel %vm4636, %v4628, %v4633
        %v4638 = vrsqrt.pop %v4444
        %v4639 = vmul.f32 %v4638, %v4444
        %v4640 = vmul.f32 %v4639, %v4638
        %v4641 = vmul.f32 0.5, %v4640
        %v4642 = vsub.f32 1.5, %v4641
        %v4643 = vmul.f32 %v4638, %v4642
        %vm4644 = vweird.f32 %v4444
        %vm4645 = vweird.f32 %v4638
        %vm4646 = vmor %vm4644, %vm4645
        %v4647 = vsel %vm4646, %v4638, %v4643
        %v4648 = vrsqrt.pop %v4445
        %v4649 = vmul.f32 %v4648, %v4445
        %v4650 = vmul.f32 %v4649, %v4648
        %v4651 = vmul.f32 0.5, %v4650
        %v4652 = vsub.f32 1.5, %v4651
        %v4653 = vmul.f32 %v4648, %v4652
        %vm4654 = vweird.f32 %v4445
        %vm4655 = vweird.f32 %v4648
        %vm4656 = vmor %vm4654, %vm4655
        %v4657 = vsel %vm4656, %v4648, %v4653
        %v4658 = vrsqrt.pop %v4446
        %v4659 = vmul.f32 %v4658, %v4446
        %v4660 = vmul.f32 %v4659, %v4658
        %v4661 = vmul.f32 0.5, %v4660
        %v4662 = vsub.f32 1.5, %v4661
        %v4663 = vmul.f32 %v4658, %v4662
        %vm4664 = vweird.f32 %v4446
        %vm4665 = vweird.f32 %v4658
        %vm4666 = vmor %vm4664, %vm4665
        %v4667 = vsel %vm4666, %v4658, %v4663
        %v4668 = vrsqrt.pop %v4447
        %v4669 = vmul.f32 %v4668, %v4447
        %v4670 = vmul.f32 %v4669, %v4668
        %v4671 = vmul.f32 0.5, %v4670
        %v4672 = vsub.f32 1.5, %v4671
        %v4673 = vmul.f32 %v4668, %v4672
        %vm4674 = vweird.f32 %v4447
        %vm4675 = vweird.f32 %v4668
        %vm4676 = vmor %vm4674, %vm4675
        %v4677 = vsel %vm4676, %v4668, %v4673
        %v4678 = vrsqrt.pop %v4448
        %v4679 = vmul.f32 %v4678, %v4448
        %v4680 = vmul.f32 %v4679, %v4678
        %v4681 = vmul.f32 0.5, %v4680
        %v4682 = vsub.f32 1.5, %v4681
        %v4683 = vmul.f32 %v4678, %v4682
        %vm4684 = vweird.f32 %v4448
        %vm4685 = vweird.f32 %v4678
        %vm4686 = vmor %vm4684, %vm4685
        %v4687 = vsel %vm4686, %v4678, %v4683
        %v4688 = vrsqrt.pop %v4449
        %v4689 = vmul.f32 %v4688, %v4449
        %v4690 = vmul.f32 %v4689, %v4688
        %v4691 = vmul.f32 0.5, %v4690
        %v4692 = vsub.f32 1.5, %v4691
        %v4693 = vmul.f32 %v4688, %v4692
        %vm4694 = vweird.f32 %v4449
        %vm4695 = vweird.f32 %v4688
        %vm4696 = vmor %vm4694, %vm4695
        %v4697 = vsel %vm4696, %v4688, %v4693
        %v4698 = vrsqrt.pop %v4450
        %v4699 = vmul.f32 %v4698, %v4450
        %v4700 = vmul.f32 %v4699, %v4698
        %v4701 = vmul.f32 0.5, %v4700
        %v4702 = vsub.f32 1.5, %v4701
        %v4703 = vmul.f32 %v4698, %v4702
        %vm4704 = vweird.f32 %v4450
        %vm4705 = vweird.f32 %v4698
        %vm4706 = vmor %vm4704, %vm4705
        %v4707 = vsel %vm4706, %v4698, %v4703
        %v4708 = vrsqrt.pop %v4451
        %v4709 = vmul.f32 %v4708, %v4451
        %v4710 = vmul.f32 %v4709, %v4708
        %v4711 = vmul.f32 0.5, %v4710
        %v4712 = vsub.f32 1.5, %v4711
        %v4713 = vmul.f32 %v4708, %v4712
        %vm4714 = vweird.f32 %v4451
        %vm4715 = vweird.f32 %v4708
        %vm4716 = vmor %vm4714, %vm4715
        %v4717 = vsel %vm4716, %v4708, %v4713
        %v4718 = vrsqrt.pop %v4452
        %v4719 = vmul.f32 %v4718, %v4452
        %v4720 = vmul.f32 %v4719, %v4718
        %v4721 = vmul.f32 0.5, %v4720
        %v4722 = vsub.f32 1.5, %v4721
        %v4723 = vmul.f32 %v4718, %v4722
        %vm4724 = vweird.f32 %v4452
        %vm4725 = vweird.f32 %v4718
        %vm4726 = vmor %vm4724, %vm4725
        %v4727 = vsel %vm4726, %v4718, %v4723
        %v4728 = vrsqrt.pop %v4453
        %v4729 = vmul.f32 %v4728, %v4453
        %v4730 = vmul.f32 %v4729, %v4728
        %v4731 = vmul.f32 0.5, %v4730
        %v4732 = vsub.f32 1.5, %v4731
        %v4733 = vmul.f32 %v4728, %v4732
        %vm4734 = vweird.f32 %v4453
        %vm4735 = vweird.f32 %v4728
        %vm4736 = vmor %vm4734, %vm4735
        %v4737 = vsel %vm4736, %v4728, %v4733
        %v4738 = vrsqrt.pop %v4454
        %v4739 = vmul.f32 %v4738, %v4454
        %v4740 = vmul.f32 %v4739, %v4738
        %v4741 = vmul.f32 0.5, %v4740
        %v4742 = vsub.f32 1.5, %v4741
        %v4743 = vmul.f32 %v4738, %v4742
        %vm4744 = vweird.f32 %v4454
        %vm4745 = vweird.f32 %v4738
        %vm4746 = vmor %vm4744, %vm4745
        %v4747 = vsel %vm4746, %v4738, %v4743
        %v4748 = vrsqrt.pop %v4455
        %v4749 = vmul.f32 %v4748, %v4455
        %v4750 = vmul.f32 %v4749, %v4748
        %v4751 = vmul.f32 0.5, %v4750
        %v4752 = vsub.f32 1.5, %v4751
        %v4753 = vmul.f32 %v4748, %v4752
        %vm4754 = vweird.f32 %v4455
        %vm4755 = vweird.f32 %v4748
        %vm4756 = vmor %vm4754, %vm4755
        %v4757 = vsel %vm4756, %v4748, %v4753
        %v4758 = vrsqrt.pop %v4456
        %v4759 = vmul.f32 %v4758, %v4456
        %v4760 = vmul.f32 %v4759, %v4758
        %v4761 = vmul.f32 0.5, %v4760
        %v4762 = vsub.f32 1.5, %v4761
        %v4763 = vmul.f32 %v4758, %v4762
        %vm4764 = vweird.f32 %v4456
        %vm4765 = vweird.f32 %v4758
        %vm4766 = vmor %vm4764, %vm4765
        %v4767 = vsel %vm4766, %v4758, %v4763
        %v4768 = vrsqrt.pop %v4457
        %v4769 = vmul.f32 %v4768, %v4457
        %v4770 = vmul.f32 %v4769, %v4768
        %v4771 = vmul.f32 0.5, %v4770
        %v4772 = vsub.f32 1.5, %v4771
        %v4773 = vmul.f32 %v4768, %v4772
        %vm4774 = vweird.f32 %v4457
        %vm4775 = vweird.f32 %v4768
        %vm4776 = vmor %vm4774, %vm4775
        %v4777 = vsel %vm4776, %v4768, %v4773
        %v4778 = vmul.f32 %v4266, %v4467
        %v4779 = vmul.f32 %v4267, %v4477
        %v4780 = vmul.f32 %v4268, %v4487
        %v4781 = vmul.f32 %v4269, %v4497
        %v4782 = vmul.f32 %v4270, %v4507
        %v4783 = vmul.f32 %v4271, %v4517
        %v4784 = vmul.f32 %v4272, %v4527
        %v4785 = vmul.f32 %v4273, %v4537
        %v4786 = vmul.f32 %v4274, %v4547
        %v4787 = vmul.f32 %v4275, %v4557
        %v4788 = vmul.f32 %v4276, %v4567
        %v4789 = vmul.f32 %v4277, %v4577
        %v4790 = vmul.f32 %v4278, %v4587
        %v4791 = vmul.f32 %v4279, %v4597
        %v4792 = vmul.f32 %v4280, %v4607
        %v4793 = vmul.f32 %v4281, %v4617
        %v4794 = vmul.f32 %v4282, %v4627
        %v4795 = vmul.f32 %v4283, %v4637
        %v4796 = vmul.f32 %v4284, %v4647
        %v4797 = vmul.f32 %v4285, %v4657
        %v4798 = vmul.f32 %v4286, %v4667
        %v4799 = vmul.f32 %v4287, %v4677
        %v4800 = vmul.f32 %v4288, %v4687
        %v4801 = vmul.f32 %v4289, %v4697
        %v4802 = vmul.f32 %v4290, %v4707
        %v4803 = vmul.f32 %v4291, %v4717
        %v4804 = vmul.f32 %v4292, %v4727
        %v4805 = vmul.f32 %v4293, %v4737
        %v4806 = vmul.f32 %v4294, %v4747
        %v4807 = vmul.f32 %v4295, %v4757
        %v4808 = vmul.f32 %v4296, %v4767
        %v4809 = vmul.f32 %v4297, %v4777
        %v4811 = vperm.slane %v4168, 0
        %v4813 = vmul.f32 %v4778, %v4811
        %v4814 = vmul.f32 %v4779, %v4811
        %v4815 = vmul.f32 %v4780, %v4811
        %v4816 = vmul.f32 %v4781, %v4811
        %v4817 = vmul.f32 %v4782, %v4811
        %v4818 = vmul.f32 %v4783, %v4811
        %v4819 = vmul.f32 %v4784, %v4811
        %v4820 = vmul.f32 %v4785, %v4811
        %v4821 = vmul.f32 %v4786, %v4811
        %v4822 = vmul.f32 %v4787, %v4811
        %v4823 = vmul.f32 %v4788, %v4811
        %v4824 = vmul.f32 %v4789, %v4811
        %v4825 = vmul.f32 %v4790, %v4811
        %v4826 = vmul.f32 %v4791, %v4811
        %v4827 = vmul.f32 %v4792, %v4811
        %v4828 = vmul.f32 %v4793, %v4811
        %v4829 = vmul.f32 %v4794, %v4811
        %v4830 = vmul.f32 %v4795, %v4811
        %v4831 = vmul.f32 %v4796, %v4811
        %v4832 = vmul.f32 %v4797, %v4811
        %v4833 = vmul.f32 %v4798, %v4811
        %v4834 = vmul.f32 %v4799, %v4811
        %v4835 = vmul.f32 %v4800, %v4811
        %v4836 = vmul.f32 %v4801, %v4811
        %v4837 = vmul.f32 %v4802, %v4811
        %v4838 = vmul.f32 %v4803, %v4811
        %v4839 = vmul.f32 %v4804, %v4811
        %v4840 = vmul.f32 %v4805, %v4811
        %v4841 = vmul.f32 %v4806, %v4811
        %v4842 = vmul.f32 %v4807, %v4811
        %v4843 = vmul.f32 %v4808, %v4811
        %v4844 = vmul.f32 %v4809, %v4811
        %v4846 = vperm.slane %v4169, 0
        %v4848 = vadd.f32 %v4813, %v4846
        %v4849 = vadd.f32 %v4814, %v4846
        %v4850 = vadd.f32 %v4815, %v4846
        %v4851 = vadd.f32 %v4816, %v4846
        %v4852 = vadd.f32 %v4817, %v4846
        %v4853 = vadd.f32 %v4818, %v4846
        %v4854 = vadd.f32 %v4819, %v4846
        %v4855 = vadd.f32 %v4820, %v4846
        %v4856 = vadd.f32 %v4821, %v4846
        %v4857 = vadd.f32 %v4822, %v4846
        %v4858 = vadd.f32 %v4823, %v4846
        %v4859 = vadd.f32 %v4824, %v4846
        %v4860 = vadd.f32 %v4825, %v4846
        %v4861 = vadd.f32 %v4826, %v4846
        %v4862 = vadd.f32 %v4827, %v4846
        %v4863 = vadd.f32 %v4828, %v4846
        %v4864 = vadd.f32 %v4829, %v4846
        %v4865 = vadd.f32 %v4830, %v4846
        %v4866 = vadd.f32 %v4831, %v4846
        %v4867 = vadd.f32 %v4832, %v4846
        %v4868 = vadd.f32 %v4833, %v4846
        %v4869 = vadd.f32 %v4834, %v4846
        %v4870 = vadd.f32 %v4835, %v4846
        %v4871 = vadd.f32 %v4836, %v4846
        %v4872 = vadd.f32 %v4837, %v4846
        %v4873 = vadd.f32 %v4838, %v4846
        %v4874 = vadd.f32 %v4839, %v4846
        %v4875 = vadd.f32 %v4840, %v4846
        %v4876 = vadd.f32 %v4841, %v4846
        %v4877 = vadd.f32 %v4842, %v4846
        %v4878 = vadd.f32 %v4843, %v4846
        %v4879 = vadd.f32 %v4844, %v4846
        %v4880 = vpack.c.bf16 %v4848, %v4848
        %v4881 = vpack.c.bf16 %v4849, %v4849
        %v4882 = vpack.c.bf16 %v4850, %v4850
        %v4883 = vpack.c.bf16 %v4851, %v4851
        %v4884 = vpack.c.bf16 %v4852, %v4852
        %v4885 = vpack.c.bf16 %v4853, %v4853
        %v4886 = vpack.c.bf16 %v4854, %v4854
        %v4887 = vpack.c.bf16 %v4855, %v4855
        %v4888 = vpack.c.bf16 %v4856, %v4856
        %v4889 = vpack.c.bf16 %v4857, %v4857
        %v4890 = vpack.c.bf16 %v4858, %v4858
        %v4891 = vpack.c.bf16 %v4859, %v4859
        %v4892 = vpack.c.bf16 %v4860, %v4860
        %v4893 = vpack.c.bf16 %v4861, %v4861
        %v4894 = vpack.c.bf16 %v4862, %v4862
        %v4895 = vpack.c.bf16 %v4863, %v4863
        %v4896 = vpack.c.bf16 %v4864, %v4864
        %v4897 = vpack.c.bf16 %v4865, %v4865
        %v4898 = vpack.c.bf16 %v4866, %v4866
        %v4899 = vpack.c.bf16 %v4867, %v4867
        %v4900 = vpack.c.bf16 %v4868, %v4868
        %v4901 = vpack.c.bf16 %v4869, %v4869
        %v4902 = vpack.c.bf16 %v4870, %v4870
        %v4903 = vpack.c.bf16 %v4871, %v4871
        %v4904 = vpack.c.bf16 %v4872, %v4872
        %v4905 = vpack.c.bf16 %v4873, %v4873
        %v4906 = vpack.c.bf16 %v4874, %v4874
        %v4907 = vpack.c.bf16 %v4875, %v4875
        %v4908 = vpack.c.bf16 %v4876, %v4876
        %v4909 = vpack.c.bf16 %v4877, %v4877
        %v4910 = vpack.c.bf16 %v4878, %v4878
        %v4911 = vpack.c.bf16 %v4879, %v4879
        %4912 = vst [vmem:[%s680] sm:$0xf] %v4880
        %4913 = vst [vmem:[%s680 + $0x4] sm:$0xf] %v4881
        %4914 = vst [vmem:[%s680 + $0x8] sm:$0xf] %v4882
        %4915 = vst [vmem:[%s680 + $0xc] sm:$0xf] %v4883
        %4916 = vst [vmem:[%s680 + $0x10] sm:$0xf] %v4884
        %4917 = vst [vmem:[%s680 + $0x14] sm:$0xf] %v4885
        %4918 = vst [vmem:[%s680 + $0x18] sm:$0xf] %v4886
        %4919 = vst [vmem:[%s680 + $0x1c] sm:$0xf] %v4887
        %4920 = vst [vmem:[%s680 + $0x20] sm:$0xf] %v4888
        %4921 = vst [vmem:[%s680 + $0x24] sm:$0xf] %v4889
        %4922 = vst [vmem:[%s680 + $0x28] sm:$0xf] %v4890
        %4923 = vst [vmem:[%s680 + $0x2c] sm:$0xf] %v4891
        %4924 = vst [vmem:[%s680 + $0x30] sm:$0xf] %v4892
        %4925 = vst [vmem:[%s680 + $0x34] sm:$0xf] %v4893
        %4926 = vst [vmem:[%s680 + $0x38] sm:$0xf] %v4894
        %4927 = vst [vmem:[%s680 + $0x3c] sm:$0xf] %v4895
        %4928 = vst [vmem:[%s680 + $0x40] sm:$0xf] %v4896
        %4929 = vst [vmem:[%s680 + $0x44] sm:$0xf] %v4897
        %4930 = vst [vmem:[%s680 + $0x48] sm:$0xf] %v4898
        %4931 = vst [vmem:[%s680 + $0x4c] sm:$0xf] %v4899
        %4932 = vst [vmem:[%s680 + $0x50] sm:$0xf] %v4900
        %4933 = vst [vmem:[%s680 + $0x54] sm:$0xf] %v4901
        %4934 = vst [vmem:[%s680 + $0x58] sm:$0xf] %v4902
        %4935 = vst [vmem:[%s680 + $0x5c] sm:$0xf] %v4903
        %4936 = vst [vmem:[%s680 + $0x60] sm:$0xf] %v4904
        %4937 = vst [vmem:[%s680 + $0x64] sm:$0xf] %v4905
        %4938 = vst [vmem:[%s680 + $0x68] sm:$0xf] %v4906
        %4939 = vst [vmem:[%s680 + $0x6c] sm:$0xf] %v4907
        %4940 = vst [vmem:[%s680 + $0x70] sm:$0xf] %v4908
        %4941 = vst [vmem:[%s680 + $0x74] sm:$0xf] %v4909
        %4942 = vst [vmem:[%s680 + $0x78] sm:$0xf] %v4910
        %4943 = vst [vmem:[%s680 + $0x7c] sm:$0xf] %v4911
        %s4944 = sand.u32 %s393, 1
        %s4945 = scalar_lea.sflag [#allocation4], %s4944
        %s4946 = sand.u32 %s393, 1
        %s4947 = smul.addr %s4946, 128
        %s4948 = scalar_lea.vmem [#allocation16], %s4947
        // Predicated region
        $region117: #{tpu_custom_call.1} parent=83 // pred_check
          %p4949 = pneg %p403
        $region118: #{tpu_custom_call.1} parent=83 // pred_check_branch
          %4951 = sbr.rel (%p4949) target = $region120
        $region119: #{tpu_custom_call.1} parent=83 // pred_region
          %s4952 = smul.u32 32, %s39
          %4954 = vsyncadd %s4945, 0
          %s4955 = smul.addr %s4952, 4
          %s4956 = scalar_lea.hbm %s16, %s4955
          %s4957 = sshll.u32 %s4948, 4
          %s4958 = int_to_ptr.vmem [resolvable:$true] %s4957
          %s4959 = sshll.u32 %s4956, 4
          %s4960 = int_to_ptr.hbm [resolvable:$true] %s4959
          %4965 = dma.vmem_to_hbm [thread:$0]  %s4958, 2048, %s4960, %s4945, 64, 64, 4
        $region120: #{tpu_custom_call.1} parent=83 // pred_fallthru
          _
      $region84: #{tpu_custom_call.1} parent=5 // pred_fallthru
        _
      %p4966 = scmp.le.s32.totalorder 2, %s34
      // Predicated region
      $region121: #{tpu_custom_call.1} parent=5 // pred_check
        %p4967 = pneg %p4966
      $region122: #{tpu_custom_call.1} parent=5 // pred_check_branch
        %4969 = sbr.rel (%p4967) target = $region124
      $region123: #{tpu_custom_call.1} parent=5 // pred_region
        %s4970 = ssub.s32 %s34, 2
        // Predicated region
        $region125: #{tpu_custom_call.1} parent=123 // pred_check
          %p4971 = pneg %p409
        $region126: #{tpu_custom_call.1} parent=123 // pred_check_branch
          %4973 = sbr.rel (%p4971) target = $region128
        $region127: #{tpu_custom_call.1} parent=123 // pred_region
          %s4974 = sand.u32 %s394, 1
          %s4975 = scalar_lea.sflag [#allocation4], %s4974
          %s4976 = sand.u32 %s394, 1
          %s4977 = smul.addr %s4976, 128
          %s4978 = scalar_lea.vmem [#allocation16], %s4977
          %4980 = dma.done %s4975, 2048
        $region128: #{tpu_custom_call.1} parent=123 // pred_fallthru
          _
      $region124: #{tpu_custom_call.1} parent=5 // pred_fallthru
        _
    $region6: #{tpu_custom_call.1} parent=1 // loop_footer
      %s38 = sadd.s32 1, %s34
    $region7: #{tpu_custom_call.1} parent=1 // loop_footer_branch
      %33 = sbr.rel target = $region3
    $region8: #{tpu_custom_call.1} parent=1 // loop_exit
      _
    %4981 = vsyncpa [#allocation3], 1
    %s4982 = scalar_lea.sflag [#allocation3], 1
    %4983 = vsyncpa %s4982, 1
    %4984 = vsyncpa [#allocation6], 1
    %s4985 = scalar_lea.sflag [#allocation6], 1
    %4986 = vsyncpa %s4985, 1
    %4987 = vsyncpa [#allocation9], 1
    %4988 = vsyncpa [#allocation12], 1
    %4989 = vsyncpa [#allocation15], 1
    %4990 = vsyncpa [#allocation4], 1
    %s4991 = scalar_lea.sflag [#allocation4], 1
    %4992 = vsyncpa %s4991, 1

</llo_original>
